<compile_context>
chip_gen: v7x
topology: tpu7x:2x2x1
jax: 0.10.0
libtpu: 0.0.40
codegen_flags: <defaults>
</compile_context>

<pallas_src>
import functools

import jax
import jax.numpy as jnp
from jax.experimental import pallas as pl
from jax.experimental.pallas import tpu as pltpu


HIDDEN = 750          # logical hidden width (matches the PyTorch module)
HIDDEN_PAD = 768      # lane-aligned padded hidden width (multiple of 128)


def _round_up(n, m):
    return ((n + m - 1) // m) * m


def _pad_to(x, shape):
    pads = [(0, t - s) for s, t in zip(x.shape, shape)]
    return jnp.pad(x, pads)


# ----------------------------------------------------------------------------
# Fused forward kernel (one batch tile per grid step; all weights VMEM-resident)
# ----------------------------------------------------------------------------
def _vae_fused_kernel(x_ref, noise_ref,
                      w1_ref, b1_ref, w2_ref, b2_ref, wh_ref, bh_ref,
                      wd1x_ref, wd1z_ref, bd1_ref, wd2_ref, bd2_ref,
                      wd3_ref, bd3_ref,
                      out_ref,
                      *, latent_dim, action_dim, head_w, clip_action):
    f32 = jnp.float32
    cdt = w1_ref.dtype            # MXU input dtype (bf16); accumulation stays f32

    x = x_ref[...].astype(cdt)    # (TB, K_pad) = cat(obs, action), zero-padded
    noise = noise_ref[...]        # (TB, head_w) f32 U[0,1), zero-padded lanes

    # encoder layer 1 / layer 2 (bias-add + ReLU + bf16 cast fused in one pass)
    h = jnp.dot(x, w1_ref[...], preferred_element_type=f32) + b1_ref[...]
    h = jnp.maximum(h, 0.0).astype(cdt)
    h = jnp.dot(h, w2_ref[...], preferred_element_type=f32) + b2_ref[...]
    h = jnp.maximum(h, 0.0).astype(cdt)

    # fused mean / log_std head: one [768, 2*head_w] matmul, split exactly at the
    # 128-lane boundary -> both halves are free vreg-aligned views.
    head = jnp.dot(h, wh_ref[...], preferred_element_type=f32) + bh_ref[...]
    mean = head[:, :head_w]
    log_std = jnp.clip(head[:, head_w:], -4.0, 15.0)

    # reparametrisation (reference uses torch.rand_like -> uniform noise).
    # Padded lanes stay exactly 0 (mean=0, clip(0)=0 -> exp=1, noise=0).
    z = mean + jnp.exp(log_std) * noise

    # decoder layer 1: cat(obs, z) folded into two matmuls.  x already carries the
    # obs columns; wd1x has the action / pad rows zeroed, so x @ wd1x == obs @ W_obs.
    # NOTE: z is cast to bf16 for the MXU; with log_std clamped at 15 that can lose
    # precision for very large z (not an issue for typical trained parameters).
    d = (jnp.dot(x, wd1x_ref[...], preferred_element_type=f32)
         + jnp.dot(z.astype(cdt), wd1z_ref[...], preferred_element_type=f32)
         + bd1_ref[...])
    d = jnp.maximum(d, 0.0).astype(cdt)

    # decoder layer 2
    d = jnp.dot(d, wd2_ref[...], preferred_element_type=f32) + bd2_ref[...]
    d = jnp.maximum(d, 0.0).astype(cdt)

    # decoder output: clip_action * tanh(linear(d))  (lane-padded to act_w columns)
    a = jnp.dot(d, wd3_ref[...], preferred_element_type=f32) + bd3_ref[...]
    a = jnp.tanh(a) * clip_action

    # Pack the four narrow results into one lane-dense slab -> single unmasked store
    # and a single output writeback DMA per grid step (instead of 4 masked stores).
    cols = [z[:, :latent_dim], a[:, :action_dim],
            mean[:, :latent_dim], log_std[:, :latent_dim]]
    used = 3 * latent_dim + action_dim
    pad_w = out_ref.shape[-1] - used
    if pad_w:
        cols.append(jnp.zeros((x.shape[0], pad_w), f32))
    out_ref[...] = jnp.concatenate(cols, axis=-1).astype(out_ref.dtype)


# ----------------------------------------------------------------------------
# Parameter init (PyTorch nn.Linear style) and packing into kernel layout
# ----------------------------------------------------------------------------
def _init_linear(key, d_in, d_out):
    kw, kb = jax.random.split(key)
    bound = 1.0 / (d_in ** 0.5)
    w = jax.random.uniform(kw, (d_in, d_out), jnp.float32, -bound, bound)
    b = jax.random.uniform(kb, (d_out,), jnp.float32, -bound, bound)
    return w, b


def init_vae_params(key, obs_dim, action_dim, latent_dim, hidden=HIDDEN):
    keys = jax.random.split(key, 7)
    return {
        "enc1": _init_linear(keys[0], obs_dim + action_dim, hidden),
        "enc2": _init_linear(keys[1], hidden, hidden),
        "mean": _init_linear(keys[2], hidden, latent_dim),
        "log_std": _init_linear(keys[3], hidden, latent_dim),
        "dec1": _init_linear(keys[4], obs_dim + latent_dim, hidden),
        "dec2": _init_linear(keys[5], hidden, hidden),
        "dec3": _init_linear(keys[6], hidden, action_dim),
    }


def pack_vae_params(raw, obs_dim, action_dim, latent_dim,
                    hidden=HIDDEN, hidden_pad=HIDDEN_PAD,
                    param_dtype=jnp.bfloat16):
    """Pad hidden 750->768, fuse/realign the heads, cast weights to bf16."""
    f32 = jnp.float32
    HP = hidden_pad
    K = obs_dim + action_dim
    K_pad = _round_up(K, 16)                      # bf16 sublane packing for (K, HP) weight
    HEAD_W = _round_up(latent_dim, 128)           # mean / log_std split at 128-lane boundary
    ACT_W = _round_up(action_dim, 128)            # lane-dense decoder output
    OUT_W = _round_up(3 * latent_dim + action_dim, 128)

    w_e1, b_e1 = raw["enc1"]
    w_e2, b_e2 = raw["enc2"]
    w_m, b_m = raw["mean"]
    w_ls, b_ls = raw["log_std"]
    w_d1, b_d1 = raw["dec1"]
    w_d2, b_d2 = raw["dec2"]
    w_d3, b_d3 = raw["dec3"]

    # fused mean / log_std head: mean -> lanes [0, L), log_std -> lanes [HEAD_W, HEAD_W+L)
    wh = jnp.zeros((HP, 2 * HEAD_W), f32)
    wh = wh.at[:hidden, :latent_dim].set(w_m)
    wh = wh.at[:hidden, HEAD_W:HEAD_W + latent_dim].set(w_ls)
    bh = jnp.zeros((1, 2 * HEAD_W), f32)
    bh = bh.at[0, :latent_dim].set(b_m)
    bh = bh.at[0, HEAD_W:HEAD_W + latent_dim].set(b_ls)

    # decoder layer 1: obs contribution keyed off the enc input (action/pad rows zero),
    # latent contribution keyed off z (padded to HEAD_W rows).
    wd1x = jnp.zeros((K_pad, HP), f32).at[:obs_dim, :hidden].set(w_d1[:obs_dim])
    wd1z = jnp.zeros((HEAD_W, HP), f32).at[:latent_dim, :hidden].set(w_d1[obs_dim:])

    packed = {
        "w1": _pad_to(w_e1, (K_pad, HP)).astype(param_dtype),
        "b1": _pad_to(b_e1, (HP,)).reshape(1, HP).astype(f32),
        "w2": _pad_to(w_e2, (HP, HP)).astype(param_dtype),
        "b2": _pad_to(b_e2, (HP,)).reshape(1, HP).astype(f32),
        "wh": wh.astype(param_dtype),
        "bh": bh,
        "wd1x": wd1x.astype(param_dtype),
        "wd1z": wd1z.astype(param_dtype),
        "bd1": _pad_to(b_d1, (HP,)).reshape(1, HP).astype(f32),
        "wd2": _pad_to(w_d2, (HP, HP)).astype(param_dtype),
        "bd2": _pad_to(b_d2, (HP,)).reshape(1, HP).astype(f32),
        "wd3": _pad_to(w_d3, (HP, ACT_W)).astype(param_dtype),
        "bd3": _pad_to(b_d3, (ACT_W,)).reshape(1, ACT_W).astype(f32),
        "meta": dict(obs_dim=obs_dim, action_dim=action_dim, latent_dim=latent_dim,
                     k_pad=K_pad, head_w=HEAD_W, act_w=ACT_W, out_w=OUT_W,
                     hidden_pad=HP),
    }
    return packed


# ----------------------------------------------------------------------------
# Forward pass
# ----------------------------------------------------------------------------
def vae_forward(packed, obs, action, noise, clip_action, *, block_b=256):
    meta = packed["meta"]
    obs_dim = meta["obs_dim"]
    action_dim = meta["action_dim"]
    latent_dim = meta["latent_dim"]
    K_pad, HEAD_W, ACT_W, OUT_W, HP = (meta["k_pad"], meta["head_w"],
                                       meta["act_w"], meta["out_w"],
                                       meta["hidden_pad"])

    B = obs.shape[0]
    # torch.cat((obs, action)) done host-side, zero-padded to K_pad lanes
    x = jnp.concatenate([obs.astype(jnp.float32), action.astype(jnp.float32)], axis=-1)
    x = _pad_to(x, (B, K_pad))
    noise_p = _pad_to(noise.astype(jnp.float32), (B, HEAD_W))

    # Batch tiling: sublane-aligned, capped at block_b, and >=2 grid steps whenever
    # B allows so the 'parallel' axis shards across both TensorCores on v7x.
    TB = min(_round_up(max((B + 1) // 2, 1), 8), block_b)
    Bp = _round_up(B, TB)
    if Bp != B:
        x = jnp.pad(x, ((0, Bp - B), (0, 0)))
        noise_p = jnp.pad(noise_p, ((0, Bp - B), (0, 0)))
    grid = (Bp // TB,)

    def tiled(width):     # batch-tiled operand
        return pl.BlockSpec((TB, width), lambda i: (i, 0))

    def whole(arr):       # weight/bias: constant index_map -> VMEM-resident across tiles
        return pl.BlockSpec(arr.shape, lambda i: (0, 0))

    weight_order = ["w1", "b1", "w2", "b2", "wh", "bh",
                    "wd1x", "wd1z", "bd1", "wd2", "bd2", "wd3", "bd3"]
    weights = [packed[k] for k in weight_order]
    operands = [x, noise_p] + weights

    in_specs = [tiled(K_pad), tiled(HEAD_W)] + [whole(w) for w in weights]
    out_specs = tiled(OUT_W)
    out_shape = jax.ShapeDtypeStruct((Bp, OUT_W), jnp.float32)

    # advisory cost estimate (weight-bandwidth-bound at small B, MXU-bound at large B)
    flops_row = 2 * (K_pad * HP + HP * HP + HP * 2 * HEAD_W
                     + K_pad * HP + HEAD_W * HP + HP * HP + HP * ACT_W)
    bytes_in = sum(int(a.size) * a.dtype.itemsize for a in operands)
    bytes_out = Bp * OUT_W * 4
    cost = pl.CostEstimate(flops=Bp * flops_row,
                           transcendentals=Bp * (HEAD_W + ACT_W),
                           bytes_accessed=bytes_in + bytes_out)

    kernel = functools.partial(_vae_fused_kernel,
                               latent_dim=latent_dim,
                               action_dim=action_dim,
                               head_w=HEAD_W,
                               clip_action=float(clip_action))

    out = pl.pallas_call(
        kernel,
        out_shape=out_shape,
        grid=grid,
        in_specs=in_specs,
        out_specs=out_specs,
        compiler_params=pltpu.CompilerParams(
            dimension_semantics=("parallel",),
            # conservative budget: fits v7x's 64 MiB even if block_b is swept to 512
            vmem_limit_bytes=32 * 1024 * 1024),
        cost_estimate=cost,
    )(*operands)

    L, A = latent_dim, action_dim
    z = out[:B, :L]
    decode = out[:B, L:L + A]
    mean = out[:B, L + A:2 * L + A]
    log_std = out[:B, 2 * L + A:3 * L + A]
    return z, decode, mean, log_std


# ----------------------------------------------------------------------------
# Pure-JAX f32 reference (mirrors the PyTorch module) for correctness checking
# ----------------------------------------------------------------------------
def vae_reference(raw, obs, action, noise, clip_action):
    def lin(p, v):
        w, b = p
        return v @ w + b
    x = jnp.concatenate([obs, action], axis=-1).astype(jnp.float32)
    h = jax.nn.relu(lin(raw["enc1"], x))
    h = jax.nn.relu(lin(raw["enc2"], h))
    mean = lin(raw["mean"], h)
    log_std = jnp.clip(lin(raw["log_std"], h), -4.0, 15.0)
    z = mean + jnp.exp(log_std) * noise
    d = jnp.concatenate([obs.astype(jnp.float32), z], axis=-1)
    d = jax.nn.relu(lin(raw["dec1"], d))
    d = jax.nn.relu(lin(raw["dec2"], d))
    decode = clip_action * jnp.tanh(lin(raw["dec3"], d))
    return z, decode, mean, log_std


# ----------------------------------------------------------------------------
if __name__ == "__main__":
    B = 4
    OBS_DIM = 16
    ACTION_DIM = 8
    LATENT_DIM = 16          # typically 2 * action_dim in BCQ-style usage
    CLIP_ACTION = 1.0

    root = jax.random.PRNGKey(0)
    k_obs, k_act, k_noise, k_params = jax.random.split(root, 4)

    obs = jax.random.normal(k_obs, (B, OBS_DIM), dtype=jnp.float32)
    action = jax.random.normal(k_act, (B, ACTION_DIM), dtype=jnp.float32)
    # reference uses torch.rand_like -> uniform [0, 1)
    noise = jax.random.uniform(k_noise, (B, LATENT_DIM), dtype=jnp.float32)

    raw_params = init_vae_params(k_params, OBS_DIM, ACTION_DIM, LATENT_DIM)
    packed = pack_vae_params(raw_params, OBS_DIM, ACTION_DIM, LATENT_DIM)

    z, decode, mean, log_std = vae_forward(packed, obs, action, noise, CLIP_ACTION)
    jax.block_until_ready((z, decode, mean, log_std))

    zr, dr, mr, lr = vae_reference(raw_params, obs, action, noise, CLIP_ACTION)

    assert z.shape == (B, LATENT_DIM)
    assert decode.shape == (B, ACTION_DIM)
    assert mean.shape == (B, LATENT_DIM)
    assert log_std.shape == (B, LATENT_DIM)
    for got, ref in ((z, zr), (decode, dr), (mean, mr), (log_std, lr)):
        assert bool(jnp.all(jnp.isfinite(got)))
        # bf16 weights/activations vs the f32 reference -> loose tolerance
        assert float(jnp.max(jnp.abs(got - ref))) < 0.15
    assert bool(jnp.all(log_std >= -4.0)) and bool(jnp.all(log_std <= 15.0))
    assert bool(jnp.all(jnp.abs(decode) <= CLIP_ACTION + 1e-6))

    print("KERNEL_OK")
</pallas_src>

<mosaic_0001>
module attributes {stable_mosaic.version = 11 : i64} {
  func.func @_vae_fused_kernel(%arg0: i32, %arg1: memref<8x32xf32, #tpu.memory_space<vmem>>, %arg2: memref<8x128xf32, #tpu.memory_space<vmem>>, %arg3: memref<32x768xbf16, #tpu.memory_space<vmem>>, %arg4: memref<1x768xf32, #tpu.memory_space<vmem>>, %arg5: memref<768x768xbf16, #tpu.memory_space<vmem>>, %arg6: memref<1x768xf32, #tpu.memory_space<vmem>>, %arg7: memref<768x256xbf16, #tpu.memory_space<vmem>>, %arg8: memref<1x256xf32, #tpu.memory_space<vmem>>, %arg9: memref<32x768xbf16, #tpu.memory_space<vmem>>, %arg10: memref<128x768xbf16, #tpu.memory_space<vmem>>, %arg11: memref<1x768xf32, #tpu.memory_space<vmem>>, %arg12: memref<768x768xbf16, #tpu.memory_space<vmem>>, %arg13: memref<1x768xf32, #tpu.memory_space<vmem>>, %arg14: memref<768x128xbf16, #tpu.memory_space<vmem>>, %arg15: memref<1x128xf32, #tpu.memory_space<vmem>>, %arg16: memref<8x128xf32, #tpu.memory_space<vmem>>) attributes {dimension_semantics = [#tpu.dimension_semantics<parallel>], iteration_bounds = array<i64: 1>, scalar_prefetch = 0 : i64, scratch_operands = 0 : i64, tpu.core_type = #tpu.core_type<tc>, window_params = [{transform_indices = @transform_0, window_bounds = array<i64: 8, 32>}, {transform_indices = @transform_1, window_bounds = array<i64: 8, 128>}, {pipeline_mode = #tpu.pipeline_mode<synchronous>, transform_indices = @transform_2, window_bounds = array<i64: 32, 768>}, {pipeline_mode = #tpu.pipeline_mode<synchronous>, transform_indices = @transform_3, window_bounds = array<i64: 1, 768>}, {pipeline_mode = #tpu.pipeline_mode<synchronous>, transform_indices = @transform_4, window_bounds = array<i64: 768, 768>}, {pipeline_mode = #tpu.pipeline_mode<synchronous>, transform_indices = @transform_5, window_bounds = array<i64: 1, 768>}, {pipeline_mode = #tpu.pipeline_mode<synchronous>, transform_indices = @transform_6, window_bounds = array<i64: 768, 256>}, {pipeline_mode = #tpu.pipeline_mode<synchronous>, transform_indices = @transform_7, window_bounds = array<i64: 1, 256>}, {pipeline_mode = #tpu.pipeline_mode<synchronous>, transform_indices = @transform_8, window_bounds = array<i64: 32, 768>}, {pipeline_mode = #tpu.pipeline_mode<synchronous>, transform_indices = @transform_9, window_bounds = array<i64: 128, 768>}, {pipeline_mode = #tpu.pipeline_mode<synchronous>, transform_indices = @transform_10, window_bounds = array<i64: 1, 768>}, {pipeline_mode = #tpu.pipeline_mode<synchronous>, transform_indices = @transform_11, window_bounds = array<i64: 768, 768>}, {pipeline_mode = #tpu.pipeline_mode<synchronous>, transform_indices = @transform_12, window_bounds = array<i64: 1, 768>}, {pipeline_mode = #tpu.pipeline_mode<synchronous>, transform_indices = @transform_13, window_bounds = array<i64: 768, 128>}, {pipeline_mode = #tpu.pipeline_mode<synchronous>, transform_indices = @transform_14, window_bounds = array<i64: 1, 128>}, {transform_indices = @transform_15, window_bounds = array<i64: 8, 128>}]} {
    %c0 = arith.constant 0 : index
    %c0_0 = arith.constant 0 : index
    %0 = vector.load %arg1[%c0, %c0_0] : memref<8x32xf32, #tpu.memory_space<vmem>>, vector<8x32xf32>
    %1 = arith.truncf %0 : vector<8x32xf32> to vector<8x32xbf16>
    %c0_1 = arith.constant 0 : index
    %c0_2 = arith.constant 0 : index
    %2 = vector.load %arg2[%c0_1, %c0_2] : memref<8x128xf32, #tpu.memory_space<vmem>>, vector<8x128xf32>
    %c0_3 = arith.constant 0 : index
    %c0_4 = arith.constant 0 : index
    %3 = vector.load %arg3[%c0_3, %c0_4] : memref<32x768xbf16, #tpu.memory_space<vmem>>, vector<32x768xbf16>
    %cst = arith.constant dense<0.000000e+00> : vector<8x768xf32>
    %4 = tpu.matmul %1, %3, %cst {dimension_numbers = #tpu.dot_dimension_numbers<[1], [0], [0], [1], [0, 0, 1, 1], [], []>} : vector<8x32xbf16>, vector<32x768xbf16>, vector<8x768xf32> -> vector<8x768xf32>
    %c0_5 = arith.constant 0 : index
    %c0_6 = arith.constant 0 : index
    %5 = vector.load %arg4[%c0_5, %c0_6] : memref<1x768xf32, #tpu.memory_space<vmem>>, vector<1x768xf32>
    %6 = vector.broadcast %5 : vector<1x768xf32> to vector<8x768xf32>
    %7 = arith.addf %4, %6 : vector<8x768xf32>
    %cst_7 = arith.constant 0.000000e+00 : f32
    %8 = vector.broadcast %cst_7 : f32 to vector<8x768xf32>
    %9 = arith.maximumf %7, %8 : vector<8x768xf32>
    %10 = arith.truncf %9 : vector<8x768xf32> to vector<8x768xbf16>
    %c0_8 = arith.constant 0 : index
    %c0_9 = arith.constant 0 : index
    %11 = vector.load %arg5[%c0_8, %c0_9] : memref<768x768xbf16, #tpu.memory_space<vmem>>, vector<768x768xbf16>
    %cst_10 = arith.constant dense<0.000000e+00> : vector<8x768xf32>
    %12 = tpu.matmul %10, %11, %cst_10 {dimension_numbers = #tpu.dot_dimension_numbers<[1], [0], [0], [1], [0, 0, 1, 1], [], []>} : vector<8x768xbf16>, vector<768x768xbf16>, vector<8x768xf32> -> vector<8x768xf32>
    %c0_11 = arith.constant 0 : index
    %c0_12 = arith.constant 0 : index
    %13 = vector.load %arg6[%c0_11, %c0_12] : memref<1x768xf32, #tpu.memory_space<vmem>>, vector<1x768xf32>
    %14 = vector.broadcast %13 : vector<1x768xf32> to vector<8x768xf32>
    %15 = arith.addf %12, %14 : vector<8x768xf32>
    %cst_13 = arith.constant 0.000000e+00 : f32
    %16 = vector.broadcast %cst_13 : f32 to vector<8x768xf32>
    %17 = arith.maximumf %15, %16 : vector<8x768xf32>
    %18 = arith.truncf %17 : vector<8x768xf32> to vector<8x768xbf16>
    %c0_14 = arith.constant 0 : index
    %c0_15 = arith.constant 0 : index
    %19 = vector.load %arg7[%c0_14, %c0_15] : memref<768x256xbf16, #tpu.memory_space<vmem>>, vector<768x256xbf16>
    %cst_16 = arith.constant dense<0.000000e+00> : vector<8x256xf32>
    %20 = tpu.matmul %18, %19, %cst_16 {dimension_numbers = #tpu.dot_dimension_numbers<[1], [0], [0], [1], [0, 0, 1, 1], [], []>} : vector<8x768xbf16>, vector<768x256xbf16>, vector<8x256xf32> -> vector<8x256xf32>
    %c0_17 = arith.constant 0 : index
    %c0_18 = arith.constant 0 : index
    %21 = vector.load %arg8[%c0_17, %c0_18] : memref<1x256xf32, #tpu.memory_space<vmem>>, vector<1x256xf32>
    %22 = vector.broadcast %21 : vector<1x256xf32> to vector<8x256xf32>
    %23 = arith.addf %20, %22 : vector<8x256xf32>
    %24 = vector.extract_strided_slice %23 {offsets = [0, 0], sizes = [8, 128], strides = [1, 1]} : vector<8x256xf32> to vector<8x128xf32>
    %25 = vector.extract_strided_slice %23 {offsets = [0, 128], sizes = [8, 128], strides = [1, 1]} : vector<8x256xf32> to vector<8x128xf32>
    %cst_19 = arith.constant -4.000000e+00 : f32
    %cst_20 = arith.constant 1.500000e+01 : f32
    %26 = vector.broadcast %cst_19 : f32 to vector<8x128xf32>
    %27 = arith.maximumf %26, %25 : vector<8x128xf32>
    %28 = vector.broadcast %cst_20 : f32 to vector<8x128xf32>
    %29 = arith.minimumf %28, %27 : vector<8x128xf32>
    %30 = math.exp %29 : vector<8x128xf32>
    %31 = arith.mulf %30, %2 : vector<8x128xf32>
    %32 = arith.addf %24, %31 : vector<8x128xf32>
    %c0_21 = arith.constant 0 : index
    %c0_22 = arith.constant 0 : index
    %33 = vector.load %arg9[%c0_21, %c0_22] : memref<32x768xbf16, #tpu.memory_space<vmem>>, vector<32x768xbf16>
    %cst_23 = arith.constant dense<0.000000e+00> : vector<8x768xf32>
    %34 = tpu.matmul %1, %33, %cst_23 {dimension_numbers = #tpu.dot_dimension_numbers<[1], [0], [0], [1], [0, 0, 1, 1], [], []>} : vector<8x32xbf16>, vector<32x768xbf16>, vector<8x768xf32> -> vector<8x768xf32>
    %35 = arith.truncf %32 : vector<8x128xf32> to vector<8x128xbf16>
    %c0_24 = arith.constant 0 : index
    %c0_25 = arith.constant 0 : index
    %36 = vector.load %arg10[%c0_24, %c0_25] : memref<128x768xbf16, #tpu.memory_space<vmem>>, vector<128x768xbf16>
    %cst_26 = arith.constant dense<0.000000e+00> : vector<8x768xf32>
    %37 = tpu.matmul %35, %36, %cst_26 {dimension_numbers = #tpu.dot_dimension_numbers<[1], [0], [0], [1], [0, 0, 1, 1], [], []>} : vector<8x128xbf16>, vector<128x768xbf16>, vector<8x768xf32> -> vector<8x768xf32>
    %38 = arith.addf %34, %37 : vector<8x768xf32>
    %c0_27 = arith.constant 0 : index
    %c0_28 = arith.constant 0 : index
    %39 = vector.load %arg11[%c0_27, %c0_28] : memref<1x768xf32, #tpu.memory_space<vmem>>, vector<1x768xf32>
    %40 = vector.broadcast %39 : vector<1x768xf32> to vector<8x768xf32>
    %41 = arith.addf %38, %40 : vector<8x768xf32>
    %cst_29 = arith.constant 0.000000e+00 : f32
    %42 = vector.broadcast %cst_29 : f32 to vector<8x768xf32>
    %43 = arith.maximumf %41, %42 : vector<8x768xf32>
    %44 = arith.truncf %43 : vector<8x768xf32> to vector<8x768xbf16>
    %c0_30 = arith.constant 0 : index
    %c0_31 = arith.constant 0 : index
    %45 = vector.load %arg12[%c0_30, %c0_31] : memref<768x768xbf16, #tpu.memory_space<vmem>>, vector<768x768xbf16>
    %cst_32 = arith.constant dense<0.000000e+00> : vector<8x768xf32>
    %46 = tpu.matmul %44, %45, %cst_32 {dimension_numbers = #tpu.dot_dimension_numbers<[1], [0], [0], [1], [0, 0, 1, 1], [], []>} : vector<8x768xbf16>, vector<768x768xbf16>, vector<8x768xf32> -> vector<8x768xf32>
    %c0_33 = arith.constant 0 : index
    %c0_34 = arith.constant 0 : index
    %47 = vector.load %arg13[%c0_33, %c0_34] : memref<1x768xf32, #tpu.memory_space<vmem>>, vector<1x768xf32>
    %48 = vector.broadcast %47 : vector<1x768xf32> to vector<8x768xf32>
    %49 = arith.addf %46, %48 : vector<8x768xf32>
    %cst_35 = arith.constant 0.000000e+00 : f32
    %50 = vector.broadcast %cst_35 : f32 to vector<8x768xf32>
    %51 = arith.maximumf %49, %50 : vector<8x768xf32>
    %52 = arith.truncf %51 : vector<8x768xf32> to vector<8x768xbf16>
    %c0_36 = arith.constant 0 : index
    %c0_37 = arith.constant 0 : index
    %53 = vector.load %arg14[%c0_36, %c0_37] : memref<768x128xbf16, #tpu.memory_space<vmem>>, vector<768x128xbf16>
    %cst_38 = arith.constant dense<0.000000e+00> : vector<8x128xf32>
    %54 = tpu.matmul %52, %53, %cst_38 {dimension_numbers = #tpu.dot_dimension_numbers<[1], [0], [0], [1], [0, 0, 1, 1], [], []>} : vector<8x768xbf16>, vector<768x128xbf16>, vector<8x128xf32> -> vector<8x128xf32>
    %c0_39 = arith.constant 0 : index
    %c0_40 = arith.constant 0 : index
    %55 = vector.load %arg15[%c0_39, %c0_40] : memref<1x128xf32, #tpu.memory_space<vmem>>, vector<1x128xf32>
    %56 = vector.broadcast %55 : vector<1x128xf32> to vector<8x128xf32>
    %57 = arith.addf %54, %56 : vector<8x128xf32>
    %58 = math.tanh %57 : vector<8x128xf32>
    %cst_41 = arith.constant 1.000000e+00 : f32
    %59 = vector.broadcast %cst_41 : f32 to vector<8x128xf32>
    %60 = arith.mulf %58, %59 : vector<8x128xf32>
    %61 = vector.extract_strided_slice %32 {offsets = [0, 0], sizes = [8, 16], strides = [1, 1]} : vector<8x128xf32> to vector<8x16xf32>
    %62 = vector.extract_strided_slice %60 {offsets = [0, 0], sizes = [8, 8], strides = [1, 1]} : vector<8x128xf32> to vector<8x8xf32>
    %63 = vector.extract_strided_slice %24 {offsets = [0, 0], sizes = [8, 16], strides = [1, 1]} : vector<8x128xf32> to vector<8x16xf32>
    %64 = vector.extract_strided_slice %29 {offsets = [0, 0], sizes = [8, 16], strides = [1, 1]} : vector<8x128xf32> to vector<8x16xf32>
    %cst_42 = arith.constant 0.000000e+00 : f32
    %65 = vector.broadcast %cst_42 : f32 to vector<8x72xf32>
    %66 = tpu.concatenate %61, %62, %63, %64, %65 in 1 : vector<8x16xf32>, vector<8x8xf32>, vector<8x16xf32>, vector<8x16xf32>, vector<8x72xf32> -> vector<8x128xf32>
    %c0_43 = arith.constant 0 : index
    %c0_44 = arith.constant 0 : index
    %67 = vector.load %arg16[%c0_43, %c0_44] : memref<8x128xf32, #tpu.memory_space<vmem>>, vector<8x128xf32>
    tpu.vector_store %arg16[%c0_43, %c0_44], %66 {strides = array<i32>} : memref<8x128xf32, #tpu.memory_space<vmem>>, vector<8x128xf32>,
    return
  }
  func.func @transform_0(%arg0: i32) -> (i32, i32) {
    %c0_i32 = arith.constant 0 : i32
    %c0_i32_0 = arith.constant 0 : i32
    return %arg0, %c0_i32 : i32, i32
  }
  func.func @transform_1(%arg0: i32) -> (i32, i32) {
    %c0_i32 = arith.constant 0 : i32
    %c0_i32_0 = arith.constant 0 : i32
    return %arg0, %c0_i32 : i32, i32
  }
  func.func @transform_2(%arg0: i32) -> (i32, i32) {
    %c0_i32 = arith.constant 0 : i32
    %c0_i32_0 = arith.constant 0 : i32
    %c0_i32_1 = arith.constant 0 : i32
    return %c0_i32, %c0_i32_0 : i32, i32
  }
  func.func @transform_3(%arg0: i32) -> (i32, i32) {
    %c0_i32 = arith.constant 0 : i32
    %c0_i32_0 = arith.constant 0 : i32
    %c0_i32_1 = arith.constant 0 : i32
    return %c0_i32, %c0_i32_0 : i32, i32
  }
  func.func @transform_4(%arg0: i32) -> (i32, i32) {
    %c0_i32 = arith.constant 0 : i32
    %c0_i32_0 = arith.constant 0 : i32
    %c0_i32_1 = arith.constant 0 : i32
    return %c0_i32, %c0_i32_0 : i32, i32
  }
  func.func @transform_5(%arg0: i32) -> (i32, i32) {
    %c0_i32 = arith.constant 0 : i32
    %c0_i32_0 = arith.constant 0 : i32
    %c0_i32_1 = arith.constant 0 : i32
    return %c0_i32, %c0_i32_0 : i32, i32
  }
  func.func @transform_6(%arg0: i32) -> (i32, i32) {
    %c0_i32 = arith.constant 0 : i32
    %c0_i32_0 = arith.constant 0 : i32
    %c0_i32_1 = arith.constant 0 : i32
    return %c0_i32, %c0_i32_0 : i32, i32
  }
  func.func @transform_7(%arg0: i32) -> (i32, i32) {
    %c0_i32 = arith.constant 0 : i32
    %c0_i32_0 = arith.constant 0 : i32
    %c0_i32_1 = arith.constant 0 : i32
    return %c0_i32, %c0_i32_0 : i32, i32
  }
  func.func @transform_8(%arg0: i32) -> (i32, i32) {
    %c0_i32 = arith.constant 0 : i32
    %c0_i32_0 = arith.constant 0 : i32
    %c0_i32_1 = arith.constant 0 : i32
    return %c0_i32, %c0_i32_0 : i32, i32
  }
  func.func @transform_9(%arg0: i32) -> (i32, i32) {
    %c0_i32 = arith.constant 0 : i32
    %c0_i32_0 = arith.constant 0 : i32
    %c0_i32_1 = arith.constant 0 : i32
    return %c0_i32, %c0_i32_0 : i32, i32
  }
  func.func @transform_10(%arg0: i32) -> (i32, i32) {
    %c0_i32 = arith.constant 0 : i32
    %c0_i32_0 = arith.constant 0 : i32
    %c0_i32_1 = arith.constant 0 : i32
    return %c0_i32, %c0_i32_0 : i32, i32
  }
  func.func @transform_11(%arg0: i32) -> (i32, i32) {
    %c0_i32 = arith.constant 0 : i32
    %c0_i32_0 = arith.constant 0 : i32
    %c0_i32_1 = arith.constant 0 : i32
    return %c0_i32, %c0_i32_0 : i32, i32
  }
  func.func @transform_12(%arg0: i32) -> (i32, i32) {
    %c0_i32 = arith.constant 0 : i32
    %c0_i32_0 = arith.constant 0 : i32
    %c0_i32_1 = arith.constant 0 : i32
    return %c0_i32, %c0_i32_0 : i32, i32
  }
  func.func @transform_13(%arg0: i32) -> (i32, i32) {
    %c0_i32 = arith.constant 0 : i32
    %c0_i32_0 = arith.constant 0 : i32
    %c0_i32_1 = arith.constant 0 : i32
    return %c0_i32, %c0_i32_0 : i32, i32
  }
  func.func @transform_14(%arg0: i32) -> (i32, i32) {
    %c0_i32 = arith.constant 0 : i32
    %c0_i32_0 = arith.constant 0 : i32
    %c0_i32_1 = arith.constant 0 : i32
    return %c0_i32, %c0_i32_0 : i32, i32
  }
  func.func @transform_15(%arg0: i32) -> (i32, i32) {
    %c0_i32 = arith.constant 0 : i32
    %c0_i32_0 = arith.constant 0 : i32
    return %arg0, %c0_i32 : i32, i32
  }
}

</mosaic_0001>

<llo_original>
// kernel: tpu_custom_call.1
$region0: #{tpu_custom_call.1}
  #allocation0 [shape = 'u32[]', space=smem, size = 0x4, offset = 0x4, fixed_abs, tag = 'smem constant byte address 0x4 - core index']
  #allocation1 [shape = 'u32[144,128]{1,0:T(1,128)}', space=vmem, size = 0x12000, scoped, tag = 'internal scratch']
  %s0 = inlined_call_operand.hbm [shape: f32[8,32], index: 0, kind: input, shape index: {}]
  %s1 = inlined_call_operand.hbm [shape: f32[8,128], index: 1, kind: input, shape index: {}]
  %s2 = inlined_call_operand.hbm [shape: bf16[32,768], index: 2, kind: input, shape index: {}]
  %s3 = inlined_call_operand.hbm [shape: f32[1,768], index: 3, kind: input, shape index: {}]
  %s4 = inlined_call_operand.hbm [shape: bf16[768,768], index: 4, kind: input, shape index: {}]
  %s5 = inlined_call_operand.hbm [shape: f32[1,768], index: 5, kind: input, shape index: {}]
  %s6 = inlined_call_operand.hbm [shape: bf16[768,256], index: 6, kind: input, shape index: {}]
  %s7 = inlined_call_operand.hbm [shape: f32[1,256], index: 7, kind: input, shape index: {}]
  %s8 = inlined_call_operand.hbm [shape: bf16[32,768], index: 8, kind: input, shape index: {}]
  %s9 = inlined_call_operand.hbm [shape: bf16[128,768], index: 9, kind: input, shape index: {}]
  %s10 = inlined_call_operand.hbm [shape: f32[1,768], index: 10, kind: input, shape index: {}]
  %s11 = inlined_call_operand.hbm [shape: bf16[768,768], index: 11, kind: input, shape index: {}]
  %s12 = inlined_call_operand.hbm [shape: f32[1,768], index: 12, kind: input, shape index: {}]
  %s13 = inlined_call_operand.hbm [shape: bf16[768,128], index: 13, kind: input, shape index: {}]
  %s14 = inlined_call_operand.hbm [shape: f32[1,128], index: 14, kind: input, shape index: {}]
  %s15 = inlined_call_operand.hbm [shape: f32[8,128], index: 15, kind: output, shape index: {}]
  %s16 = sld [smem:[#allocation0]]
  $region130: #{tpu_custom_call.1} parent=0
    _
  %s18 = ssub.s32 1, %s16
  %s19 = scalar_select 0, %s18, %s16
  $region1: #{tpu_custom_call.1} parent=0
    #allocation2 [shape = 'u8[4096]{0}', space=vmem, size = 0x1000, scoped, tag = 'input window, operand 0, single buffered']
    #allocation3 [shape = 's32[1]{0}', space=sflag, size = 0x4, scoped, tag = 'scoped memory for tpu_custom_call.1']
    #allocation4 [shape = 's32[1]{0}', space=sflag, size = 0x4, scoped, tag = 'scoped memory for tpu_custom_call.1']
    #allocation5 [shape = 'u8[4096]{0}', space=vmem, size = 0x1000, scoped, tag = 'input window, operand 1, single buffered']
    #allocation6 [shape = 's32[1]{0}', space=sflag, size = 0x4, scoped, tag = 'scoped memory for tpu_custom_call.1']
    #allocation7 [shape = 'u8[49152]{0}', space=vmem, size = 0xc000, scoped, tag = 'input window, operand 2, single buffered']
    #allocation8 [shape = 'u8[3072]{0}', space=vmem, size = 0xc00, scoped, tag = 'input window, operand 3, single buffered']
    #allocation9 [shape = 's32[1]{0}', space=sflag, size = 0x4, scoped, tag = 'scoped memory for tpu_custom_call.1']
    #allocation10 [shape = 'u8[1179648]{0}', space=vmem, size = 0x120000, scoped, tag = 'input window, operand 4, single buffered']
    #allocation11 [shape = 'u8[3072]{0}', space=vmem, size = 0xc00, scoped, tag = 'input window, operand 5, single buffered']
    #allocation12 [shape = 's32[1]{0}', space=sflag, size = 0x4, scoped, tag = 'scoped memory for tpu_custom_call.1']
    #allocation13 [shape = 'u8[393216]{0}', space=vmem, size = 0x60000, scoped, tag = 'input window, operand 6, single buffered']
    #allocation14 [shape = 'u8[1024]{0}', space=vmem, size = 0x400, scoped, tag = 'input window, operand 7, single buffered']
    #allocation15 [shape = 's32[1]{0}', space=sflag, size = 0x4, scoped, tag = 'scoped memory for tpu_custom_call.1']
    #allocation16 [shape = 'u8[49152]{0}', space=vmem, size = 0xc000, scoped, tag = 'input window, operand 8, single buffered']
    #allocation17 [shape = 'u8[196608]{0}', space=vmem, size = 0x30000, scoped, tag = 'input window, operand 9, single buffered']
    #allocation18 [shape = 's32[1]{0}', space=sflag, size = 0x4, scoped, tag = 'scoped memory for tpu_custom_call.1']
    #allocation19 [shape = 'u8[3072]{0}', space=vmem, size = 0xc00, scoped, tag = 'input window, operand 10, single buffered']
    #allocation20 [shape = 'u8[1179648]{0}', space=vmem, size = 0x120000, scoped, tag = 'input window, operand 11, single buffered']
    #allocation21 [shape = 's32[1]{0}', space=sflag, size = 0x4, scoped, tag = 'scoped memory for tpu_custom_call.1']
    #allocation22 [shape = 'u8[3072]{0}', space=vmem, size = 0xc00, scoped, tag = 'input window, operand 12, single buffered']
    #allocation23 [shape = 'u8[196608]{0}', space=vmem, size = 0x30000, scoped, tag = 'input window, operand 13, single buffered']
    #allocation24 [shape = 's32[1]{0}', space=sflag, size = 0x4, scoped, tag = 'scoped memory for tpu_custom_call.1']
    #allocation25 [shape = 'u8[512]{0}', space=vmem, size = 0x400, scoped, tag = 'input window, operand 14, single buffered']
    #allocation26 [shape = 'u8[4096]{0}', space=vmem, size = 0x1000, scoped, tag = 'output window, operand 0, single buffered']
    %20 = vsyncpa [#allocation3], 0
    %21 = vsyncpa [#allocation6], 0
    %22 = vsyncpa [#allocation9], 0
    %23 = vsyncpa [#allocation12], 0
    %24 = vsyncpa [#allocation15], 0
    %25 = vsyncpa [#allocation18], 0
    %26 = vsyncpa [#allocation21], 0
    %27 = vsyncpa [#allocation24], 0
    %28 = vsyncpa [#allocation4], 0
    // Predicated region
    $region2: #{tpu_custom_call.1} parent=1 // pred_check
      _
    $region3: #{tpu_custom_call.1} parent=1 // pred_check_branch
      %30 = sbr.rel (0) target = $region5
    $region4: #{tpu_custom_call.1} parent=1 // pred_region
      %s32 = ssub.s32 128, 128
      %33 = vsyncadd [#allocation3], %s32
      %s35 = sshll.u32 [#allocation2], 4
      %s36 = int_to_ptr.vmem [resolvable:$true] %s35
      %38 = dma.hbm_to_vmem [thread:$0]  %s0, 128, %s36, [#allocation3]
    $region5: #{tpu_custom_call.1} parent=1 // pred_fallthru
      _
    // Predicated region
    $region6: #{tpu_custom_call.1} parent=1 // pred_check
      _
    $region7: #{tpu_custom_call.1} parent=1 // pred_check_branch
      %40 = sbr.rel (0) target = $region9
    $region8: #{tpu_custom_call.1} parent=1 // pred_region
      %s42 = ssub.s32 128, 128
      %43 = vsyncadd [#allocation6], %s42
      %s45 = sshll.u32 [#allocation5], 4
      %s46 = int_to_ptr.vmem [resolvable:$true] %s45
      %48 = dma.hbm_to_vmem [thread:$0]  %s1, 128, %s46, [#allocation6]
    $region9: #{tpu_custom_call.1} parent=1 // pred_fallthru
      _
    // Predicated region
    $region10: #{tpu_custom_call.1} parent=1 // pred_check
      _
    $region11: #{tpu_custom_call.1} parent=1 // pred_check_branch
      %50 = sbr.rel (0) target = $region13
    $region12: #{tpu_custom_call.1} parent=1 // pred_region
      %s52 = ssub.s32 1536, 1536
      %53 = vsyncadd [#allocation6], %s52
      %s54 = sshll.u32 [#allocation7], 4
      %s55 = int_to_ptr.vmem [resolvable:$true] %s54
      %60 = dma.hbm_to_vmem [thread:$0]  %s2, 1536, %s55, [#allocation6], 384, 384, 24
    $region13: #{tpu_custom_call.1} parent=1 // pred_fallthru
      _
    // Predicated region
    $region14: #{tpu_custom_call.1} parent=1 // pred_check
      _
    $region15: #{tpu_custom_call.1} parent=1 // pred_check_branch
      %62 = sbr.rel (0) target = $region17
    $region16: #{tpu_custom_call.1} parent=1 // pred_region
      %s64 = ssub.s32 96, 96
      %65 = vsyncadd [#allocation9], %s64
      %s67 = sshll.u32 [#allocation8], 4
      %s68 = int_to_ptr.vmem [resolvable:$true] %s67
      %70 = dma.hbm_to_vmem [thread:$0]  %s3, 96, %s68, [#allocation9]
    $region17: #{tpu_custom_call.1} parent=1 // pred_fallthru
      _
    // Predicated region
    $region18: #{tpu_custom_call.1} parent=1 // pred_check
      _
    $region19: #{tpu_custom_call.1} parent=1 // pred_check_branch
      %72 = sbr.rel (0) target = $region21
    $region20: #{tpu_custom_call.1} parent=1 // pred_region
      %s74 = ssub.s32 36864, 36864
      %75 = vsyncadd [#allocation9], %s74
      %s76 = sshll.u32 [#allocation10], 4
      %s77 = int_to_ptr.vmem [resolvable:$true] %s76
      %82 = dma.hbm_to_vmem [thread:$0]  %s4, 36864, %s77, [#allocation9], 384, 384, 24
    $region21: #{tpu_custom_call.1} parent=1 // pred_fallthru
      _
    // Predicated region
    $region22: #{tpu_custom_call.1} parent=1 // pred_check
      _
    $region23: #{tpu_custom_call.1} parent=1 // pred_check_branch
      %84 = sbr.rel (0) target = $region25
    $region24: #{tpu_custom_call.1} parent=1 // pred_region
      %s86 = ssub.s32 96, 96
      %87 = vsyncadd [#allocation12], %s86
      %s89 = sshll.u32 [#allocation11], 4
      %s90 = int_to_ptr.vmem [resolvable:$true] %s89
      %92 = dma.hbm_to_vmem [thread:$0]  %s5, 96, %s90, [#allocation12]
    $region25: #{tpu_custom_call.1} parent=1 // pred_fallthru
      _
    // Predicated region
    $region26: #{tpu_custom_call.1} parent=1 // pred_check
      _
    $region27: #{tpu_custom_call.1} parent=1 // pred_check_branch
      %94 = sbr.rel (0) target = $region29
    $region28: #{tpu_custom_call.1} parent=1 // pred_region
      %s96 = ssub.s32 12288, 12288
      %97 = vsyncadd [#allocation12], %s96
      %s98 = sshll.u32 [#allocation13], 4
      %s99 = int_to_ptr.vmem [resolvable:$true] %s98
      %104 = dma.hbm_to_vmem [thread:$0]  %s6, 12288, %s99, [#allocation12], 128, 128, 8
    $region29: #{tpu_custom_call.1} parent=1 // pred_fallthru
      _
    // Predicated region
    $region30: #{tpu_custom_call.1} parent=1 // pred_check
      _
    $region31: #{tpu_custom_call.1} parent=1 // pred_check_branch
      %106 = sbr.rel (0) target = $region33
    $region32: #{tpu_custom_call.1} parent=1 // pred_region
      %s108 = ssub.s32 32, 32
      %109 = vsyncadd [#allocation15], %s108
      %s111 = sshll.u32 [#allocation14], 4
      %s112 = int_to_ptr.vmem [resolvable:$true] %s111
      %114 = dma.hbm_to_vmem [thread:$0]  %s7, 32, %s112, [#allocation15]
    $region33: #{tpu_custom_call.1} parent=1 // pred_fallthru
      _
    // Predicated region
    $region34: #{tpu_custom_call.1} parent=1 // pred_check
      _
    $region35: #{tpu_custom_call.1} parent=1 // pred_check_branch
      %116 = sbr.rel (0) target = $region37
    $region36: #{tpu_custom_call.1} parent=1 // pred_region
      %s118 = ssub.s32 1536, 1536
      %119 = vsyncadd [#allocation15], %s118
      %s120 = sshll.u32 [#allocation16], 4
      %s121 = int_to_ptr.vmem [resolvable:$true] %s120
      %126 = dma.hbm_to_vmem [thread:$0]  %s8, 1536, %s121, [#allocation15], 384, 384, 24
    $region37: #{tpu_custom_call.1} parent=1 // pred_fallthru
      _
    // Predicated region
    $region38: #{tpu_custom_call.1} parent=1 // pred_check
      _
    $region39: #{tpu_custom_call.1} parent=1 // pred_check_branch
      %128 = sbr.rel (0) target = $region41
    $region40: #{tpu_custom_call.1} parent=1 // pred_region
      %s130 = ssub.s32 6144, 6144
      %131 = vsyncadd [#allocation18], %s130
      %s132 = sshll.u32 [#allocation17], 4
      %s133 = int_to_ptr.vmem [resolvable:$true] %s132
      %138 = dma.hbm_to_vmem [thread:$0]  %s9, 6144, %s133, [#allocation18], 384, 384, 24
    $region41: #{tpu_custom_call.1} parent=1 // pred_fallthru
      _
    // Predicated region
    $region42: #{tpu_custom_call.1} parent=1 // pred_check
      _
    $region43: #{tpu_custom_call.1} parent=1 // pred_check_branch
      %140 = sbr.rel (0) target = $region45
    $region44: #{tpu_custom_call.1} parent=1 // pred_region
      %s142 = ssub.s32 96, 96
      %143 = vsyncadd [#allocation18], %s142
      %s145 = sshll.u32 [#allocation19], 4
      %s146 = int_to_ptr.vmem [resolvable:$true] %s145
      %148 = dma.hbm_to_vmem [thread:$0]  %s10, 96, %s146, [#allocation18]
    $region45: #{tpu_custom_call.1} parent=1 // pred_fallthru
      _
    // Predicated region
    $region46: #{tpu_custom_call.1} parent=1 // pred_check
      _
    $region47: #{tpu_custom_call.1} parent=1 // pred_check_branch
      %150 = sbr.rel (0) target = $region49
    $region48: #{tpu_custom_call.1} parent=1 // pred_region
      %s152 = ssub.s32 36864, 36864
      %153 = vsyncadd [#allocation21], %s152
      %s154 = sshll.u32 [#allocation20], 4
      %s155 = int_to_ptr.vmem [resolvable:$true] %s154
      %160 = dma.hbm_to_vmem [thread:$0]  %s11, 36864, %s155, [#allocation21], 384, 384, 24
    $region49: #{tpu_custom_call.1} parent=1 // pred_fallthru
      _
    // Predicated region
    $region50: #{tpu_custom_call.1} parent=1 // pred_check
      _
    $region51: #{tpu_custom_call.1} parent=1 // pred_check_branch
      %162 = sbr.rel (0) target = $region53
    $region52: #{tpu_custom_call.1} parent=1 // pred_region
      %s164 = ssub.s32 96, 96
      %165 = vsyncadd [#allocation21], %s164
      %s167 = sshll.u32 [#allocation22], 4
      %s168 = int_to_ptr.vmem [resolvable:$true] %s167
      %170 = dma.hbm_to_vmem [thread:$0]  %s12, 96, %s168, [#allocation21]
    $region53: #{tpu_custom_call.1} parent=1 // pred_fallthru
      _
    // Predicated region
    $region54: #{tpu_custom_call.1} parent=1 // pred_check
      _
    $region55: #{tpu_custom_call.1} parent=1 // pred_check_branch
      %172 = sbr.rel (0) target = $region57
    $region56: #{tpu_custom_call.1} parent=1 // pred_region
      %s174 = ssub.s32 6144, 6144
      %175 = vsyncadd [#allocation24], %s174
      %s176 = sshll.u32 [#allocation23], 4
      %s177 = int_to_ptr.vmem [resolvable:$true] %s176
      %182 = dma.hbm_to_vmem [thread:$0]  %s13, 6144, %s177, [#allocation24], 64, 64, 4
    $region57: #{tpu_custom_call.1} parent=1 // pred_fallthru
      _
    // Predicated region
    $region58: #{tpu_custom_call.1} parent=1 // pred_check
      _
    $region59: #{tpu_custom_call.1} parent=1 // pred_check_branch
      %184 = sbr.rel (0) target = $region61
    $region60: #{tpu_custom_call.1} parent=1 // pred_region
      %s186 = ssub.s32 16, 16
      %187 = vsyncadd [#allocation24], %s186
      %s189 = sshll.u32 [#allocation25], 4
      %s190 = int_to_ptr.vmem [resolvable:$true] %s189
      %192 = dma.hbm_to_vmem [thread:$0]  %s14, 16, %s190, [#allocation24]
    $region61: #{tpu_custom_call.1} parent=1 // pred_fallthru
      _
    // Predicated region
    $region62: #{tpu_custom_call.1} parent=1 // pred_check
      _
    $region63: #{tpu_custom_call.1} parent=1 // pred_check_branch
      %194 = sbr.rel (0) target = $region65
    $region64: #{tpu_custom_call.1} parent=1 // pred_region
      %195 = dma.done [#allocation3], 128
    $region65: #{tpu_custom_call.1} parent=1 // pred_fallthru
      _
    // Predicated region
    $region66: #{tpu_custom_call.1} parent=1 // pred_check
      _
    $region67: #{tpu_custom_call.1} parent=1 // pred_check_branch
      %197 = sbr.rel (0) target = $region69
    $region68: #{tpu_custom_call.1} parent=1 // pred_region
      %198 = dma.done [#allocation6], 128
    $region69: #{tpu_custom_call.1} parent=1 // pred_fallthru
      _
    // Predicated region
    $region70: #{tpu_custom_call.1} parent=1 // pred_check
      _
    $region71: #{tpu_custom_call.1} parent=1 // pred_check_branch
      %200 = sbr.rel (0) target = $region73
    $region72: #{tpu_custom_call.1} parent=1 // pred_region
      %201 = dma.done [#allocation6], 1536
    $region73: #{tpu_custom_call.1} parent=1 // pred_fallthru
      _
    // Predicated region
    $region74: #{tpu_custom_call.1} parent=1 // pred_check
      _
    $region75: #{tpu_custom_call.1} parent=1 // pred_check_branch
      %203 = sbr.rel (0) target = $region77
    $region76: #{tpu_custom_call.1} parent=1 // pred_region
      %204 = dma.done [#allocation9], 96
    $region77: #{tpu_custom_call.1} parent=1 // pred_fallthru
      _
    // Predicated region
    $region78: #{tpu_custom_call.1} parent=1 // pred_check
      _
    $region79: #{tpu_custom_call.1} parent=1 // pred_check_branch
      %206 = sbr.rel (0) target = $region81
    $region80: #{tpu_custom_call.1} parent=1 // pred_region
      %207 = dma.done [#allocation9], 36864
    $region81: #{tpu_custom_call.1} parent=1 // pred_fallthru
      _
    // Predicated region
    $region82: #{tpu_custom_call.1} parent=1 // pred_check
      _
    $region83: #{tpu_custom_call.1} parent=1 // pred_check_branch
      %209 = sbr.rel (0) target = $region85
    $region84: #{tpu_custom_call.1} parent=1 // pred_region
      %210 = dma.done [#allocation12], 96
    $region85: #{tpu_custom_call.1} parent=1 // pred_fallthru
      _
    // Predicated region
    $region86: #{tpu_custom_call.1} parent=1 // pred_check
      _
    $region87: #{tpu_custom_call.1} parent=1 // pred_check_branch
      %212 = sbr.rel (0) target = $region89
    $region88: #{tpu_custom_call.1} parent=1 // pred_region
      %213 = dma.done [#allocation12], 12288
    $region89: #{tpu_custom_call.1} parent=1 // pred_fallthru
      _
    // Predicated region
    $region90: #{tpu_custom_call.1} parent=1 // pred_check
      _
    $region91: #{tpu_custom_call.1} parent=1 // pred_check_branch
      %215 = sbr.rel (0) target = $region93
    $region92: #{tpu_custom_call.1} parent=1 // pred_region
      %216 = dma.done [#allocation15], 32
    $region93: #{tpu_custom_call.1} parent=1 // pred_fallthru
      _
    // Predicated region
    $region94: #{tpu_custom_call.1} parent=1 // pred_check
      _
    $region95: #{tpu_custom_call.1} parent=1 // pred_check_branch
      %218 = sbr.rel (0) target = $region97
    $region96: #{tpu_custom_call.1} parent=1 // pred_region
      %219 = dma.done [#allocation15], 1536
    $region97: #{tpu_custom_call.1} parent=1 // pred_fallthru
      _
    // Predicated region
    $region98: #{tpu_custom_call.1} parent=1 // pred_check
      _
    $region99: #{tpu_custom_call.1} parent=1 // pred_check_branch
      %221 = sbr.rel (0) target = $region101
    $region100: #{tpu_custom_call.1} parent=1 // pred_region
      %222 = dma.done [#allocation18], 6144
    $region101: #{tpu_custom_call.1} parent=1 // pred_fallthru
      _
    // Predicated region
    $region102: #{tpu_custom_call.1} parent=1 // pred_check
      _
    $region103: #{tpu_custom_call.1} parent=1 // pred_check_branch
      %224 = sbr.rel (0) target = $region105
    $region104: #{tpu_custom_call.1} parent=1 // pred_region
      %225 = dma.done [#allocation18], 96
    $region105: #{tpu_custom_call.1} parent=1 // pred_fallthru
      _
    // Predicated region
    $region106: #{tpu_custom_call.1} parent=1 // pred_check
      _
    $region107: #{tpu_custom_call.1} parent=1 // pred_check_branch
      %227 = sbr.rel (0) target = $region109
    $region108: #{tpu_custom_call.1} parent=1 // pred_region
      %228 = dma.done [#allocation21], 36864
    $region109: #{tpu_custom_call.1} parent=1 // pred_fallthru
      _
    // Predicated region
    $region110: #{tpu_custom_call.1} parent=1 // pred_check
      _
    $region111: #{tpu_custom_call.1} parent=1 // pred_check_branch
      %230 = sbr.rel (0) target = $region113
    $region112: #{tpu_custom_call.1} parent=1 // pred_region
      %231 = dma.done [#allocation21], 96
    $region113: #{tpu_custom_call.1} parent=1 // pred_fallthru
      _
    // Predicated region
    $region114: #{tpu_custom_call.1} parent=1 // pred_check
      _
    $region115: #{tpu_custom_call.1} parent=1 // pred_check_branch
      %233 = sbr.rel (0) target = $region117
    $region116: #{tpu_custom_call.1} parent=1 // pred_region
      %234 = dma.done [#allocation24], 6144
    $region117: #{tpu_custom_call.1} parent=1 // pred_fallthru
      _
    // Predicated region
    $region118: #{tpu_custom_call.1} parent=1 // pred_check
      _
    $region119: #{tpu_custom_call.1} parent=1 // pred_check_branch
      %236 = sbr.rel (0) target = $region121
    $region120: #{tpu_custom_call.1} parent=1 // pred_region
      %237 = dma.done [#allocation24], 16
    $region121: #{tpu_custom_call.1} parent=1 // pred_fallthru
      _
    %v239 = vld [vmem:[#allocation2] sm:$0xff]
    %v240 = vpack.c.bf16 %v239, %v239
    %v241 = vld [vmem:[#allocation5] sm:$0xff]
    %v242 = vld [vmem:[#allocation7] sm:$0xff]
    %v243 = vld [vmem:[#allocation7 + $0x8] sm:$0xff]
    %v244 = vld [vmem:[#allocation7 + $0x10] sm:$0xff]
    %v245 = vld [vmem:[#allocation7 + $0x18] sm:$0xff]
    %v246 = vld [vmem:[#allocation7 + $0x20] sm:$0xff]
    %v247 = vld [vmem:[#allocation7 + $0x28] sm:$0xff]
    %v248 = vld [vmem:[#allocation7 + $0x30] sm:$0xff]
    %v249 = vld [vmem:[#allocation7 + $0x38] sm:$0xff]
    %v250 = vld [vmem:[#allocation7 + $0x40] sm:$0xff]
    %v251 = vld [vmem:[#allocation7 + $0x48] sm:$0xff]
    %v252 = vld [vmem:[#allocation7 + $0x50] sm:$0xff]
    %v253 = vld [vmem:[#allocation7 + $0x58] sm:$0xff]
    %v254 = vld [vmem:[#allocation8] sm:$0x3f]
    %v256 = vlaneseq
    %v257 = vshrl.u32 %v256, 7
    %v258 = vsub.s32 0, %v257
    %v259 = vrot.slane %v254, %v258
    %v260 = vlaneseq
    %v261 = vshrl.u32 %v260, 7
    %v262 = vsub.s32 1, %v261
    %v263 = vrot.slane %v254, %v262
    %v264 = vlaneseq
    %v265 = vshrl.u32 %v264, 7
    %v266 = vsub.s32 2, %v265
    %v267 = vrot.slane %v254, %v266
    %v268 = vlaneseq
    %v269 = vshrl.u32 %v268, 7
    %v270 = vsub.s32 3, %v269
    %v271 = vrot.slane %v254, %v270
    %v272 = vlaneseq
    %v273 = vshrl.u32 %v272, 7
    %v274 = vsub.s32 4, %v273
    %v275 = vrot.slane %v254, %v274
    %v276 = vlaneseq
    %v277 = vshrl.u32 %v276, 7
    %v278 = vsub.s32 5, %v277
    %v279 = vrot.slane %v254, %v278
    %v298 = vunpack.c.l.b16 %v242
    %v299 = vunpack.c.h.b16 %v242
    %v300 = vunpack.c.l.b16 %v243
    %v301 = vunpack.c.h.b16 %v243
    %v302 = vunpack.c.l.b16 %v244
    %v303 = vunpack.c.h.b16 %v244
    %v304 = vunpack.c.l.b16 %v245
    %v305 = vunpack.c.h.b16 %v245
    %v306 = vunpack.c.l.b16 %v246
    %v307 = vunpack.c.h.b16 %v246
    %v308 = vunpack.c.l.b16 %v247
    %v309 = vunpack.c.h.b16 %v247
    %v310 = vunpack.c.l.b16 %v248
    %v311 = vunpack.c.h.b16 %v248
    %v312 = vunpack.c.l.b16 %v249
    %v313 = vunpack.c.h.b16 %v249
    %v314 = vunpack.c.l.b16 %v250
    %v315 = vunpack.c.h.b16 %v250
    %v316 = vunpack.c.l.b16 %v251
    %v317 = vunpack.c.h.b16 %v251
    %v318 = vunpack.c.l.b16 %v252
    %v319 = vunpack.c.h.b16 %v252
    %v320 = vunpack.c.l.b16 %v253
    %v321 = vunpack.c.h.b16 %v253
    %v322 = vpack.c.b16 %v304, %v298
    %v323 = vpack.c.b16 %v305, %v299
    %v324 = vpack.c.b16 %v306, %v300
    %v325 = vpack.c.b16 %v307, %v301
    %v326 = vpack.c.b16 %v308, %v302
    %v327 = vpack.c.b16 %v309, %v303
    %v328 = vpack.c.b16 %v316, %v310
    %v329 = vpack.c.b16 %v317, %v311
    %v330 = vpack.c.b16 %v318, %v312
    %v331 = vpack.c.b16 %v319, %v313
    %v332 = vpack.c.b16 %v320, %v314
    %v333 = vpack.c.b16 %v321, %v315
    %vm346 = vcmask 261120
    %v348 = vsel %vm346, %v240, 0
    %350 = vmatprep.subr.bf16.mxu0 %v323
    %351 = vmatpush1.bf16.msra.mxu0 %v322
    %352 = vmatprep.subr.bf16.mxu0 %v329
    %353 = vmatpush1.bf16.msra.mxu0 %v328
    %354 = vmatprep.subr.bf16.mxu0 0
    %355 = vmatpush1.bf16.msra.mxu0 0
    %356 = vmatprep.subr.bf16.mxu0 0
    %357 = vmatpush1.bf16.msra.mxu0 0
    %358 = vmatprep.subr.bf16.mxu0 0
    %359 = vmatpush1.bf16.msra.mxu0 0
    %360 = vmatprep.subr.bf16.mxu0 0
    %361 = vmatpush1.bf16.msra.mxu0 0
    %362 = vmatprep.subr.bf16.mxu0 0
    %363 = vmatpush1.bf16.msra.mxu0 0
    %364 = vmatprep.subr.bf16.mxu0 0
    %365 = vmatpush1.bf16.msra.mxu0 0
    %366 = vmatprep.subr.bf16.mxu0 0
    %367 = vmatpush1.bf16.msra.mxu0 0
    %368 = vmatprep.subr.bf16.mxu0 0
    %369 = vmatpush1.bf16.msra.mxu0 0
    %370 = vmatprep.subr.bf16.mxu0 0
    %371 = vmatpush1.bf16.msra.mxu0 0
    %372 = vmatprep.subr.bf16.mxu0 0
    %373 = vmatpush1.bf16.msra.mxu0 0
    %374 = vmatprep.subr.bf16.mxu0 0
    %375 = vmatpush1.bf16.msra.mxu0 0
    %376 = vmatprep.subr.bf16.mxu0 0
    %377 = vmatpush1.bf16.msra.mxu0 0
    %378 = vmatprep.subr.bf16.mxu0 0
    %379 = vmatpush1.bf16.msra.mxu0 0
    %380 = vmatprep.subr.bf16.mxu0 0
    %381 = vmatpush1.bf16.msra.mxu0 0
    %382 = vmatprep.mubr.bf16.mxu0 0
    %383 = vmatmul.mubr.bf16.gmra.mrb[0].mxu0 %v348
    %v384 = vpop.f32.mrb[0].mxu0
    %v385 = vadd.f32 %v259, %v384
    %v386 = vpop.f32.mrb[0].mxu0
    %v387 = vadd.f32 %v263, %v386
    %v388 = vpop.f32.mrb[0].mxu0
    %v389 = vpop.f32.mrb[0].mxu0
    %390 = vdwg.mxu0
    %391 = vmatprep.subr.bf16.mxu0 %v325
    %392 = vmatpush1.bf16.msra.mxu0 %v324
    %393 = vmatprep.subr.bf16.mxu0 %v331
    %394 = vmatpush1.bf16.msra.mxu0 %v330
    %395 = vmatprep.subr.bf16.mxu0 0
    %396 = vmatpush1.bf16.msra.mxu0 0
    %397 = vmatprep.subr.bf16.mxu0 0
    %398 = vmatpush1.bf16.msra.mxu0 0
    %399 = vmatprep.subr.bf16.mxu0 0
    %400 = vmatpush1.bf16.msra.mxu0 0
    %401 = vmatprep.subr.bf16.mxu0 0
    %402 = vmatpush1.bf16.msra.mxu0 0
    %403 = vmatprep.subr.bf16.mxu0 0
    %404 = vmatpush1.bf16.msra.mxu0 0
    %405 = vmatprep.subr.bf16.mxu0 0
    %406 = vmatpush1.bf16.msra.mxu0 0
    %407 = vmatprep.subr.bf16.mxu0 0
    %408 = vmatpush1.bf16.msra.mxu0 0
    %409 = vmatprep.subr.bf16.mxu0 0
    %410 = vmatpush1.bf16.msra.mxu0 0
    %411 = vmatprep.subr.bf16.mxu0 0
    %412 = vmatpush1.bf16.msra.mxu0 0
    %413 = vmatprep.subr.bf16.mxu0 0
    %414 = vmatpush1.bf16.msra.mxu0 0
    %415 = vmatprep.subr.bf16.mxu0 0
    %416 = vmatpush1.bf16.msra.mxu0 0
    %417 = vmatprep.subr.bf16.mxu0 0
    %418 = vmatpush1.bf16.msra.mxu0 0
    %419 = vmatprep.subr.bf16.mxu0 0
    %420 = vmatpush1.bf16.msra.mxu0 0
    %421 = vmatprep.subr.bf16.mxu0 0
    %422 = vmatpush1.bf16.msra.mxu0 0
    %423 = vmatprep.mubr.bf16.mxu0 0
    %424 = vmatmul.mubr.bf16.gmra.mrb[0].mxu0 %v348
    %v425 = vpop.f32.mrb[0].mxu0
    %v426 = vadd.f32 %v267, %v425
    %v427 = vpop.f32.mrb[0].mxu0
    %v428 = vadd.f32 %v271, %v427
    %v429 = vpop.f32.mrb[0].mxu0
    %v430 = vpop.f32.mrb[0].mxu0
    %431 = vdwg.mxu0
    %432 = vmatprep.subr.bf16.mxu0 %v327
    %433 = vmatpush1.bf16.msra.mxu0 %v326
    %434 = vmatprep.subr.bf16.mxu0 %v333
    %435 = vmatpush1.bf16.msra.mxu0 %v332
    %436 = vmatprep.subr.bf16.mxu0 0
    %437 = vmatpush1.bf16.msra.mxu0 0
    %438 = vmatprep.subr.bf16.mxu0 0
    %439 = vmatpush1.bf16.msra.mxu0 0
    %440 = vmatprep.subr.bf16.mxu0 0
    %441 = vmatpush1.bf16.msra.mxu0 0
    %442 = vmatprep.subr.bf16.mxu0 0
    %443 = vmatpush1.bf16.msra.mxu0 0
    %444 = vmatprep.subr.bf16.mxu0 0
    %445 = vmatpush1.bf16.msra.mxu0 0
    %446 = vmatprep.subr.bf16.mxu0 0
    %447 = vmatpush1.bf16.msra.mxu0 0
    %448 = vmatprep.subr.bf16.mxu0 0
    %449 = vmatpush1.bf16.msra.mxu0 0
    %450 = vmatprep.subr.bf16.mxu0 0
    %451 = vmatpush1.bf16.msra.mxu0 0
    %452 = vmatprep.subr.bf16.mxu0 0
    %453 = vmatpush1.bf16.msra.mxu0 0
    %454 = vmatprep.subr.bf16.mxu0 0
    %455 = vmatpush1.bf16.msra.mxu0 0
    %456 = vmatprep.subr.bf16.mxu0 0
    %457 = vmatpush1.bf16.msra.mxu0 0
    %458 = vmatprep.subr.bf16.mxu0 0
    %459 = vmatpush1.bf16.msra.mxu0 0
    %460 = vmatprep.subr.bf16.mxu0 0
    %461 = vmatpush1.bf16.msra.mxu0 0
    %462 = vmatprep.subr.bf16.mxu0 0
    %463 = vmatpush1.bf16.msra.mxu0 0
    %464 = vmatprep.mubr.bf16.mxu0 0
    %465 = vmatmul.mubr.bf16.gmra.mrb[0].mxu0 %v348
    %v466 = vpop.f32.mrb[0].mxu0
    %v467 = vadd.f32 %v275, %v466
    %v468 = vpop.f32.mrb[0].mxu0
    %v469 = vadd.f32 %v279, %v468
    %v470 = vpop.f32.mrb[0].mxu0
    %v471 = vpop.f32.mrb[0].mxu0
    %472 = vdwg.mxu0
    %v473 = vmax.f32 %v385, 0.0
    %v474 = vmax.f32 %v387, 0.0
    %v475 = vmax.f32 %v426, 0.0
    %v476 = vmax.f32 %v428, 0.0
    %v477 = vmax.f32 %v467, 0.0
    %v478 = vmax.f32 %v469, 0.0
    %v479 = vpack.c.bf16 %v473, %v473
    %v480 = vpack.c.bf16 %v474, %v474
    %v481 = vpack.c.bf16 %v475, %v475
    %v482 = vpack.c.bf16 %v476, %v476
    %v483 = vpack.c.bf16 %v477, %v477
    %v484 = vpack.c.bf16 %v478, %v478
    %v485 = vld [vmem:[#allocation10] sm:$0xff]
    %v486 = vld [vmem:[#allocation10 + $0x8] sm:$0xff]
    %v487 = vld [vmem:[#allocation10 + $0x10] sm:$0xff]
    %v488 = vld [vmem:[#allocation10 + $0x18] sm:$0xff]
    %v489 = vld [vmem:[#allocation10 + $0x20] sm:$0xff]
    %v490 = vld [vmem:[#allocation10 + $0x28] sm:$0xff]
    %v491 = vld [vmem:[#allocation10 + $0x30] sm:$0xff]
    %v492 = vld [vmem:[#allocation10 + $0x38] sm:$0xff]
    %v493 = vld [vmem:[#allocation10 + $0x40] sm:$0xff]
    %v494 = vld [vmem:[#allocation10 + $0x48] sm:$0xff]
    %v495 = vld [vmem:[#allocation10 + $0x50] sm:$0xff]
    %v496 = vld [vmem:[#allocation10 + $0x58] sm:$0xff]
    %v497 = vld [vmem:[#allocation10 + $0x60] sm:$0xff]
    %v498 = vld [vmem:[#allocation10 + $0x68] sm:$0xff]
    %v499 = vld [vmem:[#allocation10 + $0x70] sm:$0xff]
    %v500 = vld [vmem:[#allocation10 + $0x78] sm:$0xff]
    %v501 = vld [vmem:[#allocation10 + $0x80] sm:$0xff]
    %v502 = vld [vmem:[#allocation10 + $0x88] sm:$0xff]
    %v503 = vld [vmem:[#allocation10 + $0x90] sm:$0xff]
    %v504 = vld [vmem:[#allocation10 + $0x98] sm:$0xff]
    %v505 = vld [vmem:[#allocation10 + $0xa0] sm:$0xff]
    %v506 = vld [vmem:[#allocation10 + $0xa8] sm:$0xff]
    %v507 = vld [vmem:[#allocation10 + $0xb0] sm:$0xff]
    %v508 = vld [vmem:[#allocation10 + $0xb8] sm:$0xff]
    %v509 = vld [vmem:[#allocation10 + $0xc0] sm:$0xff]
    %v510 = vld [vmem:[#allocation10 + $0xc8] sm:$0xff]
    %v511 = vld [vmem:[#allocation10 + $0xd0] sm:$0xff]
    %v512 = vld [vmem:[#allocation10 + $0xd8] sm:$0xff]
    %v513 = vld [vmem:[#allocation10 + $0xe0] sm:$0xff]
    %v514 = vld [vmem:[#allocation10 + $0xe8] sm:$0xff]
    %v515 = vld [vmem:[#allocation10 + $0xf0] sm:$0xff]
    %v516 = vld [vmem:[#allocation10 + $0xf8] sm:$0xff]
    %v517 = vld [vmem:[#allocation10 + $0x100] sm:$0xff]
    %v518 = vld [vmem:[#allocation10 + $0x108] sm:$0xff]
    %v519 = vld [vmem:[#allocation10 + $0x110] sm:$0xff]
    %v520 = vld [vmem:[#allocation10 + $0x118] sm:$0xff]
    %v521 = vld [vmem:[#allocation10 + $0x120] sm:$0xff]
    %v522 = vld [vmem:[#allocation10 + $0x128] sm:$0xff]
    %v523 = vld [vmem:[#allocation10 + $0x130] sm:$0xff]
    %v524 = vld [vmem:[#allocation10 + $0x138] sm:$0xff]
    %v525 = vld [vmem:[#allocation10 + $0x140] sm:$0xff]
    %v526 = vld [vmem:[#allocation10 + $0x148] sm:$0xff]
    %v527 = vld [vmem:[#allocation10 + $0x150] sm:$0xff]
    %v528 = vld [vmem:[#allocation10 + $0x158] sm:$0xff]
    %v529 = vld [vmem:[#allocation10 + $0x160] sm:$0xff]
    %v530 = vld [vmem:[#allocation10 + $0x168] sm:$0xff]
    %v531 = vld [vmem:[#allocation10 + $0x170] sm:$0xff]
    %v532 = vld [vmem:[#allocation10 + $0x178] sm:$0xff]
    %v533 = vld [vmem:[#allocation10 + $0x180] sm:$0xff]
    %v534 = vld [vmem:[#allocation10 + $0x188] sm:$0xff]
    %v535 = vld [vmem:[#allocation10 + $0x190] sm:$0xff]
    %v536 = vld [vmem:[#allocation10 + $0x198] sm:$0xff]
    %v537 = vld [vmem:[#allocation10 + $0x1a0] sm:$0xff]
    %v538 = vld [vmem:[#allocation10 + $0x1a8] sm:$0xff]
    %v539 = vld [vmem:[#allocation10 + $0x1b0] sm:$0xff]
    %v540 = vld [vmem:[#allocation10 + $0x1b8] sm:$0xff]
    %v541 = vld [vmem:[#allocation10 + $0x1c0] sm:$0xff]
    %v542 = vld [vmem:[#allocation10 + $0x1c8] sm:$0xff]
    %v543 = vld [vmem:[#allocation10 + $0x1d0] sm:$0xff]
    %v544 = vld [vmem:[#allocation10 + $0x1d8] sm:$0xff]
    %v545 = vld [vmem:[#allocation10 + $0x1e0] sm:$0xff]
    %v546 = vld [vmem:[#allocation10 + $0x1e8] sm:$0xff]
    %v547 = vld [vmem:[#allocation10 + $0x1f0] sm:$0xff]
    %v548 = vld [vmem:[#allocation10 + $0x1f8] sm:$0xff]
    %v549 = vld [vmem:[#allocation10 + $0x200] sm:$0xff]
    %v550 = vld [vmem:[#allocation10 + $0x208] sm:$0xff]
    %v551 = vld [vmem:[#allocation10 + $0x210] sm:$0xff]
    %v552 = vld [vmem:[#allocation10 + $0x218] sm:$0xff]
    %v553 = vld [vmem:[#allocation10 + $0x220] sm:$0xff]
    %v554 = vld [vmem:[#allocation10 + $0x228] sm:$0xff]
    %v555 = vld [vmem:[#allocation10 + $0x230] sm:$0xff]
    %v556 = vld [vmem:[#allocation10 + $0x238] sm:$0xff]
    %v557 = vld [vmem:[#allocation10 + $0x240] sm:$0xff]
    %v558 = vld [vmem:[#allocation10 + $0x248] sm:$0xff]
    %v559 = vld [vmem:[#allocation10 + $0x250] sm:$0xff]
    %v560 = vld [vmem:[#allocation10 + $0x258] sm:$0xff]
    %v561 = vld [vmem:[#allocation10 + $0x260] sm:$0xff]
    %v562 = vld [vmem:[#allocation10 + $0x268] sm:$0xff]
    %v563 = vld [vmem:[#allocation10 + $0x270] sm:$0xff]
    %v564 = vld [vmem:[#allocation10 + $0x278] sm:$0xff]
    %v565 = vld [vmem:[#allocation10 + $0x280] sm:$0xff]
    %v566 = vld [vmem:[#allocation10 + $0x288] sm:$0xff]
    %v567 = vld [vmem:[#allocation10 + $0x290] sm:$0xff]
    %v568 = vld [vmem:[#allocation10 + $0x298] sm:$0xff]
    %v569 = vld [vmem:[#allocation10 + $0x2a0] sm:$0xff]
    %v570 = vld [vmem:[#allocation10 + $0x2a8] sm:$0xff]
    %v571 = vld [vmem:[#allocation10 + $0x2b0] sm:$0xff]
    %v572 = vld [vmem:[#allocation10 + $0x2b8] sm:$0xff]
    %v573 = vld [vmem:[#allocation10 + $0x2c0] sm:$0xff]
    %v574 = vld [vmem:[#allocation10 + $0x2c8] sm:$0xff]
    %v575 = vld [vmem:[#allocation10 + $0x2d0] sm:$0xff]
    %v576 = vld [vmem:[#allocation10 + $0x2d8] sm:$0xff]
    %v577 = vld [vmem:[#allocation10 + $0x2e0] sm:$0xff]
    %v578 = vld [vmem:[#allocation10 + $0x2e8] sm:$0xff]
    %v579 = vld [vmem:[#allocation10 + $0x2f0] sm:$0xff]
    %v580 = vld [vmem:[#allocation10 + $0x2f8] sm:$0xff]
    %v581 = vld [vmem:[#allocation10 + $0x300] sm:$0xff]
    %v582 = vld [vmem:[#allocation10 + $0x308] sm:$0xff]
    %v583 = vld [vmem:[#allocation10 + $0x310] sm:$0xff]
    %v584 = vld [vmem:[#allocation10 + $0x318] sm:$0xff]
    %v585 = vld [vmem:[#allocation10 + $0x320] sm:$0xff]
    %v586 = vld [vmem:[#allocation10 + $0x328] sm:$0xff]
    %v587 = vld [vmem:[#allocation10 + $0x330] sm:$0xff]
    %v588 = vld [vmem:[#allocation10 + $0x338] sm:$0xff]
    %v589 = vld [vmem:[#allocation10 + $0x340] sm:$0xff]
    %v590 = vld [vmem:[#allocation10 + $0x348] sm:$0xff]
    %v591 = vld [vmem:[#allocation10 + $0x350] sm:$0xff]
    %v592 = vld [vmem:[#allocation10 + $0x358] sm:$0xff]
    %v593 = vld [vmem:[#allocation10 + $0x360] sm:$0xff]
    %v594 = vld [vmem:[#allocation10 + $0x368] sm:$0xff]
    %v595 = vld [vmem:[#allocation10 + $0x370] sm:$0xff]
    %v596 = vld [vmem:[#allocation10 + $0x378] sm:$0xff]
    %v597 = vld [vmem:[#allocation10 + $0x380] sm:$0xff]
    %v598 = vld [vmem:[#allocation10 + $0x388] sm:$0xff]
    %v599 = vld [vmem:[#allocation10 + $0x390] sm:$0xff]
    %v600 = vld [vmem:[#allocation10 + $0x398] sm:$0xff]
    %v601 = vld [vmem:[#allocation10 + $0x3a0] sm:$0xff]
    %v602 = vld [vmem:[#allocation10 + $0x3a8] sm:$0xff]
    %v603 = vld [vmem:[#allocation10 + $0x3b0] sm:$0xff]
    %v604 = vld [vmem:[#allocation10 + $0x3b8] sm:$0xff]
    %v605 = vld [vmem:[#allocation10 + $0x3c0] sm:$0xff]
    %v606 = vld [vmem:[#allocation10 + $0x3c8] sm:$0xff]
    %v607 = vld [vmem:[#allocation10 + $0x3d0] sm:$0xff]
    %v608 = vld [vmem:[#allocation10 + $0x3d8] sm:$0xff]
    %v609 = vld [vmem:[#allocation10 + $0x3e0] sm:$0xff]
    %v610 = vld [vmem:[#allocation10 + $0x3e8] sm:$0xff]
    %v611 = vld [vmem:[#allocation10 + $0x3f0] sm:$0xff]
    %v612 = vld [vmem:[#allocation10 + $0x3f8] sm:$0xff]
    %v613 = vld [vmem:[#allocation10 + $0x400] sm:$0xff]
    %v614 = vld [vmem:[#allocation10 + $0x408] sm:$0xff]
    %v615 = vld [vmem:[#allocation10 + $0x410] sm:$0xff]
    %v616 = vld [vmem:[#allocation10 + $0x418] sm:$0xff]
    %v617 = vld [vmem:[#allocation10 + $0x420] sm:$0xff]
    %v618 = vld [vmem:[#allocation10 + $0x428] sm:$0xff]
    %v619 = vld [vmem:[#allocation10 + $0x430] sm:$0xff]
    %v620 = vld [vmem:[#allocation10 + $0x438] sm:$0xff]
    %v621 = vld [vmem:[#allocation10 + $0x440] sm:$0xff]
    %v622 = vld [vmem:[#allocation10 + $0x448] sm:$0xff]
    %v623 = vld [vmem:[#allocation10 + $0x450] sm:$0xff]
    %v624 = vld [vmem:[#allocation10 + $0x458] sm:$0xff]
    %v625 = vld [vmem:[#allocation10 + $0x460] sm:$0xff]
    %v626 = vld [vmem:[#allocation10 + $0x468] sm:$0xff]
    %v627 = vld [vmem:[#allocation10 + $0x470] sm:$0xff]
    %v628 = vld [vmem:[#allocation10 + $0x478] sm:$0xff]
    %v629 = vld [vmem:[#allocation10 + $0x480] sm:$0xff]
    %v630 = vld [vmem:[#allocation10 + $0x488] sm:$0xff]
    %v631 = vld [vmem:[#allocation10 + $0x490] sm:$0xff]
    %v632 = vld [vmem:[#allocation10 + $0x498] sm:$0xff]
    %v633 = vld [vmem:[#allocation10 + $0x4a0] sm:$0xff]
    %v634 = vld [vmem:[#allocation10 + $0x4a8] sm:$0xff]
    %v635 = vld [vmem:[#allocation10 + $0x4b0] sm:$0xff]
    %v636 = vld [vmem:[#allocation10 + $0x4b8] sm:$0xff]
    %v637 = vld [vmem:[#allocation10 + $0x4c0] sm:$0xff]
    %v638 = vld [vmem:[#allocation10 + $0x4c8] sm:$0xff]
    %v639 = vld [vmem:[#allocation10 + $0x4d0] sm:$0xff]
    %v640 = vld [vmem:[#allocation10 + $0x4d8] sm:$0xff]
    %v641 = vld [vmem:[#allocation10 + $0x4e0] sm:$0xff]
    %v642 = vld [vmem:[#allocation10 + $0x4e8] sm:$0xff]
    %v643 = vld [vmem:[#allocation10 + $0x4f0] sm:$0xff]
    %v644 = vld [vmem:[#allocation10 + $0x4f8] sm:$0xff]
    %v645 = vld [vmem:[#allocation10 + $0x500] sm:$0xff]
    %v646 = vld [vmem:[#allocation10 + $0x508] sm:$0xff]
    %v647 = vld [vmem:[#allocation10 + $0x510] sm:$0xff]
    %v648 = vld [vmem:[#allocation10 + $0x518] sm:$0xff]
    %v649 = vld [vmem:[#allocation10 + $0x520] sm:$0xff]
    %v650 = vld [vmem:[#allocation10 + $0x528] sm:$0xff]
    %v651 = vld [vmem:[#allocation10 + $0x530] sm:$0xff]
    %v652 = vld [vmem:[#allocation10 + $0x538] sm:$0xff]
    %v653 = vld [vmem:[#allocation10 + $0x540] sm:$0xff]
    %v654 = vld [vmem:[#allocation10 + $0x548] sm:$0xff]
    %v655 = vld [vmem:[#allocation10 + $0x550] sm:$0xff]
    %v656 = vld [vmem:[#allocation10 + $0x558] sm:$0xff]
    %v657 = vld [vmem:[#allocation10 + $0x560] sm:$0xff]
    %v658 = vld [vmem:[#allocation10 + $0x568] sm:$0xff]
    %v659 = vld [vmem:[#allocation10 + $0x570] sm:$0xff]
    %v660 = vld [vmem:[#allocation10 + $0x578] sm:$0xff]
    %v661 = vld [vmem:[#allocation10 + $0x580] sm:$0xff]
    %v662 = vld [vmem:[#allocation10 + $0x588] sm:$0xff]
    %v663 = vld [vmem:[#allocation10 + $0x590] sm:$0xff]
    %v664 = vld [vmem:[#allocation10 + $0x598] sm:$0xff]
    %v665 = vld [vmem:[#allocation10 + $0x5a0] sm:$0xff]
    %v666 = vld [vmem:[#allocation10 + $0x5a8] sm:$0xff]
    %v667 = vld [vmem:[#allocation10 + $0x5b0] sm:$0xff]
    %v668 = vld [vmem:[#allocation10 + $0x5b8] sm:$0xff]
    %v669 = vld [vmem:[#allocation10 + $0x5c0] sm:$0xff]
    %v670 = vld [vmem:[#allocation10 + $0x5c8] sm:$0xff]
    %v671 = vld [vmem:[#allocation10 + $0x5d0] sm:$0xff]
    %v672 = vld [vmem:[#allocation10 + $0x5d8] sm:$0xff]
    %v673 = vld [vmem:[#allocation10 + $0x5e0] sm:$0xff]
    %v674 = vld [vmem:[#allocation10 + $0x5e8] sm:$0xff]
    %v675 = vld [vmem:[#allocation10 + $0x5f0] sm:$0xff]
    %v676 = vld [vmem:[#allocation10 + $0x5f8] sm:$0xff]
    %v677 = vld [vmem:[#allocation10 + $0x600] sm:$0xff]
    %v678 = vld [vmem:[#allocation10 + $0x608] sm:$0xff]
    %v679 = vld [vmem:[#allocation10 + $0x610] sm:$0xff]
    %v680 = vld [vmem:[#allocation10 + $0x618] sm:$0xff]
    %v681 = vld [vmem:[#allocation10 + $0x620] sm:$0xff]
    %v682 = vld [vmem:[#allocation10 + $0x628] sm:$0xff]
    %v683 = vld [vmem:[#allocation10 + $0x630] sm:$0xff]
    %v684 = vld [vmem:[#allocation10 + $0x638] sm:$0xff]
    %v685 = vld [vmem:[#allocation10 + $0x640] sm:$0xff]
    %v686 = vld [vmem:[#allocation10 + $0x648] sm:$0xff]
    %v687 = vld [vmem:[#allocation10 + $0x650] sm:$0xff]
    %v688 = vld [vmem:[#allocation10 + $0x658] sm:$0xff]
    %v689 = vld [vmem:[#allocation10 + $0x660] sm:$0xff]
    %v690 = vld [vmem:[#allocation10 + $0x668] sm:$0xff]
    %v691 = vld [vmem:[#allocation10 + $0x670] sm:$0xff]
    %v692 = vld [vmem:[#allocation10 + $0x678] sm:$0xff]
    %v693 = vld [vmem:[#allocation10 + $0x680] sm:$0xff]
    %v694 = vld [vmem:[#allocation10 + $0x688] sm:$0xff]
    %v695 = vld [vmem:[#allocation10 + $0x690] sm:$0xff]
    %v696 = vld [vmem:[#allocation10 + $0x698] sm:$0xff]
    %v697 = vld [vmem:[#allocation10 + $0x6a0] sm:$0xff]
    %v698 = vld [vmem:[#allocation10 + $0x6a8] sm:$0xff]
    %v699 = vld [vmem:[#allocation10 + $0x6b0] sm:$0xff]
    %v700 = vld [vmem:[#allocation10 + $0x6b8] sm:$0xff]
    %v701 = vld [vmem:[#allocation10 + $0x6c0] sm:$0xff]
    %v702 = vld [vmem:[#allocation10 + $0x6c8] sm:$0xff]
    %v703 = vld [vmem:[#allocation10 + $0x6d0] sm:$0xff]
    %v704 = vld [vmem:[#allocation10 + $0x6d8] sm:$0xff]
    %v705 = vld [vmem:[#allocation10 + $0x6e0] sm:$0xff]
    %v706 = vld [vmem:[#allocation10 + $0x6e8] sm:$0xff]
    %v707 = vld [vmem:[#allocation10 + $0x6f0] sm:$0xff]
    %v708 = vld [vmem:[#allocation10 + $0x6f8] sm:$0xff]
    %v709 = vld [vmem:[#allocation10 + $0x700] sm:$0xff]
    %v710 = vld [vmem:[#allocation10 + $0x708] sm:$0xff]
    %v711 = vld [vmem:[#allocation10 + $0x710] sm:$0xff]
    %v712 = vld [vmem:[#allocation10 + $0x718] sm:$0xff]
    %v713 = vld [vmem:[#allocation10 + $0x720] sm:$0xff]
    %v714 = vld [vmem:[#allocation10 + $0x728] sm:$0xff]
    %v715 = vld [vmem:[#allocation10 + $0x730] sm:$0xff]
    %v716 = vld [vmem:[#allocation10 + $0x738] sm:$0xff]
    %v717 = vld [vmem:[#allocation10 + $0x740] sm:$0xff]
    %v718 = vld [vmem:[#allocation10 + $0x748] sm:$0xff]
    %v719 = vld [vmem:[#allocation10 + $0x750] sm:$0xff]
    %v720 = vld [vmem:[#allocation10 + $0x758] sm:$0xff]
    %v721 = vld [vmem:[#allocation10 + $0x760] sm:$0xff]
    %v722 = vld [vmem:[#allocation10 + $0x768] sm:$0xff]
    %v723 = vld [vmem:[#allocation10 + $0x770] sm:$0xff]
    %v724 = vld [vmem:[#allocation10 + $0x778] sm:$0xff]
    %v725 = vld [vmem:[#allocation10 + $0x780] sm:$0xff]
    %v726 = vld [vmem:[#allocation10 + $0x788] sm:$0xff]
    %v727 = vld [vmem:[#allocation10 + $0x790] sm:$0xff]
    %v728 = vld [vmem:[#allocation10 + $0x798] sm:$0xff]
    %v729 = vld [vmem:[#allocation10 + $0x7a0] sm:$0xff]
    %v730 = vld [vmem:[#allocation10 + $0x7a8] sm:$0xff]
    %v731 = vld [vmem:[#allocation10 + $0x7b0] sm:$0xff]
    %v732 = vld [vmem:[#allocation10 + $0x7b8] sm:$0xff]
    %v733 = vld [vmem:[#allocation10 + $0x7c0] sm:$0xff]
    %v734 = vld [vmem:[#allocation10 + $0x7c8] sm:$0xff]
    %v735 = vld [vmem:[#allocation10 + $0x7d0] sm:$0xff]
    %v736 = vld [vmem:[#allocation10 + $0x7d8] sm:$0xff]
    %v737 = vld [vmem:[#allocation10 + $0x7e0] sm:$0xff]
    %v738 = vld [vmem:[#allocation10 + $0x7e8] sm:$0xff]
    %v739 = vld [vmem:[#allocation10 + $0x7f0] sm:$0xff]
    %v740 = vld [vmem:[#allocation10 + $0x7f8] sm:$0xff]
    %v741 = vld [vmem:[#allocation10 + $0x800] sm:$0xff]
    %v742 = vld [vmem:[#allocation10 + $0x808] sm:$0xff]
    %v743 = vld [vmem:[#allocation10 + $0x810] sm:$0xff]
    %v744 = vld [vmem:[#allocation10 + $0x818] sm:$0xff]
    %v745 = vld [vmem:[#allocation10 + $0x820] sm:$0xff]
    %v746 = vld [vmem:[#allocation10 + $0x828] sm:$0xff]
    %v747 = vld [vmem:[#allocation10 + $0x830] sm:$0xff]
    %v748 = vld [vmem:[#allocation10 + $0x838] sm:$0xff]
    %v749 = vld [vmem:[#allocation10 + $0x840] sm:$0xff]
    %v750 = vld [vmem:[#allocation10 + $0x848] sm:$0xff]
    %v751 = vld [vmem:[#allocation10 + $0x850] sm:$0xff]
    %v752 = vld [vmem:[#allocation10 + $0x858] sm:$0xff]
    %v753 = vld [vmem:[#allocation10 + $0x860] sm:$0xff]
    %v754 = vld [vmem:[#allocation10 + $0x868] sm:$0xff]
    %v755 = vld [vmem:[#allocation10 + $0x870] sm:$0xff]
    %v756 = vld [vmem:[#allocation10 + $0x878] sm:$0xff]
    %v757 = vld [vmem:[#allocation10 + $0x880] sm:$0xff]
    %v758 = vld [vmem:[#allocation10 + $0x888] sm:$0xff]
    %v759 = vld [vmem:[#allocation10 + $0x890] sm:$0xff]
    %v760 = vld [vmem:[#allocation10 + $0x898] sm:$0xff]
    %v761 = vld [vmem:[#allocation10 + $0x8a0] sm:$0xff]
    %v762 = vld [vmem:[#allocation10 + $0x8a8] sm:$0xff]
    %v763 = vld [vmem:[#allocation10 + $0x8b0] sm:$0xff]
    %v764 = vld [vmem:[#allocation10 + $0x8b8] sm:$0xff]
    %v765 = vld [vmem:[#allocation10 + $0x8c0] sm:$0xff]
    %v766 = vld [vmem:[#allocation10 + $0x8c8] sm:$0xff]
    %v767 = vld [vmem:[#allocation10 + $0x8d0] sm:$0xff]
    %v768 = vld [vmem:[#allocation10 + $0x8d8] sm:$0xff]
    %v769 = vld [vmem:[#allocation10 + $0x8e0] sm:$0xff]
    %v770 = vld [vmem:[#allocation10 + $0x8e8] sm:$0xff]
    %v771 = vld [vmem:[#allocation10 + $0x8f0] sm:$0xff]
    %v772 = vld [vmem:[#allocation10 + $0x8f8] sm:$0xff]
    %v773 = vld [vmem:[#allocation11] sm:$0x3f]
    %v775 = vlaneseq
    %v776 = vshrl.u32 %v775, 7
    %v777 = vsub.s32 0, %v776
    %v778 = vrot.slane %v773, %v777
    %v779 = vlaneseq
    %v780 = vshrl.u32 %v779, 7
    %v781 = vsub.s32 1, %v780
    %v782 = vrot.slane %v773, %v781
    %v783 = vlaneseq
    %v784 = vshrl.u32 %v783, 7
    %v785 = vsub.s32 2, %v784
    %v786 = vrot.slane %v773, %v785
    %v787 = vlaneseq
    %v788 = vshrl.u32 %v787, 7
    %v789 = vsub.s32 3, %v788
    %v790 = vrot.slane %v773, %v789
    %v791 = vlaneseq
    %v792 = vshrl.u32 %v791, 7
    %v793 = vsub.s32 4, %v792
    %v794 = vrot.slane %v773, %v793
    %v795 = vlaneseq
    %v796 = vshrl.u32 %v795, 7
    %v797 = vsub.s32 5, %v796
    %v798 = vrot.slane %v773, %v797
    %v1093 = vunpack.c.l.b16 %v485
    %v1094 = vunpack.c.h.b16 %v485
    %v1095 = vunpack.c.l.b16 %v486
    %v1096 = vunpack.c.h.b16 %v486
    %v1097 = vunpack.c.l.b16 %v487
    %v1098 = vunpack.c.h.b16 %v487
    %v1099 = vunpack.c.l.b16 %v488
    %v1100 = vunpack.c.h.b16 %v488
    %v1101 = vunpack.c.l.b16 %v489
    %v1102 = vunpack.c.h.b16 %v489
    %v1103 = vunpack.c.l.b16 %v490
    %v1104 = vunpack.c.h.b16 %v490
    %v1105 = vunpack.c.l.b16 %v491
    %v1106 = vunpack.c.h.b16 %v491
    %v1107 = vunpack.c.l.b16 %v492
    %v1108 = vunpack.c.h.b16 %v492
    %v1109 = vunpack.c.l.b16 %v493
    %v1110 = vunpack.c.h.b16 %v493
    %v1111 = vunpack.c.l.b16 %v494
    %v1112 = vunpack.c.h.b16 %v494
    %v1113 = vunpack.c.l.b16 %v495
    %v1114 = vunpack.c.h.b16 %v495
    %v1115 = vunpack.c.l.b16 %v496
    %v1116 = vunpack.c.h.b16 %v496
    %v1117 = vunpack.c.l.b16 %v497
    %v1118 = vunpack.c.h.b16 %v497
    %v1119 = vunpack.c.l.b16 %v498
    %v1120 = vunpack.c.h.b16 %v498
    %v1121 = vunpack.c.l.b16 %v499
    %v1122 = vunpack.c.h.b16 %v499
    %v1123 = vunpack.c.l.b16 %v500
    %v1124 = vunpack.c.h.b16 %v500
    %v1125 = vunpack.c.l.b16 %v501
    %v1126 = vunpack.c.h.b16 %v501
    %v1127 = vunpack.c.l.b16 %v502
    %v1128 = vunpack.c.h.b16 %v502
    %v1129 = vunpack.c.l.b16 %v503
    %v1130 = vunpack.c.h.b16 %v503
    %v1131 = vunpack.c.l.b16 %v504
    %v1132 = vunpack.c.h.b16 %v504
    %v1133 = vunpack.c.l.b16 %v505
    %v1134 = vunpack.c.h.b16 %v505
    %v1135 = vunpack.c.l.b16 %v506
    %v1136 = vunpack.c.h.b16 %v506
    %v1137 = vunpack.c.l.b16 %v507
    %v1138 = vunpack.c.h.b16 %v507
    %v1139 = vunpack.c.l.b16 %v508
    %v1140 = vunpack.c.h.b16 %v508
    %v1141 = vunpack.c.l.b16 %v509
    %v1142 = vunpack.c.h.b16 %v509
    %v1143 = vunpack.c.l.b16 %v510
    %v1144 = vunpack.c.h.b16 %v510
    %v1145 = vunpack.c.l.b16 %v511
    %v1146 = vunpack.c.h.b16 %v511
    %v1147 = vunpack.c.l.b16 %v512
    %v1148 = vunpack.c.h.b16 %v512
    %v1149 = vunpack.c.l.b16 %v513
    %v1150 = vunpack.c.h.b16 %v513
    %v1151 = vunpack.c.l.b16 %v514
    %v1152 = vunpack.c.h.b16 %v514
    %v1153 = vunpack.c.l.b16 %v515
    %v1154 = vunpack.c.h.b16 %v515
    %v1155 = vunpack.c.l.b16 %v516
    %v1156 = vunpack.c.h.b16 %v516
    %v1157 = vunpack.c.l.b16 %v517
    %v1158 = vunpack.c.h.b16 %v517
    %v1159 = vunpack.c.l.b16 %v518
    %v1160 = vunpack.c.h.b16 %v518
    %v1161 = vunpack.c.l.b16 %v519
    %v1162 = vunpack.c.h.b16 %v519
    %v1163 = vunpack.c.l.b16 %v520
    %v1164 = vunpack.c.h.b16 %v520
    %v1165 = vunpack.c.l.b16 %v521
    %v1166 = vunpack.c.h.b16 %v521
    %v1167 = vunpack.c.l.b16 %v522
    %v1168 = vunpack.c.h.b16 %v522
    %v1169 = vunpack.c.l.b16 %v523
    %v1170 = vunpack.c.h.b16 %v523
    %v1171 = vunpack.c.l.b16 %v524
    %v1172 = vunpack.c.h.b16 %v524
    %v1173 = vunpack.c.l.b16 %v525
    %v1174 = vunpack.c.h.b16 %v525
    %v1175 = vunpack.c.l.b16 %v526
    %v1176 = vunpack.c.h.b16 %v526
    %v1177 = vunpack.c.l.b16 %v527
    %v1178 = vunpack.c.h.b16 %v527
    %v1179 = vunpack.c.l.b16 %v528
    %v1180 = vunpack.c.h.b16 %v528
    %v1181 = vunpack.c.l.b16 %v529
    %v1182 = vunpack.c.h.b16 %v529
    %v1183 = vunpack.c.l.b16 %v530
    %v1184 = vunpack.c.h.b16 %v530
    %v1185 = vunpack.c.l.b16 %v531
    %v1186 = vunpack.c.h.b16 %v531
    %v1187 = vunpack.c.l.b16 %v532
    %v1188 = vunpack.c.h.b16 %v532
    %v1189 = vunpack.c.l.b16 %v533
    %v1190 = vunpack.c.h.b16 %v533
    %v1191 = vunpack.c.l.b16 %v534
    %v1192 = vunpack.c.h.b16 %v534
    %v1193 = vunpack.c.l.b16 %v535
    %v1194 = vunpack.c.h.b16 %v535
    %v1195 = vunpack.c.l.b16 %v536
    %v1196 = vunpack.c.h.b16 %v536
    %v1197 = vunpack.c.l.b16 %v537
    %v1198 = vunpack.c.h.b16 %v537
    %v1199 = vunpack.c.l.b16 %v538
    %v1200 = vunpack.c.h.b16 %v538
    %v1201 = vunpack.c.l.b16 %v539
    %v1202 = vunpack.c.h.b16 %v539
    %v1203 = vunpack.c.l.b16 %v540
    %v1204 = vunpack.c.h.b16 %v540
    %v1205 = vunpack.c.l.b16 %v541
    %v1206 = vunpack.c.h.b16 %v541
    %v1207 = vunpack.c.l.b16 %v542
    %v1208 = vunpack.c.h.b16 %v542
    %v1209 = vunpack.c.l.b16 %v543
    %v1210 = vunpack.c.h.b16 %v543
    %v1211 = vunpack.c.l.b16 %v544
    %v1212 = vunpack.c.h.b16 %v544
    %v1213 = vunpack.c.l.b16 %v545
    %v1214 = vunpack.c.h.b16 %v545
    %v1215 = vunpack.c.l.b16 %v546
    %v1216 = vunpack.c.h.b16 %v546
    %v1217 = vunpack.c.l.b16 %v547
    %v1218 = vunpack.c.h.b16 %v547
    %v1219 = vunpack.c.l.b16 %v548
    %v1220 = vunpack.c.h.b16 %v548
    %v1221 = vunpack.c.l.b16 %v549
    %v1222 = vunpack.c.h.b16 %v549
    %v1223 = vunpack.c.l.b16 %v550
    %v1224 = vunpack.c.h.b16 %v550
    %v1225 = vunpack.c.l.b16 %v551
    %v1226 = vunpack.c.h.b16 %v551
    %v1227 = vunpack.c.l.b16 %v552
    %v1228 = vunpack.c.h.b16 %v552
    %v1229 = vunpack.c.l.b16 %v553
    %v1230 = vunpack.c.h.b16 %v553
    %v1231 = vunpack.c.l.b16 %v554
    %v1232 = vunpack.c.h.b16 %v554
    %v1233 = vunpack.c.l.b16 %v555
    %v1234 = vunpack.c.h.b16 %v555
    %v1235 = vunpack.c.l.b16 %v556
    %v1236 = vunpack.c.h.b16 %v556
    %v1237 = vunpack.c.l.b16 %v557
    %v1238 = vunpack.c.h.b16 %v557
    %v1239 = vunpack.c.l.b16 %v558
    %v1240 = vunpack.c.h.b16 %v558
    %v1241 = vunpack.c.l.b16 %v559
    %v1242 = vunpack.c.h.b16 %v559
    %v1243 = vunpack.c.l.b16 %v560
    %v1244 = vunpack.c.h.b16 %v560
    %v1245 = vunpack.c.l.b16 %v561
    %v1246 = vunpack.c.h.b16 %v561
    %v1247 = vunpack.c.l.b16 %v562
    %v1248 = vunpack.c.h.b16 %v562
    %v1249 = vunpack.c.l.b16 %v563
    %v1250 = vunpack.c.h.b16 %v563
    %v1251 = vunpack.c.l.b16 %v564
    %v1252 = vunpack.c.h.b16 %v564
    %v1253 = vunpack.c.l.b16 %v565
    %v1254 = vunpack.c.h.b16 %v565
    %v1255 = vunpack.c.l.b16 %v566
    %v1256 = vunpack.c.h.b16 %v566
    %v1257 = vunpack.c.l.b16 %v567
    %v1258 = vunpack.c.h.b16 %v567
    %v1259 = vunpack.c.l.b16 %v568
    %v1260 = vunpack.c.h.b16 %v568
    %v1261 = vunpack.c.l.b16 %v569
    %v1262 = vunpack.c.h.b16 %v569
    %v1263 = vunpack.c.l.b16 %v570
    %v1264 = vunpack.c.h.b16 %v570
    %v1265 = vunpack.c.l.b16 %v571
    %v1266 = vunpack.c.h.b16 %v571
    %v1267 = vunpack.c.l.b16 %v572
    %v1268 = vunpack.c.h.b16 %v572
    %v1269 = vunpack.c.l.b16 %v573
    %v1270 = vunpack.c.h.b16 %v573
    %v1271 = vunpack.c.l.b16 %v574
    %v1272 = vunpack.c.h.b16 %v574
    %v1273 = vunpack.c.l.b16 %v575
    %v1274 = vunpack.c.h.b16 %v575
    %v1275 = vunpack.c.l.b16 %v576
    %v1276 = vunpack.c.h.b16 %v576
    %v1277 = vunpack.c.l.b16 %v577
    %v1278 = vunpack.c.h.b16 %v577
    %v1279 = vunpack.c.l.b16 %v578
    %v1280 = vunpack.c.h.b16 %v578
    %v1281 = vunpack.c.l.b16 %v579
    %v1282 = vunpack.c.h.b16 %v579
    %v1283 = vunpack.c.l.b16 %v580
    %v1284 = vunpack.c.h.b16 %v580
    %v1285 = vunpack.c.l.b16 %v581
    %v1286 = vunpack.c.h.b16 %v581
    %v1287 = vunpack.c.l.b16 %v582
    %v1288 = vunpack.c.h.b16 %v582
    %v1289 = vunpack.c.l.b16 %v583
    %v1290 = vunpack.c.h.b16 %v583
    %v1291 = vunpack.c.l.b16 %v584
    %v1292 = vunpack.c.h.b16 %v584
    %v1293 = vunpack.c.l.b16 %v585
    %v1294 = vunpack.c.h.b16 %v585
    %v1295 = vunpack.c.l.b16 %v586
    %v1296 = vunpack.c.h.b16 %v586
    %v1297 = vunpack.c.l.b16 %v587
    %v1298 = vunpack.c.h.b16 %v587
    %v1299 = vunpack.c.l.b16 %v588
    %v1300 = vunpack.c.h.b16 %v588
    %v1301 = vunpack.c.l.b16 %v589
    %v1302 = vunpack.c.h.b16 %v589
    %v1303 = vunpack.c.l.b16 %v590
    %v1304 = vunpack.c.h.b16 %v590
    %v1305 = vunpack.c.l.b16 %v591
    %v1306 = vunpack.c.h.b16 %v591
    %v1307 = vunpack.c.l.b16 %v592
    %v1308 = vunpack.c.h.b16 %v592
    %v1309 = vunpack.c.l.b16 %v593
    %v1310 = vunpack.c.h.b16 %v593
    %v1311 = vunpack.c.l.b16 %v594
    %v1312 = vunpack.c.h.b16 %v594
    %v1313 = vunpack.c.l.b16 %v595
    %v1314 = vunpack.c.h.b16 %v595
    %v1315 = vunpack.c.l.b16 %v596
    %v1316 = vunpack.c.h.b16 %v596
    %v1317 = vunpack.c.l.b16 %v597
    %v1318 = vunpack.c.h.b16 %v597
    %v1319 = vunpack.c.l.b16 %v598
    %v1320 = vunpack.c.h.b16 %v598
    %v1321 = vunpack.c.l.b16 %v599
    %v1322 = vunpack.c.h.b16 %v599
    %v1323 = vunpack.c.l.b16 %v600
    %v1324 = vunpack.c.h.b16 %v600
    %v1325 = vunpack.c.l.b16 %v601
    %v1326 = vunpack.c.h.b16 %v601
    %v1327 = vunpack.c.l.b16 %v602
    %v1328 = vunpack.c.h.b16 %v602
    %v1329 = vunpack.c.l.b16 %v603
    %v1330 = vunpack.c.h.b16 %v603
    %v1331 = vunpack.c.l.b16 %v604
    %v1332 = vunpack.c.h.b16 %v604
    %v1333 = vunpack.c.l.b16 %v605
    %v1334 = vunpack.c.h.b16 %v605
    %v1335 = vunpack.c.l.b16 %v606
    %v1336 = vunpack.c.h.b16 %v606
    %v1337 = vunpack.c.l.b16 %v607
    %v1338 = vunpack.c.h.b16 %v607
    %v1339 = vunpack.c.l.b16 %v608
    %v1340 = vunpack.c.h.b16 %v608
    %v1341 = vunpack.c.l.b16 %v609
    %v1342 = vunpack.c.h.b16 %v609
    %v1343 = vunpack.c.l.b16 %v610
    %v1344 = vunpack.c.h.b16 %v610
    %v1345 = vunpack.c.l.b16 %v611
    %v1346 = vunpack.c.h.b16 %v611
    %v1347 = vunpack.c.l.b16 %v612
    %v1348 = vunpack.c.h.b16 %v612
    %v1349 = vunpack.c.l.b16 %v613
    %v1350 = vunpack.c.h.b16 %v613
    %v1351 = vunpack.c.l.b16 %v614
    %v1352 = vunpack.c.h.b16 %v614
    %v1353 = vunpack.c.l.b16 %v615
    %v1354 = vunpack.c.h.b16 %v615
    %v1355 = vunpack.c.l.b16 %v616
    %v1356 = vunpack.c.h.b16 %v616
    %v1357 = vunpack.c.l.b16 %v617
    %v1358 = vunpack.c.h.b16 %v617
    %v1359 = vunpack.c.l.b16 %v618
    %v1360 = vunpack.c.h.b16 %v618
    %v1361 = vunpack.c.l.b16 %v619
    %v1362 = vunpack.c.h.b16 %v619
    %v1363 = vunpack.c.l.b16 %v620
    %v1364 = vunpack.c.h.b16 %v620
    %v1365 = vunpack.c.l.b16 %v621
    %v1366 = vunpack.c.h.b16 %v621
    %v1367 = vunpack.c.l.b16 %v622
    %v1368 = vunpack.c.h.b16 %v622
    %v1369 = vunpack.c.l.b16 %v623
    %v1370 = vunpack.c.h.b16 %v623
    %v1371 = vunpack.c.l.b16 %v624
    %v1372 = vunpack.c.h.b16 %v624
    %v1373 = vunpack.c.l.b16 %v625
    %v1374 = vunpack.c.h.b16 %v625
    %v1375 = vunpack.c.l.b16 %v626
    %v1376 = vunpack.c.h.b16 %v626
    %v1377 = vunpack.c.l.b16 %v627
    %v1378 = vunpack.c.h.b16 %v627
    %v1379 = vunpack.c.l.b16 %v628
    %v1380 = vunpack.c.h.b16 %v628
    %v1381 = vunpack.c.l.b16 %v629
    %v1382 = vunpack.c.h.b16 %v629
    %v1383 = vunpack.c.l.b16 %v630
    %v1384 = vunpack.c.h.b16 %v630
    %v1385 = vunpack.c.l.b16 %v631
    %v1386 = vunpack.c.h.b16 %v631
    %v1387 = vunpack.c.l.b16 %v632
    %v1388 = vunpack.c.h.b16 %v632
    %v1389 = vunpack.c.l.b16 %v633
    %v1390 = vunpack.c.h.b16 %v633
    %v1391 = vunpack.c.l.b16 %v634
    %v1392 = vunpack.c.h.b16 %v634
    %v1393 = vunpack.c.l.b16 %v635
    %v1394 = vunpack.c.h.b16 %v635
    %v1395 = vunpack.c.l.b16 %v636
    %v1396 = vunpack.c.h.b16 %v636
    %v1397 = vunpack.c.l.b16 %v637
    %v1398 = vunpack.c.h.b16 %v637
    %v1399 = vunpack.c.l.b16 %v638
    %v1400 = vunpack.c.h.b16 %v638
    %v1401 = vunpack.c.l.b16 %v639
    %v1402 = vunpack.c.h.b16 %v639
    %v1403 = vunpack.c.l.b16 %v640
    %v1404 = vunpack.c.h.b16 %v640
    %v1405 = vunpack.c.l.b16 %v641
    %v1406 = vunpack.c.h.b16 %v641
    %v1407 = vunpack.c.l.b16 %v642
    %v1408 = vunpack.c.h.b16 %v642
    %v1409 = vunpack.c.l.b16 %v643
    %v1410 = vunpack.c.h.b16 %v643
    %v1411 = vunpack.c.l.b16 %v644
    %v1412 = vunpack.c.h.b16 %v644
    %v1413 = vunpack.c.l.b16 %v645
    %v1414 = vunpack.c.h.b16 %v645
    %v1415 = vunpack.c.l.b16 %v646
    %v1416 = vunpack.c.h.b16 %v646
    %v1417 = vunpack.c.l.b16 %v647
    %v1418 = vunpack.c.h.b16 %v647
    %v1419 = vunpack.c.l.b16 %v648
    %v1420 = vunpack.c.h.b16 %v648
    %v1421 = vunpack.c.l.b16 %v649
    %v1422 = vunpack.c.h.b16 %v649
    %v1423 = vunpack.c.l.b16 %v650
    %v1424 = vunpack.c.h.b16 %v650
    %v1425 = vunpack.c.l.b16 %v651
    %v1426 = vunpack.c.h.b16 %v651
    %v1427 = vunpack.c.l.b16 %v652
    %v1428 = vunpack.c.h.b16 %v652
    %v1429 = vunpack.c.l.b16 %v653
    %v1430 = vunpack.c.h.b16 %v653
    %v1431 = vunpack.c.l.b16 %v654
    %v1432 = vunpack.c.h.b16 %v654
    %v1433 = vunpack.c.l.b16 %v655
    %v1434 = vunpack.c.h.b16 %v655
    %v1435 = vunpack.c.l.b16 %v656
    %v1436 = vunpack.c.h.b16 %v656
    %v1437 = vunpack.c.l.b16 %v657
    %v1438 = vunpack.c.h.b16 %v657
    %v1439 = vunpack.c.l.b16 %v658
    %v1440 = vunpack.c.h.b16 %v658
    %v1441 = vunpack.c.l.b16 %v659
    %v1442 = vunpack.c.h.b16 %v659
    %v1443 = vunpack.c.l.b16 %v660
    %v1444 = vunpack.c.h.b16 %v660
    %v1445 = vunpack.c.l.b16 %v661
    %v1446 = vunpack.c.h.b16 %v661
    %v1447 = vunpack.c.l.b16 %v662
    %v1448 = vunpack.c.h.b16 %v662
    %v1449 = vunpack.c.l.b16 %v663
    %v1450 = vunpack.c.h.b16 %v663
    %v1451 = vunpack.c.l.b16 %v664
    %v1452 = vunpack.c.h.b16 %v664
    %v1453 = vunpack.c.l.b16 %v665
    %v1454 = vunpack.c.h.b16 %v665
    %v1455 = vunpack.c.l.b16 %v666
    %v1456 = vunpack.c.h.b16 %v666
    %v1457 = vunpack.c.l.b16 %v667
    %v1458 = vunpack.c.h.b16 %v667
    %v1459 = vunpack.c.l.b16 %v668
    %v1460 = vunpack.c.h.b16 %v668
    %v1461 = vunpack.c.l.b16 %v669
    %v1462 = vunpack.c.h.b16 %v669
    %v1463 = vunpack.c.l.b16 %v670
    %v1464 = vunpack.c.h.b16 %v670
    %v1465 = vunpack.c.l.b16 %v671
    %v1466 = vunpack.c.h.b16 %v671
    %v1467 = vunpack.c.l.b16 %v672
    %v1468 = vunpack.c.h.b16 %v672
    %v1469 = vunpack.c.l.b16 %v673
    %v1470 = vunpack.c.h.b16 %v673
    %v1471 = vunpack.c.l.b16 %v674
    %v1472 = vunpack.c.h.b16 %v674
    %v1473 = vunpack.c.l.b16 %v675
    %v1474 = vunpack.c.h.b16 %v675
    %v1475 = vunpack.c.l.b16 %v676
    %v1476 = vunpack.c.h.b16 %v676
    %v1477 = vunpack.c.l.b16 %v677
    %v1478 = vunpack.c.h.b16 %v677
    %v1479 = vunpack.c.l.b16 %v678
    %v1480 = vunpack.c.h.b16 %v678
    %v1481 = vunpack.c.l.b16 %v679
    %v1482 = vunpack.c.h.b16 %v679
    %v1483 = vunpack.c.l.b16 %v680
    %v1484 = vunpack.c.h.b16 %v680
    %v1485 = vunpack.c.l.b16 %v681
    %v1486 = vunpack.c.h.b16 %v681
    %v1487 = vunpack.c.l.b16 %v682
    %v1488 = vunpack.c.h.b16 %v682
    %v1489 = vunpack.c.l.b16 %v683
    %v1490 = vunpack.c.h.b16 %v683
    %v1491 = vunpack.c.l.b16 %v684
    %v1492 = vunpack.c.h.b16 %v684
    %v1493 = vunpack.c.l.b16 %v685
    %v1494 = vunpack.c.h.b16 %v685
    %v1495 = vunpack.c.l.b16 %v686
    %v1496 = vunpack.c.h.b16 %v686
    %v1497 = vunpack.c.l.b16 %v687
    %v1498 = vunpack.c.h.b16 %v687
    %v1499 = vunpack.c.l.b16 %v688
    %v1500 = vunpack.c.h.b16 %v688
    %v1501 = vunpack.c.l.b16 %v689
    %v1502 = vunpack.c.h.b16 %v689
    %v1503 = vunpack.c.l.b16 %v690
    %v1504 = vunpack.c.h.b16 %v690
    %v1505 = vunpack.c.l.b16 %v691
    %v1506 = vunpack.c.h.b16 %v691
    %v1507 = vunpack.c.l.b16 %v692
    %v1508 = vunpack.c.h.b16 %v692
    %v1509 = vunpack.c.l.b16 %v693
    %v1510 = vunpack.c.h.b16 %v693
    %v1511 = vunpack.c.l.b16 %v694
    %v1512 = vunpack.c.h.b16 %v694
    %v1513 = vunpack.c.l.b16 %v695
    %v1514 = vunpack.c.h.b16 %v695
    %v1515 = vunpack.c.l.b16 %v696
    %v1516 = vunpack.c.h.b16 %v696
    %v1517 = vunpack.c.l.b16 %v697
    %v1518 = vunpack.c.h.b16 %v697
    %v1519 = vunpack.c.l.b16 %v698
    %v1520 = vunpack.c.h.b16 %v698
    %v1521 = vunpack.c.l.b16 %v699
    %v1522 = vunpack.c.h.b16 %v699
    %v1523 = vunpack.c.l.b16 %v700
    %v1524 = vunpack.c.h.b16 %v700
    %v1525 = vunpack.c.l.b16 %v701
    %v1526 = vunpack.c.h.b16 %v701
    %v1527 = vunpack.c.l.b16 %v702
    %v1528 = vunpack.c.h.b16 %v702
    %v1529 = vunpack.c.l.b16 %v703
    %v1530 = vunpack.c.h.b16 %v703
    %v1531 = vunpack.c.l.b16 %v704
    %v1532 = vunpack.c.h.b16 %v704
    %v1533 = vunpack.c.l.b16 %v705
    %v1534 = vunpack.c.h.b16 %v705
    %v1535 = vunpack.c.l.b16 %v706
    %v1536 = vunpack.c.h.b16 %v706
    %v1537 = vunpack.c.l.b16 %v707
    %v1538 = vunpack.c.h.b16 %v707
    %v1539 = vunpack.c.l.b16 %v708
    %v1540 = vunpack.c.h.b16 %v708
    %v1541 = vunpack.c.l.b16 %v709
    %v1542 = vunpack.c.h.b16 %v709
    %v1543 = vunpack.c.l.b16 %v710
    %v1544 = vunpack.c.h.b16 %v710
    %v1545 = vunpack.c.l.b16 %v711
    %v1546 = vunpack.c.h.b16 %v711
    %v1547 = vunpack.c.l.b16 %v712
    %v1548 = vunpack.c.h.b16 %v712
    %v1549 = vunpack.c.l.b16 %v713
    %v1550 = vunpack.c.h.b16 %v713
    %v1551 = vunpack.c.l.b16 %v714
    %v1552 = vunpack.c.h.b16 %v714
    %v1553 = vunpack.c.l.b16 %v715
    %v1554 = vunpack.c.h.b16 %v715
    %v1555 = vunpack.c.l.b16 %v716
    %v1556 = vunpack.c.h.b16 %v716
    %v1557 = vunpack.c.l.b16 %v717
    %v1558 = vunpack.c.h.b16 %v717
    %v1559 = vunpack.c.l.b16 %v718
    %v1560 = vunpack.c.h.b16 %v718
    %v1561 = vunpack.c.l.b16 %v719
    %v1562 = vunpack.c.h.b16 %v719
    %v1563 = vunpack.c.l.b16 %v720
    %v1564 = vunpack.c.h.b16 %v720
    %v1565 = vunpack.c.l.b16 %v721
    %v1566 = vunpack.c.h.b16 %v721
    %v1567 = vunpack.c.l.b16 %v722
    %v1568 = vunpack.c.h.b16 %v722
    %v1569 = vunpack.c.l.b16 %v723
    %v1570 = vunpack.c.h.b16 %v723
    %v1571 = vunpack.c.l.b16 %v724
    %v1572 = vunpack.c.h.b16 %v724
    %v1573 = vunpack.c.l.b16 %v725
    %v1574 = vunpack.c.h.b16 %v725
    %v1575 = vunpack.c.l.b16 %v726
    %v1576 = vunpack.c.h.b16 %v726
    %v1577 = vunpack.c.l.b16 %v727
    %v1578 = vunpack.c.h.b16 %v727
    %v1579 = vunpack.c.l.b16 %v728
    %v1580 = vunpack.c.h.b16 %v728
    %v1581 = vunpack.c.l.b16 %v729
    %v1582 = vunpack.c.h.b16 %v729
    %v1583 = vunpack.c.l.b16 %v730
    %v1584 = vunpack.c.h.b16 %v730
    %v1585 = vunpack.c.l.b16 %v731
    %v1586 = vunpack.c.h.b16 %v731
    %v1587 = vunpack.c.l.b16 %v732
    %v1588 = vunpack.c.h.b16 %v732
    %v1589 = vunpack.c.l.b16 %v733
    %v1590 = vunpack.c.h.b16 %v733
    %v1591 = vunpack.c.l.b16 %v734
    %v1592 = vunpack.c.h.b16 %v734
    %v1593 = vunpack.c.l.b16 %v735
    %v1594 = vunpack.c.h.b16 %v735
    %v1595 = vunpack.c.l.b16 %v736
    %v1596 = vunpack.c.h.b16 %v736
    %v1597 = vunpack.c.l.b16 %v737
    %v1598 = vunpack.c.h.b16 %v737
    %v1599 = vunpack.c.l.b16 %v738
    %v1600 = vunpack.c.h.b16 %v738
    %v1601 = vunpack.c.l.b16 %v739
    %v1602 = vunpack.c.h.b16 %v739
    %v1603 = vunpack.c.l.b16 %v740
    %v1604 = vunpack.c.h.b16 %v740
    %v1605 = vunpack.c.l.b16 %v741
    %v1606 = vunpack.c.h.b16 %v741
    %v1607 = vunpack.c.l.b16 %v742
    %v1608 = vunpack.c.h.b16 %v742
    %v1609 = vunpack.c.l.b16 %v743
    %v1610 = vunpack.c.h.b16 %v743
    %v1611 = vunpack.c.l.b16 %v744
    %v1612 = vunpack.c.h.b16 %v744
    %v1613 = vunpack.c.l.b16 %v745
    %v1614 = vunpack.c.h.b16 %v745
    %v1615 = vunpack.c.l.b16 %v746
    %v1616 = vunpack.c.h.b16 %v746
    %v1617 = vunpack.c.l.b16 %v747
    %v1618 = vunpack.c.h.b16 %v747
    %v1619 = vunpack.c.l.b16 %v748
    %v1620 = vunpack.c.h.b16 %v748
    %v1621 = vunpack.c.l.b16 %v749
    %v1622 = vunpack.c.h.b16 %v749
    %v1623 = vunpack.c.l.b16 %v750
    %v1624 = vunpack.c.h.b16 %v750
    %v1625 = vunpack.c.l.b16 %v751
    %v1626 = vunpack.c.h.b16 %v751
    %v1627 = vunpack.c.l.b16 %v752
    %v1628 = vunpack.c.h.b16 %v752
    %v1629 = vunpack.c.l.b16 %v753
    %v1630 = vunpack.c.h.b16 %v753
    %v1631 = vunpack.c.l.b16 %v754
    %v1632 = vunpack.c.h.b16 %v754
    %v1633 = vunpack.c.l.b16 %v755
    %v1634 = vunpack.c.h.b16 %v755
    %v1635 = vunpack.c.l.b16 %v756
    %v1636 = vunpack.c.h.b16 %v756
    %v1637 = vunpack.c.l.b16 %v757
    %v1638 = vunpack.c.h.b16 %v757
    %v1639 = vunpack.c.l.b16 %v758
    %v1640 = vunpack.c.h.b16 %v758
    %v1641 = vunpack.c.l.b16 %v759
    %v1642 = vunpack.c.h.b16 %v759
    %v1643 = vunpack.c.l.b16 %v760
    %v1644 = vunpack.c.h.b16 %v760
    %v1645 = vunpack.c.l.b16 %v761
    %v1646 = vunpack.c.h.b16 %v761
    %v1647 = vunpack.c.l.b16 %v762
    %v1648 = vunpack.c.h.b16 %v762
    %v1649 = vunpack.c.l.b16 %v763
    %v1650 = vunpack.c.h.b16 %v763
    %v1651 = vunpack.c.l.b16 %v764
    %v1652 = vunpack.c.h.b16 %v764
    %v1653 = vunpack.c.l.b16 %v765
    %v1654 = vunpack.c.h.b16 %v765
    %v1655 = vunpack.c.l.b16 %v766
    %v1656 = vunpack.c.h.b16 %v766
    %v1657 = vunpack.c.l.b16 %v767
    %v1658 = vunpack.c.h.b16 %v767
    %v1659 = vunpack.c.l.b16 %v768
    %v1660 = vunpack.c.h.b16 %v768
    %v1661 = vunpack.c.l.b16 %v769
    %v1662 = vunpack.c.h.b16 %v769
    %v1663 = vunpack.c.l.b16 %v770
    %v1664 = vunpack.c.h.b16 %v770
    %v1665 = vunpack.c.l.b16 %v771
    %v1666 = vunpack.c.h.b16 %v771
    %v1667 = vunpack.c.l.b16 %v772
    %v1668 = vunpack.c.h.b16 %v772
    %v1669 = vpack.c.b16 %v1099, %v1093
    %v1670 = vpack.c.b16 %v1100, %v1094
    %v1671 = vpack.c.b16 %v1101, %v1095
    %v1672 = vpack.c.b16 %v1102, %v1096
    %v1673 = vpack.c.b16 %v1103, %v1097
    %v1674 = vpack.c.b16 %v1104, %v1098
    %v1675 = vpack.c.b16 %v1111, %v1105
    %v1676 = vpack.c.b16 %v1112, %v1106
    %v1677 = vpack.c.b16 %v1113, %v1107
    %v1678 = vpack.c.b16 %v1114, %v1108
    %v1679 = vpack.c.b16 %v1115, %v1109
    %v1680 = vpack.c.b16 %v1116, %v1110
    %v1681 = vpack.c.b16 %v1123, %v1117
    %v1682 = vpack.c.b16 %v1124, %v1118
    %v1683 = vpack.c.b16 %v1125, %v1119
    %v1684 = vpack.c.b16 %v1126, %v1120
    %v1685 = vpack.c.b16 %v1127, %v1121
    %v1686 = vpack.c.b16 %v1128, %v1122
    %v1687 = vpack.c.b16 %v1135, %v1129
    %v1688 = vpack.c.b16 %v1136, %v1130
    %v1689 = vpack.c.b16 %v1137, %v1131
    %v1690 = vpack.c.b16 %v1138, %v1132
    %v1691 = vpack.c.b16 %v1139, %v1133
    %v1692 = vpack.c.b16 %v1140, %v1134
    %v1693 = vpack.c.b16 %v1147, %v1141
    %v1694 = vpack.c.b16 %v1148, %v1142
    %v1695 = vpack.c.b16 %v1149, %v1143
    %v1696 = vpack.c.b16 %v1150, %v1144
    %v1697 = vpack.c.b16 %v1151, %v1145
    %v1698 = vpack.c.b16 %v1152, %v1146
    %v1699 = vpack.c.b16 %v1159, %v1153
    %v1700 = vpack.c.b16 %v1160, %v1154
    %v1701 = vpack.c.b16 %v1161, %v1155
    %v1702 = vpack.c.b16 %v1162, %v1156
    %v1703 = vpack.c.b16 %v1163, %v1157
    %v1704 = vpack.c.b16 %v1164, %v1158
    %v1705 = vpack.c.b16 %v1171, %v1165
    %v1706 = vpack.c.b16 %v1172, %v1166
    %v1707 = vpack.c.b16 %v1173, %v1167
    %v1708 = vpack.c.b16 %v1174, %v1168
    %v1709 = vpack.c.b16 %v1175, %v1169
    %v1710 = vpack.c.b16 %v1176, %v1170
    %v1711 = vpack.c.b16 %v1183, %v1177
    %v1712 = vpack.c.b16 %v1184, %v1178
    %v1713 = vpack.c.b16 %v1185, %v1179
    %v1714 = vpack.c.b16 %v1186, %v1180
    %v1715 = vpack.c.b16 %v1187, %v1181
    %v1716 = vpack.c.b16 %v1188, %v1182
    %v1717 = vpack.c.b16 %v1195, %v1189
    %v1718 = vpack.c.b16 %v1196, %v1190
    %v1719 = vpack.c.b16 %v1197, %v1191
    %v1720 = vpack.c.b16 %v1198, %v1192
    %v1721 = vpack.c.b16 %v1199, %v1193
    %v1722 = vpack.c.b16 %v1200, %v1194
    %v1723 = vpack.c.b16 %v1207, %v1201
    %v1724 = vpack.c.b16 %v1208, %v1202
    %v1725 = vpack.c.b16 %v1209, %v1203
    %v1726 = vpack.c.b16 %v1210, %v1204
    %v1727 = vpack.c.b16 %v1211, %v1205
    %v1728 = vpack.c.b16 %v1212, %v1206
    %v1729 = vpack.c.b16 %v1219, %v1213
    %v1730 = vpack.c.b16 %v1220, %v1214
    %v1731 = vpack.c.b16 %v1221, %v1215
    %v1732 = vpack.c.b16 %v1222, %v1216
    %v1733 = vpack.c.b16 %v1223, %v1217
    %v1734 = vpack.c.b16 %v1224, %v1218
    %v1735 = vpack.c.b16 %v1231, %v1225
    %v1736 = vpack.c.b16 %v1232, %v1226
    %v1737 = vpack.c.b16 %v1233, %v1227
    %v1738 = vpack.c.b16 %v1234, %v1228
    %v1739 = vpack.c.b16 %v1235, %v1229
    %v1740 = vpack.c.b16 %v1236, %v1230
    %v1741 = vpack.c.b16 %v1243, %v1237
    %v1742 = vpack.c.b16 %v1244, %v1238
    %v1743 = vpack.c.b16 %v1245, %v1239
    %v1744 = vpack.c.b16 %v1246, %v1240
    %v1745 = vpack.c.b16 %v1247, %v1241
    %v1746 = vpack.c.b16 %v1248, %v1242
    %v1747 = vpack.c.b16 %v1255, %v1249
    %v1748 = vpack.c.b16 %v1256, %v1250
    %v1749 = vpack.c.b16 %v1257, %v1251
    %v1750 = vpack.c.b16 %v1258, %v1252
    %v1751 = vpack.c.b16 %v1259, %v1253
    %v1752 = vpack.c.b16 %v1260, %v1254
    %v1753 = vpack.c.b16 %v1267, %v1261
    %v1754 = vpack.c.b16 %v1268, %v1262
    %v1755 = vpack.c.b16 %v1269, %v1263
    %v1756 = vpack.c.b16 %v1270, %v1264
    %v1757 = vpack.c.b16 %v1271, %v1265
    %v1758 = vpack.c.b16 %v1272, %v1266
    %v1759 = vpack.c.b16 %v1279, %v1273
    %v1760 = vpack.c.b16 %v1280, %v1274
    %v1761 = vpack.c.b16 %v1281, %v1275
    %v1762 = vpack.c.b16 %v1282, %v1276
    %v1763 = vpack.c.b16 %v1283, %v1277
    %v1764 = vpack.c.b16 %v1284, %v1278
    %v1765 = vpack.c.b16 %v1291, %v1285
    %v1766 = vpack.c.b16 %v1292, %v1286
    %v1767 = vpack.c.b16 %v1293, %v1287
    %v1768 = vpack.c.b16 %v1294, %v1288
    %v1769 = vpack.c.b16 %v1295, %v1289
    %v1770 = vpack.c.b16 %v1296, %v1290
    %v1771 = vpack.c.b16 %v1303, %v1297
    %v1772 = vpack.c.b16 %v1304, %v1298
    %v1773 = vpack.c.b16 %v1305, %v1299
    %v1774 = vpack.c.b16 %v1306, %v1300
    %v1775 = vpack.c.b16 %v1307, %v1301
    %v1776 = vpack.c.b16 %v1308, %v1302
    %v1777 = vpack.c.b16 %v1315, %v1309
    %v1778 = vpack.c.b16 %v1316, %v1310
    %v1779 = vpack.c.b16 %v1317, %v1311
    %v1780 = vpack.c.b16 %v1318, %v1312
    %v1781 = vpack.c.b16 %v1319, %v1313
    %v1782 = vpack.c.b16 %v1320, %v1314
    %v1783 = vpack.c.b16 %v1327, %v1321
    %v1784 = vpack.c.b16 %v1328, %v1322
    %v1785 = vpack.c.b16 %v1329, %v1323
    %v1786 = vpack.c.b16 %v1330, %v1324
    %v1787 = vpack.c.b16 %v1331, %v1325
    %v1788 = vpack.c.b16 %v1332, %v1326
    %v1789 = vpack.c.b16 %v1339, %v1333
    %v1790 = vpack.c.b16 %v1340, %v1334
    %v1791 = vpack.c.b16 %v1341, %v1335
    %v1792 = vpack.c.b16 %v1342, %v1336
    %v1793 = vpack.c.b16 %v1343, %v1337
    %v1794 = vpack.c.b16 %v1344, %v1338
    %v1795 = vpack.c.b16 %v1351, %v1345
    %v1796 = vpack.c.b16 %v1352, %v1346
    %v1797 = vpack.c.b16 %v1353, %v1347
    %v1798 = vpack.c.b16 %v1354, %v1348
    %v1799 = vpack.c.b16 %v1355, %v1349
    %v1800 = vpack.c.b16 %v1356, %v1350
    %v1801 = vpack.c.b16 %v1363, %v1357
    %v1802 = vpack.c.b16 %v1364, %v1358
    %v1803 = vpack.c.b16 %v1365, %v1359
    %v1804 = vpack.c.b16 %v1366, %v1360
    %v1805 = vpack.c.b16 %v1367, %v1361
    %v1806 = vpack.c.b16 %v1368, %v1362
    %v1807 = vpack.c.b16 %v1375, %v1369
    %v1808 = vpack.c.b16 %v1376, %v1370
    %v1809 = vpack.c.b16 %v1377, %v1371
    %v1810 = vpack.c.b16 %v1378, %v1372
    %v1811 = vpack.c.b16 %v1379, %v1373
    %v1812 = vpack.c.b16 %v1380, %v1374
    %v1813 = vpack.c.b16 %v1387, %v1381
    %v1814 = vpack.c.b16 %v1388, %v1382
    %v1815 = vpack.c.b16 %v1389, %v1383
    %v1816 = vpack.c.b16 %v1390, %v1384
    %v1817 = vpack.c.b16 %v1391, %v1385
    %v1818 = vpack.c.b16 %v1392, %v1386
    %v1819 = vpack.c.b16 %v1399, %v1393
    %v1820 = vpack.c.b16 %v1400, %v1394
    %v1821 = vpack.c.b16 %v1401, %v1395
    %v1822 = vpack.c.b16 %v1402, %v1396
    %v1823 = vpack.c.b16 %v1403, %v1397
    %v1824 = vpack.c.b16 %v1404, %v1398
    %v1825 = vpack.c.b16 %v1411, %v1405
    %v1826 = vpack.c.b16 %v1412, %v1406
    %v1827 = vpack.c.b16 %v1413, %v1407
    %v1828 = vpack.c.b16 %v1414, %v1408
    %v1829 = vpack.c.b16 %v1415, %v1409
    %v1830 = vpack.c.b16 %v1416, %v1410
    %v1831 = vpack.c.b16 %v1423, %v1417
    %v1832 = vpack.c.b16 %v1424, %v1418
    %v1833 = vpack.c.b16 %v1425, %v1419
    %v1834 = vpack.c.b16 %v1426, %v1420
    %v1835 = vpack.c.b16 %v1427, %v1421
    %v1836 = vpack.c.b16 %v1428, %v1422
    %v1837 = vpack.c.b16 %v1435, %v1429
    %v1838 = vpack.c.b16 %v1436, %v1430
    %v1839 = vpack.c.b16 %v1437, %v1431
    %v1840 = vpack.c.b16 %v1438, %v1432
    %v1841 = vpack.c.b16 %v1439, %v1433
    %v1842 = vpack.c.b16 %v1440, %v1434
    %v1843 = vpack.c.b16 %v1447, %v1441
    %v1844 = vpack.c.b16 %v1448, %v1442
    %v1845 = vpack.c.b16 %v1449, %v1443
    %v1846 = vpack.c.b16 %v1450, %v1444
    %v1847 = vpack.c.b16 %v1451, %v1445
    %v1848 = vpack.c.b16 %v1452, %v1446
    %v1849 = vpack.c.b16 %v1459, %v1453
    %v1850 = vpack.c.b16 %v1460, %v1454
    %v1851 = vpack.c.b16 %v1461, %v1455
    %v1852 = vpack.c.b16 %v1462, %v1456
    %v1853 = vpack.c.b16 %v1463, %v1457
    %v1854 = vpack.c.b16 %v1464, %v1458
    %v1855 = vpack.c.b16 %v1471, %v1465
    %v1856 = vpack.c.b16 %v1472, %v1466
    %v1857 = vpack.c.b16 %v1473, %v1467
    %v1858 = vpack.c.b16 %v1474, %v1468
    %v1859 = vpack.c.b16 %v1475, %v1469
    %v1860 = vpack.c.b16 %v1476, %v1470
    %v1861 = vpack.c.b16 %v1483, %v1477
    %v1862 = vpack.c.b16 %v1484, %v1478
    %v1863 = vpack.c.b16 %v1485, %v1479
    %v1864 = vpack.c.b16 %v1486, %v1480
    %v1865 = vpack.c.b16 %v1487, %v1481
    %v1866 = vpack.c.b16 %v1488, %v1482
    %v1867 = vpack.c.b16 %v1495, %v1489
    %v1868 = vpack.c.b16 %v1496, %v1490
    %v1869 = vpack.c.b16 %v1497, %v1491
    %v1870 = vpack.c.b16 %v1498, %v1492
    %v1871 = vpack.c.b16 %v1499, %v1493
    %v1872 = vpack.c.b16 %v1500, %v1494
    %v1873 = vpack.c.b16 %v1507, %v1501
    %v1874 = vpack.c.b16 %v1508, %v1502
    %v1875 = vpack.c.b16 %v1509, %v1503
    %v1876 = vpack.c.b16 %v1510, %v1504
    %v1877 = vpack.c.b16 %v1511, %v1505
    %v1878 = vpack.c.b16 %v1512, %v1506
    %v1879 = vpack.c.b16 %v1519, %v1513
    %v1880 = vpack.c.b16 %v1520, %v1514
    %v1881 = vpack.c.b16 %v1521, %v1515
    %v1882 = vpack.c.b16 %v1522, %v1516
    %v1883 = vpack.c.b16 %v1523, %v1517
    %v1884 = vpack.c.b16 %v1524, %v1518
    %v1885 = vpack.c.b16 %v1531, %v1525
    %v1886 = vpack.c.b16 %v1532, %v1526
    %v1887 = vpack.c.b16 %v1533, %v1527
    %v1888 = vpack.c.b16 %v1534, %v1528
    %v1889 = vpack.c.b16 %v1535, %v1529
    %v1890 = vpack.c.b16 %v1536, %v1530
    %v1891 = vpack.c.b16 %v1543, %v1537
    %v1892 = vpack.c.b16 %v1544, %v1538
    %v1893 = vpack.c.b16 %v1545, %v1539
    %v1894 = vpack.c.b16 %v1546, %v1540
    %v1895 = vpack.c.b16 %v1547, %v1541
    %v1896 = vpack.c.b16 %v1548, %v1542
    %v1897 = vpack.c.b16 %v1555, %v1549
    %v1898 = vpack.c.b16 %v1556, %v1550
    %v1899 = vpack.c.b16 %v1557, %v1551
    %v1900 = vpack.c.b16 %v1558, %v1552
    %v1901 = vpack.c.b16 %v1559, %v1553
    %v1902 = vpack.c.b16 %v1560, %v1554
    %v1903 = vpack.c.b16 %v1567, %v1561
    %v1904 = vpack.c.b16 %v1568, %v1562
    %v1905 = vpack.c.b16 %v1569, %v1563
    %v1906 = vpack.c.b16 %v1570, %v1564
    %v1907 = vpack.c.b16 %v1571, %v1565
    %v1908 = vpack.c.b16 %v1572, %v1566
    %v1909 = vpack.c.b16 %v1579, %v1573
    %v1910 = vpack.c.b16 %v1580, %v1574
    %v1911 = vpack.c.b16 %v1581, %v1575
    %v1912 = vpack.c.b16 %v1582, %v1576
    %v1913 = vpack.c.b16 %v1583, %v1577
    %v1914 = vpack.c.b16 %v1584, %v1578
    %v1915 = vpack.c.b16 %v1591, %v1585
    %v1916 = vpack.c.b16 %v1592, %v1586
    %v1917 = vpack.c.b16 %v1593, %v1587
    %v1918 = vpack.c.b16 %v1594, %v1588
    %v1919 = vpack.c.b16 %v1595, %v1589
    %v1920 = vpack.c.b16 %v1596, %v1590
    %v1921 = vpack.c.b16 %v1603, %v1597
    %v1922 = vpack.c.b16 %v1604, %v1598
    %v1923 = vpack.c.b16 %v1605, %v1599
    %v1924 = vpack.c.b16 %v1606, %v1600
    %v1925 = vpack.c.b16 %v1607, %v1601
    %v1926 = vpack.c.b16 %v1608, %v1602
    %v1927 = vpack.c.b16 %v1615, %v1609
    %v1928 = vpack.c.b16 %v1616, %v1610
    %v1929 = vpack.c.b16 %v1617, %v1611
    %v1930 = vpack.c.b16 %v1618, %v1612
    %v1931 = vpack.c.b16 %v1619, %v1613
    %v1932 = vpack.c.b16 %v1620, %v1614
    %v1933 = vpack.c.b16 %v1627, %v1621
    %v1934 = vpack.c.b16 %v1628, %v1622
    %v1935 = vpack.c.b16 %v1629, %v1623
    %v1936 = vpack.c.b16 %v1630, %v1624
    %v1937 = vpack.c.b16 %v1631, %v1625
    %v1938 = vpack.c.b16 %v1632, %v1626
    %v1939 = vpack.c.b16 %v1639, %v1633
    %v1940 = vpack.c.b16 %v1640, %v1634
    %v1941 = vpack.c.b16 %v1641, %v1635
    %v1942 = vpack.c.b16 %v1642, %v1636
    %v1943 = vpack.c.b16 %v1643, %v1637
    %v1944 = vpack.c.b16 %v1644, %v1638
    %v1945 = vpack.c.b16 %v1651, %v1645
    %v1946 = vpack.c.b16 %v1652, %v1646
    %v1947 = vpack.c.b16 %v1653, %v1647
    %v1948 = vpack.c.b16 %v1654, %v1648
    %v1949 = vpack.c.b16 %v1655, %v1649
    %v1950 = vpack.c.b16 %v1656, %v1650
    %v1951 = vpack.c.b16 %v1663, %v1657
    %v1952 = vpack.c.b16 %v1664, %v1658
    %v1953 = vpack.c.b16 %v1665, %v1659
    %v1954 = vpack.c.b16 %v1666, %v1660
    %v1955 = vpack.c.b16 %v1667, %v1661
    %v1956 = vpack.c.b16 %v1668, %v1662
    %2245 = vmatprep.subr.bf16.mxu0 %v1670
    %2246 = vmatpush1.bf16.msra.mxu0 %v1669
    %2247 = vmatprep.subr.bf16.mxu0 %v1676
    %2248 = vmatpush1.bf16.msra.mxu0 %v1675
    %2249 = vmatprep.subr.bf16.mxu0 %v1682
    %2250 = vmatpush1.bf16.msra.mxu0 %v1681
    %2251 = vmatprep.subr.bf16.mxu0 %v1688
    %2252 = vmatpush1.bf16.msra.mxu0 %v1687
    %2253 = vmatprep.subr.bf16.mxu0 %v1694
    %2254 = vmatpush1.bf16.msra.mxu0 %v1693
    %2255 = vmatprep.subr.bf16.mxu0 %v1700
    %2256 = vmatpush1.bf16.msra.mxu0 %v1699
    %2257 = vmatprep.subr.bf16.mxu0 %v1706
    %2258 = vmatpush1.bf16.msra.mxu0 %v1705
    %2259 = vmatprep.subr.bf16.mxu0 %v1712
    %2260 = vmatpush1.bf16.msra.mxu0 %v1711
    %2261 = vmatprep.subr.bf16.mxu0 %v1718
    %2262 = vmatpush1.bf16.msra.mxu0 %v1717
    %2263 = vmatprep.subr.bf16.mxu0 %v1724
    %2264 = vmatpush1.bf16.msra.mxu0 %v1723
    %2265 = vmatprep.subr.bf16.mxu0 %v1730
    %2266 = vmatpush1.bf16.msra.mxu0 %v1729
    %2267 = vmatprep.subr.bf16.mxu0 %v1736
    %2268 = vmatpush1.bf16.msra.mxu0 %v1735
    %2269 = vmatprep.subr.bf16.mxu0 %v1742
    %2270 = vmatpush1.bf16.msra.mxu0 %v1741
    %2271 = vmatprep.subr.bf16.mxu0 %v1748
    %2272 = vmatpush1.bf16.msra.mxu0 %v1747
    %2273 = vmatprep.subr.bf16.mxu0 %v1754
    %2274 = vmatpush1.bf16.msra.mxu0 %v1753
    %2275 = vmatprep.subr.bf16.mxu0 %v1760
    %2276 = vmatpush1.bf16.msra.mxu0 %v1759
    %2277 = vmatprep.mubr.bf16.mxu0 %v480
    %2278 = vmatmul.mubr.bf16.gmra.mrb[0].mxu0 %v479
    %v2279 = vpop.f32.mrb[0].mxu0
    %v2280 = vadd.f32 %v778, %v2279
    %v2281 = vpop.f32.mrb[0].mxu0
    %v2282 = vadd.f32 %v782, %v2281
    %v2283 = vpop.f32.mrb[0].mxu0
    %v2284 = vpop.f32.mrb[0].mxu0
    %2285 = vdwg.mxu0
    %2286 = vmatprep.subr.bf16.mxu0 %v1766
    %2287 = vmatpush1.bf16.msra.mxu0 %v1765
    %2288 = vmatprep.subr.bf16.mxu0 %v1772
    %2289 = vmatpush1.bf16.msra.mxu0 %v1771
    %2290 = vmatprep.subr.bf16.mxu0 %v1778
    %2291 = vmatpush1.bf16.msra.mxu0 %v1777
    %2292 = vmatprep.subr.bf16.mxu0 %v1784
    %2293 = vmatpush1.bf16.msra.mxu0 %v1783
    %2294 = vmatprep.subr.bf16.mxu0 %v1790
    %2295 = vmatpush1.bf16.msra.mxu0 %v1789
    %2296 = vmatprep.subr.bf16.mxu0 %v1796
    %2297 = vmatpush1.bf16.msra.mxu0 %v1795
    %2298 = vmatprep.subr.bf16.mxu0 %v1802
    %2299 = vmatpush1.bf16.msra.mxu0 %v1801
    %2300 = vmatprep.subr.bf16.mxu0 %v1808
    %2301 = vmatpush1.bf16.msra.mxu0 %v1807
    %2302 = vmatprep.subr.bf16.mxu0 %v1814
    %2303 = vmatpush1.bf16.msra.mxu0 %v1813
    %2304 = vmatprep.subr.bf16.mxu0 %v1820
    %2305 = vmatpush1.bf16.msra.mxu0 %v1819
    %2306 = vmatprep.subr.bf16.mxu0 %v1826
    %2307 = vmatpush1.bf16.msra.mxu0 %v1825
    %2308 = vmatprep.subr.bf16.mxu0 %v1832
    %2309 = vmatpush1.bf16.msra.mxu0 %v1831
    %2310 = vmatprep.subr.bf16.mxu0 %v1838
    %2311 = vmatpush1.bf16.msra.mxu0 %v1837
    %2312 = vmatprep.subr.bf16.mxu0 %v1844
    %2313 = vmatpush1.bf16.msra.mxu0 %v1843
    %2314 = vmatprep.subr.bf16.mxu0 %v1850
    %2315 = vmatpush1.bf16.msra.mxu0 %v1849
    %2316 = vmatprep.subr.bf16.mxu0 %v1856
    %2317 = vmatpush1.bf16.msra.mxu0 %v1855
    %2318 = vmatprep.mubr.bf16.mxu0 %v482
    %2319 = vmatmul.mubr.bf16.gmra.mrb[0].mxu0 %v481
    %v2320 = vpop.f32.mrb[0].mxu0
    %v2321 = vadd.f32 %v2280, %v2320
    %v2322 = vpop.f32.mrb[0].mxu0
    %v2323 = vadd.f32 %v2282, %v2322
    %v2324 = vpop.f32.mrb[0].mxu0
    %v2325 = vpop.f32.mrb[0].mxu0
    %2326 = vdwg.mxu0
    %2327 = vmatprep.subr.bf16.mxu0 %v1862
    %2328 = vmatpush1.bf16.msra.mxu0 %v1861
    %2329 = vmatprep.subr.bf16.mxu0 %v1868
    %2330 = vmatpush1.bf16.msra.mxu0 %v1867
    %2331 = vmatprep.subr.bf16.mxu0 %v1874
    %2332 = vmatpush1.bf16.msra.mxu0 %v1873
    %2333 = vmatprep.subr.bf16.mxu0 %v1880
    %2334 = vmatpush1.bf16.msra.mxu0 %v1879
    %2335 = vmatprep.subr.bf16.mxu0 %v1886
    %2336 = vmatpush1.bf16.msra.mxu0 %v1885
    %2337 = vmatprep.subr.bf16.mxu0 %v1892
    %2338 = vmatpush1.bf16.msra.mxu0 %v1891
    %2339 = vmatprep.subr.bf16.mxu0 %v1898
    %2340 = vmatpush1.bf16.msra.mxu0 %v1897
    %2341 = vmatprep.subr.bf16.mxu0 %v1904
    %2342 = vmatpush1.bf16.msra.mxu0 %v1903
    %2343 = vmatprep.subr.bf16.mxu0 %v1910
    %2344 = vmatpush1.bf16.msra.mxu0 %v1909
    %2345 = vmatprep.subr.bf16.mxu0 %v1916
    %2346 = vmatpush1.bf16.msra.mxu0 %v1915
    %2347 = vmatprep.subr.bf16.mxu0 %v1922
    %2348 = vmatpush1.bf16.msra.mxu0 %v1921
    %2349 = vmatprep.subr.bf16.mxu0 %v1928
    %2350 = vmatpush1.bf16.msra.mxu0 %v1927
    %2351 = vmatprep.subr.bf16.mxu0 %v1934
    %2352 = vmatpush1.bf16.msra.mxu0 %v1933
    %2353 = vmatprep.subr.bf16.mxu0 %v1940
    %2354 = vmatpush1.bf16.msra.mxu0 %v1939
    %2355 = vmatprep.subr.bf16.mxu0 %v1946
    %2356 = vmatpush1.bf16.msra.mxu0 %v1945
    %2357 = vmatprep.subr.bf16.mxu0 %v1952
    %2358 = vmatpush1.bf16.msra.mxu0 %v1951
    %2359 = vmatprep.mubr.bf16.mxu0 %v484
    %2360 = vmatmul.mubr.bf16.gmra.mrb[0].mxu0 %v483
    %v2361 = vpop.f32.mrb[0].mxu0
    %v2362 = vadd.f32 %v2321, %v2361
    %v2363 = vpop.f32.mrb[0].mxu0
    %v2364 = vadd.f32 %v2323, %v2363
    %v2365 = vpop.f32.mrb[0].mxu0
    %v2366 = vpop.f32.mrb[0].mxu0
    %2367 = vdwg.mxu0
    %2368 = vmatprep.subr.bf16.mxu0 %v1672
    %2369 = vmatpush1.bf16.msra.mxu0 %v1671
    %2370 = vmatprep.subr.bf16.mxu0 %v1678
    %2371 = vmatpush1.bf16.msra.mxu0 %v1677
    %2372 = vmatprep.subr.bf16.mxu0 %v1684
    %2373 = vmatpush1.bf16.msra.mxu0 %v1683
    %2374 = vmatprep.subr.bf16.mxu0 %v1690
    %2375 = vmatpush1.bf16.msra.mxu0 %v1689
    %2376 = vmatprep.subr.bf16.mxu0 %v1696
    %2377 = vmatpush1.bf16.msra.mxu0 %v1695
    %2378 = vmatprep.subr.bf16.mxu0 %v1702
    %2379 = vmatpush1.bf16.msra.mxu0 %v1701
    %2380 = vmatprep.subr.bf16.mxu0 %v1708
    %2381 = vmatpush1.bf16.msra.mxu0 %v1707
    %2382 = vmatprep.subr.bf16.mxu0 %v1714
    %2383 = vmatpush1.bf16.msra.mxu0 %v1713
    %2384 = vmatprep.subr.bf16.mxu0 %v1720
    %2385 = vmatpush1.bf16.msra.mxu0 %v1719
    %2386 = vmatprep.subr.bf16.mxu0 %v1726
    %2387 = vmatpush1.bf16.msra.mxu0 %v1725
    %2388 = vmatprep.subr.bf16.mxu0 %v1732
    %2389 = vmatpush1.bf16.msra.mxu0 %v1731
    %2390 = vmatprep.subr.bf16.mxu0 %v1738
    %2391 = vmatpush1.bf16.msra.mxu0 %v1737
    %2392 = vmatprep.subr.bf16.mxu0 %v1744
    %2393 = vmatpush1.bf16.msra.mxu0 %v1743
    %2394 = vmatprep.subr.bf16.mxu0 %v1750
    %2395 = vmatpush1.bf16.msra.mxu0 %v1749
    %2396 = vmatprep.subr.bf16.mxu0 %v1756
    %2397 = vmatpush1.bf16.msra.mxu0 %v1755
    %2398 = vmatprep.subr.bf16.mxu0 %v1762
    %2399 = vmatpush1.bf16.msra.mxu0 %v1761
    %2400 = vmatprep.mubr.bf16.mxu0 %v480
    %2401 = vmatmul.mubr.bf16.gmra.mrb[0].mxu0 %v479
    %v2402 = vpop.f32.mrb[0].mxu0
    %v2403 = vadd.f32 %v786, %v2402
    %v2404 = vpop.f32.mrb[0].mxu0
    %v2405 = vadd.f32 %v790, %v2404
    %v2406 = vpop.f32.mrb[0].mxu0
    %v2407 = vpop.f32.mrb[0].mxu0
    %2408 = vdwg.mxu0
    %2409 = vmatprep.subr.bf16.mxu0 %v1768
    %2410 = vmatpush1.bf16.msra.mxu0 %v1767
    %2411 = vmatprep.subr.bf16.mxu0 %v1774
    %2412 = vmatpush1.bf16.msra.mxu0 %v1773
    %2413 = vmatprep.subr.bf16.mxu0 %v1780
    %2414 = vmatpush1.bf16.msra.mxu0 %v1779
    %2415 = vmatprep.subr.bf16.mxu0 %v1786
    %2416 = vmatpush1.bf16.msra.mxu0 %v1785
    %2417 = vmatprep.subr.bf16.mxu0 %v1792
    %2418 = vmatpush1.bf16.msra.mxu0 %v1791
    %2419 = vmatprep.subr.bf16.mxu0 %v1798
    %2420 = vmatpush1.bf16.msra.mxu0 %v1797
    %2421 = vmatprep.subr.bf16.mxu0 %v1804
    %2422 = vmatpush1.bf16.msra.mxu0 %v1803
    %2423 = vmatprep.subr.bf16.mxu0 %v1810
    %2424 = vmatpush1.bf16.msra.mxu0 %v1809
    %2425 = vmatprep.subr.bf16.mxu0 %v1816
    %2426 = vmatpush1.bf16.msra.mxu0 %v1815
    %2427 = vmatprep.subr.bf16.mxu0 %v1822
    %2428 = vmatpush1.bf16.msra.mxu0 %v1821
    %2429 = vmatprep.subr.bf16.mxu0 %v1828
    %2430 = vmatpush1.bf16.msra.mxu0 %v1827
    %2431 = vmatprep.subr.bf16.mxu0 %v1834
    %2432 = vmatpush1.bf16.msra.mxu0 %v1833
    %2433 = vmatprep.subr.bf16.mxu0 %v1840
    %2434 = vmatpush1.bf16.msra.mxu0 %v1839
    %2435 = vmatprep.subr.bf16.mxu0 %v1846
    %2436 = vmatpush1.bf16.msra.mxu0 %v1845
    %2437 = vmatprep.subr.bf16.mxu0 %v1852
    %2438 = vmatpush1.bf16.msra.mxu0 %v1851
    %2439 = vmatprep.subr.bf16.mxu0 %v1858
    %2440 = vmatpush1.bf16.msra.mxu0 %v1857
    %2441 = vmatprep.mubr.bf16.mxu0 %v482
    %2442 = vmatmul.mubr.bf16.gmra.mrb[0].mxu0 %v481
    %v2443 = vpop.f32.mrb[0].mxu0
    %v2444 = vadd.f32 %v2403, %v2443
    %v2445 = vpop.f32.mrb[0].mxu0
    %v2446 = vadd.f32 %v2405, %v2445
    %v2447 = vpop.f32.mrb[0].mxu0
    %v2448 = vpop.f32.mrb[0].mxu0
    %2449 = vdwg.mxu0
    %2450 = vmatprep.subr.bf16.mxu0 %v1864
    %2451 = vmatpush1.bf16.msra.mxu0 %v1863
    %2452 = vmatprep.subr.bf16.mxu0 %v1870
    %2453 = vmatpush1.bf16.msra.mxu0 %v1869
    %2454 = vmatprep.subr.bf16.mxu0 %v1876
    %2455 = vmatpush1.bf16.msra.mxu0 %v1875
    %2456 = vmatprep.subr.bf16.mxu0 %v1882
    %2457 = vmatpush1.bf16.msra.mxu0 %v1881
    %2458 = vmatprep.subr.bf16.mxu0 %v1888
    %2459 = vmatpush1.bf16.msra.mxu0 %v1887
    %2460 = vmatprep.subr.bf16.mxu0 %v1894
    %2461 = vmatpush1.bf16.msra.mxu0 %v1893
    %2462 = vmatprep.subr.bf16.mxu0 %v1900
    %2463 = vmatpush1.bf16.msra.mxu0 %v1899
    %2464 = vmatprep.subr.bf16.mxu0 %v1906
    %2465 = vmatpush1.bf16.msra.mxu0 %v1905
    %2466 = vmatprep.subr.bf16.mxu0 %v1912
    %2467 = vmatpush1.bf16.msra.mxu0 %v1911
    %2468 = vmatprep.subr.bf16.mxu0 %v1918
    %2469 = vmatpush1.bf16.msra.mxu0 %v1917
    %2470 = vmatprep.subr.bf16.mxu0 %v1924
    %2471 = vmatpush1.bf16.msra.mxu0 %v1923
    %2472 = vmatprep.subr.bf16.mxu0 %v1930
    %2473 = vmatpush1.bf16.msra.mxu0 %v1929
    %2474 = vmatprep.subr.bf16.mxu0 %v1936
    %2475 = vmatpush1.bf16.msra.mxu0 %v1935
    %2476 = vmatprep.subr.bf16.mxu0 %v1942
    %2477 = vmatpush1.bf16.msra.mxu0 %v1941
    %2478 = vmatprep.subr.bf16.mxu0 %v1948
    %2479 = vmatpush1.bf16.msra.mxu0 %v1947
    %2480 = vmatprep.subr.bf16.mxu0 %v1954
    %2481 = vmatpush1.bf16.msra.mxu0 %v1953
    %2482 = vmatprep.mubr.bf16.mxu0 %v484
    %2483 = vmatmul.mubr.bf16.gmra.mrb[0].mxu0 %v483
    %v2484 = vpop.f32.mrb[0].mxu0
    %v2485 = vadd.f32 %v2444, %v2484
    %v2486 = vpop.f32.mrb[0].mxu0
    %v2487 = vadd.f32 %v2446, %v2486
    %v2488 = vpop.f32.mrb[0].mxu0
    %v2489 = vpop.f32.mrb[0].mxu0
    %2490 = vdwg.mxu0
    %2491 = vmatprep.subr.bf16.mxu0 %v1674
    %2492 = vmatpush1.bf16.msra.mxu0 %v1673
    %2493 = vmatprep.subr.bf16.mxu0 %v1680
    %2494 = vmatpush1.bf16.msra.mxu0 %v1679
    %2495 = vmatprep.subr.bf16.mxu0 %v1686
    %2496 = vmatpush1.bf16.msra.mxu0 %v1685
    %2497 = vmatprep.subr.bf16.mxu0 %v1692
    %2498 = vmatpush1.bf16.msra.mxu0 %v1691
    %2499 = vmatprep.subr.bf16.mxu0 %v1698
    %2500 = vmatpush1.bf16.msra.mxu0 %v1697
    %2501 = vmatprep.subr.bf16.mxu0 %v1704
    %2502 = vmatpush1.bf16.msra.mxu0 %v1703
    %2503 = vmatprep.subr.bf16.mxu0 %v1710
    %2504 = vmatpush1.bf16.msra.mxu0 %v1709
    %2505 = vmatprep.subr.bf16.mxu0 %v1716
    %2506 = vmatpush1.bf16.msra.mxu0 %v1715
    %2507 = vmatprep.subr.bf16.mxu0 %v1722
    %2508 = vmatpush1.bf16.msra.mxu0 %v1721
    %2509 = vmatprep.subr.bf16.mxu0 %v1728
    %2510 = vmatpush1.bf16.msra.mxu0 %v1727
    %2511 = vmatprep.subr.bf16.mxu0 %v1734
    %2512 = vmatpush1.bf16.msra.mxu0 %v1733
    %2513 = vmatprep.subr.bf16.mxu0 %v1740
    %2514 = vmatpush1.bf16.msra.mxu0 %v1739
    %2515 = vmatprep.subr.bf16.mxu0 %v1746
    %2516 = vmatpush1.bf16.msra.mxu0 %v1745
    %2517 = vmatprep.subr.bf16.mxu0 %v1752
    %2518 = vmatpush1.bf16.msra.mxu0 %v1751
    %2519 = vmatprep.subr.bf16.mxu0 %v1758
    %2520 = vmatpush1.bf16.msra.mxu0 %v1757
    %2521 = vmatprep.subr.bf16.mxu0 %v1764
    %2522 = vmatpush1.bf16.msra.mxu0 %v1763
    %2523 = vmatprep.mubr.bf16.mxu0 %v480
    %2524 = vmatmul.mubr.bf16.gmra.mrb[0].mxu0 %v479
    %v2525 = vpop.f32.mrb[0].mxu0
    %v2526 = vadd.f32 %v794, %v2525
    %v2527 = vpop.f32.mrb[0].mxu0
    %v2528 = vadd.f32 %v798, %v2527
    %v2529 = vpop.f32.mrb[0].mxu0
    %v2530 = vpop.f32.mrb[0].mxu0
    %2531 = vdwg.mxu0
    %2532 = vmatprep.subr.bf16.mxu0 %v1770
    %2533 = vmatpush1.bf16.msra.mxu0 %v1769
    %2534 = vmatprep.subr.bf16.mxu0 %v1776
    %2535 = vmatpush1.bf16.msra.mxu0 %v1775
    %2536 = vmatprep.subr.bf16.mxu0 %v1782
    %2537 = vmatpush1.bf16.msra.mxu0 %v1781
    %2538 = vmatprep.subr.bf16.mxu0 %v1788
    %2539 = vmatpush1.bf16.msra.mxu0 %v1787
    %2540 = vmatprep.subr.bf16.mxu0 %v1794
    %2541 = vmatpush1.bf16.msra.mxu0 %v1793
    %2542 = vmatprep.subr.bf16.mxu0 %v1800
    %2543 = vmatpush1.bf16.msra.mxu0 %v1799
    %2544 = vmatprep.subr.bf16.mxu0 %v1806
    %2545 = vmatpush1.bf16.msra.mxu0 %v1805
    %2546 = vmatprep.subr.bf16.mxu0 %v1812
    %2547 = vmatpush1.bf16.msra.mxu0 %v1811
    %2548 = vmatprep.subr.bf16.mxu0 %v1818
    %2549 = vmatpush1.bf16.msra.mxu0 %v1817
    %2550 = vmatprep.subr.bf16.mxu0 %v1824
    %2551 = vmatpush1.bf16.msra.mxu0 %v1823
    %2552 = vmatprep.subr.bf16.mxu0 %v1830
    %2553 = vmatpush1.bf16.msra.mxu0 %v1829
    %2554 = vmatprep.subr.bf16.mxu0 %v1836
    %2555 = vmatpush1.bf16.msra.mxu0 %v1835
    %2556 = vmatprep.subr.bf16.mxu0 %v1842
    %2557 = vmatpush1.bf16.msra.mxu0 %v1841
    %2558 = vmatprep.subr.bf16.mxu0 %v1848
    %2559 = vmatpush1.bf16.msra.mxu0 %v1847
    %2560 = vmatprep.subr.bf16.mxu0 %v1854
    %2561 = vmatpush1.bf16.msra.mxu0 %v1853
    %2562 = vmatprep.subr.bf16.mxu0 %v1860
    %2563 = vmatpush1.bf16.msra.mxu0 %v1859
    %2564 = vmatprep.mubr.bf16.mxu0 %v482
    %2565 = vmatmul.mubr.bf16.gmra.mrb[0].mxu0 %v481
    %v2566 = vpop.f32.mrb[0].mxu0
    %v2567 = vadd.f32 %v2526, %v2566
    %v2568 = vpop.f32.mrb[0].mxu0
    %v2569 = vadd.f32 %v2528, %v2568
    %v2570 = vpop.f32.mrb[0].mxu0
    %v2571 = vpop.f32.mrb[0].mxu0
    %2572 = vdwg.mxu0
    %2573 = vmatprep.subr.bf16.mxu0 %v1866
    %2574 = vmatpush1.bf16.msra.mxu0 %v1865
    %2575 = vmatprep.subr.bf16.mxu0 %v1872
    %2576 = vmatpush1.bf16.msra.mxu0 %v1871
    %2577 = vmatprep.subr.bf16.mxu0 %v1878
    %2578 = vmatpush1.bf16.msra.mxu0 %v1877
    %2579 = vmatprep.subr.bf16.mxu0 %v1884
    %2580 = vmatpush1.bf16.msra.mxu0 %v1883
    %2581 = vmatprep.subr.bf16.mxu0 %v1890
    %2582 = vmatpush1.bf16.msra.mxu0 %v1889
    %2583 = vmatprep.subr.bf16.mxu0 %v1896
    %2584 = vmatpush1.bf16.msra.mxu0 %v1895
    %2585 = vmatprep.subr.bf16.mxu0 %v1902
    %2586 = vmatpush1.bf16.msra.mxu0 %v1901
    %2587 = vmatprep.subr.bf16.mxu0 %v1908
    %2588 = vmatpush1.bf16.msra.mxu0 %v1907
    %2589 = vmatprep.subr.bf16.mxu0 %v1914
    %2590 = vmatpush1.bf16.msra.mxu0 %v1913
    %2591 = vmatprep.subr.bf16.mxu0 %v1920
    %2592 = vmatpush1.bf16.msra.mxu0 %v1919
    %2593 = vmatprep.subr.bf16.mxu0 %v1926
    %2594 = vmatpush1.bf16.msra.mxu0 %v1925
    %2595 = vmatprep.subr.bf16.mxu0 %v1932
    %2596 = vmatpush1.bf16.msra.mxu0 %v1931
    %2597 = vmatprep.subr.bf16.mxu0 %v1938
    %2598 = vmatpush1.bf16.msra.mxu0 %v1937
    %2599 = vmatprep.subr.bf16.mxu0 %v1944
    %2600 = vmatpush1.bf16.msra.mxu0 %v1943
    %2601 = vmatprep.subr.bf16.mxu0 %v1950
    %2602 = vmatpush1.bf16.msra.mxu0 %v1949
    %2603 = vmatprep.subr.bf16.mxu0 %v1956
    %2604 = vmatpush1.bf16.msra.mxu0 %v1955
    %2605 = vmatprep.mubr.bf16.mxu0 %v484
    %2606 = vmatmul.mubr.bf16.gmra.mrb[0].mxu0 %v483
    %v2607 = vpop.f32.mrb[0].mxu0
    %v2608 = vadd.f32 %v2567, %v2607
    %v2609 = vpop.f32.mrb[0].mxu0
    %v2610 = vadd.f32 %v2569, %v2609
    %v2611 = vpop.f32.mrb[0].mxu0
    %v2612 = vpop.f32.mrb[0].mxu0
    %2613 = vdwg.mxu0
    %v2614 = vmax.f32 %v2362, 0.0
    %v2615 = vmax.f32 %v2364, 0.0
    %v2616 = vmax.f32 %v2485, 0.0
    %v2617 = vmax.f32 %v2487, 0.0
    %v2618 = vmax.f32 %v2608, 0.0
    %v2619 = vmax.f32 %v2610, 0.0
    %v2620 = vpack.c.bf16 %v2614, %v2614
    %v2621 = vpack.c.bf16 %v2615, %v2615
    %v2622 = vpack.c.bf16 %v2616, %v2616
    %v2623 = vpack.c.bf16 %v2617, %v2617
    %v2624 = vpack.c.bf16 %v2618, %v2618
    %v2625 = vpack.c.bf16 %v2619, %v2619
    %v2626 = vld [vmem:[#allocation13] sm:$0xff]
    %v2627 = vld [vmem:[#allocation13 + $0x8] sm:$0xff]
    %v2628 = vld [vmem:[#allocation13 + $0x10] sm:$0xff]
    %v2629 = vld [vmem:[#allocation13 + $0x18] sm:$0xff]
    %v2630 = vld [vmem:[#allocation13 + $0x20] sm:$0xff]
    %v2631 = vld [vmem:[#allocation13 + $0x28] sm:$0xff]
    %v2632 = vld [vmem:[#allocation13 + $0x30] sm:$0xff]
    %v2633 = vld [vmem:[#allocation13 + $0x38] sm:$0xff]
    %v2634 = vld [vmem:[#allocation13 + $0x40] sm:$0xff]
    %v2635 = vld [vmem:[#allocation13 + $0x48] sm:$0xff]
    %v2636 = vld [vmem:[#allocation13 + $0x50] sm:$0xff]
    %v2637 = vld [vmem:[#allocation13 + $0x58] sm:$0xff]
    %v2638 = vld [vmem:[#allocation13 + $0x60] sm:$0xff]
    %v2639 = vld [vmem:[#allocation13 + $0x68] sm:$0xff]
    %v2640 = vld [vmem:[#allocation13 + $0x70] sm:$0xff]
    %v2641 = vld [vmem:[#allocation13 + $0x78] sm:$0xff]
    %v2642 = vld [vmem:[#allocation13 + $0x80] sm:$0xff]
    %v2643 = vld [vmem:[#allocation13 + $0x88] sm:$0xff]
    %v2644 = vld [vmem:[#allocation13 + $0x90] sm:$0xff]
    %v2645 = vld [vmem:[#allocation13 + $0x98] sm:$0xff]
    %v2646 = vld [vmem:[#allocation13 + $0xa0] sm:$0xff]
    %v2647 = vld [vmem:[#allocation13 + $0xa8] sm:$0xff]
    %v2648 = vld [vmem:[#allocation13 + $0xb0] sm:$0xff]
    %v2649 = vld [vmem:[#allocation13 + $0xb8] sm:$0xff]
    %v2650 = vld [vmem:[#allocation13 + $0xc0] sm:$0xff]
    %v2651 = vld [vmem:[#allocation13 + $0xc8] sm:$0xff]
    %v2652 = vld [vmem:[#allocation13 + $0xd0] sm:$0xff]
    %v2653 = vld [vmem:[#allocation13 + $0xd8] sm:$0xff]
    %v2654 = vld [vmem:[#allocation13 + $0xe0] sm:$0xff]
    %v2655 = vld [vmem:[#allocation13 + $0xe8] sm:$0xff]
    %v2656 = vld [vmem:[#allocation13 + $0xf0] sm:$0xff]
    %v2657 = vld [vmem:[#allocation13 + $0xf8] sm:$0xff]
    %v2658 = vld [vmem:[#allocation13 + $0x100] sm:$0xff]
    %v2659 = vld [vmem:[#allocation13 + $0x108] sm:$0xff]
    %v2660 = vld [vmem:[#allocation13 + $0x110] sm:$0xff]
    %v2661 = vld [vmem:[#allocation13 + $0x118] sm:$0xff]
    %v2662 = vld [vmem:[#allocation13 + $0x120] sm:$0xff]
    %v2663 = vld [vmem:[#allocation13 + $0x128] sm:$0xff]
    %v2664 = vld [vmem:[#allocation13 + $0x130] sm:$0xff]
    %v2665 = vld [vmem:[#allocation13 + $0x138] sm:$0xff]
    %v2666 = vld [vmem:[#allocation13 + $0x140] sm:$0xff]
    %v2667 = vld [vmem:[#allocation13 + $0x148] sm:$0xff]
    %v2668 = vld [vmem:[#allocation13 + $0x150] sm:$0xff]
    %v2669 = vld [vmem:[#allocation13 + $0x158] sm:$0xff]
    %v2670 = vld [vmem:[#allocation13 + $0x160] sm:$0xff]
    %v2671 = vld [vmem:[#allocation13 + $0x168] sm:$0xff]
    %v2672 = vld [vmem:[#allocation13 + $0x170] sm:$0xff]
    %v2673 = vld [vmem:[#allocation13 + $0x178] sm:$0xff]
    %v2674 = vld [vmem:[#allocation13 + $0x180] sm:$0xff]
    %v2675 = vld [vmem:[#allocation13 + $0x188] sm:$0xff]
    %v2676 = vld [vmem:[#allocation13 + $0x190] sm:$0xff]
    %v2677 = vld [vmem:[#allocation13 + $0x198] sm:$0xff]
    %v2678 = vld [vmem:[#allocation13 + $0x1a0] sm:$0xff]
    %v2679 = vld [vmem:[#allocation13 + $0x1a8] sm:$0xff]
    %v2680 = vld [vmem:[#allocation13 + $0x1b0] sm:$0xff]
    %v2681 = vld [vmem:[#allocation13 + $0x1b8] sm:$0xff]
    %v2682 = vld [vmem:[#allocation13 + $0x1c0] sm:$0xff]
    %v2683 = vld [vmem:[#allocation13 + $0x1c8] sm:$0xff]
    %v2684 = vld [vmem:[#allocation13 + $0x1d0] sm:$0xff]
    %v2685 = vld [vmem:[#allocation13 + $0x1d8] sm:$0xff]
    %v2686 = vld [vmem:[#allocation13 + $0x1e0] sm:$0xff]
    %v2687 = vld [vmem:[#allocation13 + $0x1e8] sm:$0xff]
    %v2688 = vld [vmem:[#allocation13 + $0x1f0] sm:$0xff]
    %v2689 = vld [vmem:[#allocation13 + $0x1f8] sm:$0xff]
    %v2690 = vld [vmem:[#allocation13 + $0x200] sm:$0xff]
    %v2691 = vld [vmem:[#allocation13 + $0x208] sm:$0xff]
    %v2692 = vld [vmem:[#allocation13 + $0x210] sm:$0xff]
    %v2693 = vld [vmem:[#allocation13 + $0x218] sm:$0xff]
    %v2694 = vld [vmem:[#allocation13 + $0x220] sm:$0xff]
    %v2695 = vld [vmem:[#allocation13 + $0x228] sm:$0xff]
    %v2696 = vld [vmem:[#allocation13 + $0x230] sm:$0xff]
    %v2697 = vld [vmem:[#allocation13 + $0x238] sm:$0xff]
    %v2698 = vld [vmem:[#allocation13 + $0x240] sm:$0xff]
    %v2699 = vld [vmem:[#allocation13 + $0x248] sm:$0xff]
    %v2700 = vld [vmem:[#allocation13 + $0x250] sm:$0xff]
    %v2701 = vld [vmem:[#allocation13 + $0x258] sm:$0xff]
    %v2702 = vld [vmem:[#allocation13 + $0x260] sm:$0xff]
    %v2703 = vld [vmem:[#allocation13 + $0x268] sm:$0xff]
    %v2704 = vld [vmem:[#allocation13 + $0x270] sm:$0xff]
    %v2705 = vld [vmem:[#allocation13 + $0x278] sm:$0xff]
    %v2706 = vld [vmem:[#allocation13 + $0x280] sm:$0xff]
    %v2707 = vld [vmem:[#allocation13 + $0x288] sm:$0xff]
    %v2708 = vld [vmem:[#allocation13 + $0x290] sm:$0xff]
    %v2709 = vld [vmem:[#allocation13 + $0x298] sm:$0xff]
    %v2710 = vld [vmem:[#allocation13 + $0x2a0] sm:$0xff]
    %v2711 = vld [vmem:[#allocation13 + $0x2a8] sm:$0xff]
    %v2712 = vld [vmem:[#allocation13 + $0x2b0] sm:$0xff]
    %v2713 = vld [vmem:[#allocation13 + $0x2b8] sm:$0xff]
    %v2714 = vld [vmem:[#allocation13 + $0x2c0] sm:$0xff]
    %v2715 = vld [vmem:[#allocation13 + $0x2c8] sm:$0xff]
    %v2716 = vld [vmem:[#allocation13 + $0x2d0] sm:$0xff]
    %v2717 = vld [vmem:[#allocation13 + $0x2d8] sm:$0xff]
    %v2718 = vld [vmem:[#allocation13 + $0x2e0] sm:$0xff]
    %v2719 = vld [vmem:[#allocation13 + $0x2e8] sm:$0xff]
    %v2720 = vld [vmem:[#allocation13 + $0x2f0] sm:$0xff]
    %v2721 = vld [vmem:[#allocation13 + $0x2f8] sm:$0xff]
    %v2722 = vld [vmem:[#allocation14] sm:$0x3]
    %v2724 = vlaneseq
    %v2725 = vshrl.u32 %v2724, 7
    %v2726 = vsub.s32 0, %v2725
    %v2727 = vrot.slane %v2722, %v2726
    %v2728 = vlaneseq
    %v2729 = vshrl.u32 %v2728, 7
    %v2730 = vsub.s32 1, %v2729
    %v2731 = vrot.slane %v2722, %v2730
    %v2830 = vunpack.c.l.b16 %v2626
    %v2831 = vunpack.c.h.b16 %v2626
    %v2832 = vunpack.c.l.b16 %v2627
    %v2833 = vunpack.c.h.b16 %v2627
    %v2834 = vunpack.c.l.b16 %v2628
    %v2835 = vunpack.c.h.b16 %v2628
    %v2836 = vunpack.c.l.b16 %v2629
    %v2837 = vunpack.c.h.b16 %v2629
    %v2838 = vunpack.c.l.b16 %v2630
    %v2839 = vunpack.c.h.b16 %v2630
    %v2840 = vunpack.c.l.b16 %v2631
    %v2841 = vunpack.c.h.b16 %v2631
    %v2842 = vunpack.c.l.b16 %v2632
    %v2843 = vunpack.c.h.b16 %v2632
    %v2844 = vunpack.c.l.b16 %v2633
    %v2845 = vunpack.c.h.b16 %v2633
    %v2846 = vunpack.c.l.b16 %v2634
    %v2847 = vunpack.c.h.b16 %v2634
    %v2848 = vunpack.c.l.b16 %v2635
    %v2849 = vunpack.c.h.b16 %v2635
    %v2850 = vunpack.c.l.b16 %v2636
    %v2851 = vunpack.c.h.b16 %v2636
    %v2852 = vunpack.c.l.b16 %v2637
    %v2853 = vunpack.c.h.b16 %v2637
    %v2854 = vunpack.c.l.b16 %v2638
    %v2855 = vunpack.c.h.b16 %v2638
    %v2856 = vunpack.c.l.b16 %v2639
    %v2857 = vunpack.c.h.b16 %v2639
    %v2858 = vunpack.c.l.b16 %v2640
    %v2859 = vunpack.c.h.b16 %v2640
    %v2860 = vunpack.c.l.b16 %v2641
    %v2861 = vunpack.c.h.b16 %v2641
    %v2862 = vunpack.c.l.b16 %v2642
    %v2863 = vunpack.c.h.b16 %v2642
    %v2864 = vunpack.c.l.b16 %v2643
    %v2865 = vunpack.c.h.b16 %v2643
    %v2866 = vunpack.c.l.b16 %v2644
    %v2867 = vunpack.c.h.b16 %v2644
    %v2868 = vunpack.c.l.b16 %v2645
    %v2869 = vunpack.c.h.b16 %v2645
    %v2870 = vunpack.c.l.b16 %v2646
    %v2871 = vunpack.c.h.b16 %v2646
    %v2872 = vunpack.c.l.b16 %v2647
    %v2873 = vunpack.c.h.b16 %v2647
    %v2874 = vunpack.c.l.b16 %v2648
    %v2875 = vunpack.c.h.b16 %v2648
    %v2876 = vunpack.c.l.b16 %v2649
    %v2877 = vunpack.c.h.b16 %v2649
    %v2878 = vunpack.c.l.b16 %v2650
    %v2879 = vunpack.c.h.b16 %v2650
    %v2880 = vunpack.c.l.b16 %v2651
    %v2881 = vunpack.c.h.b16 %v2651
    %v2882 = vunpack.c.l.b16 %v2652
    %v2883 = vunpack.c.h.b16 %v2652
    %v2884 = vunpack.c.l.b16 %v2653
    %v2885 = vunpack.c.h.b16 %v2653
    %v2886 = vunpack.c.l.b16 %v2654
    %v2887 = vunpack.c.h.b16 %v2654
    %v2888 = vunpack.c.l.b16 %v2655
    %v2889 = vunpack.c.h.b16 %v2655
    %v2890 = vunpack.c.l.b16 %v2656
    %v2891 = vunpack.c.h.b16 %v2656
    %v2892 = vunpack.c.l.b16 %v2657
    %v2893 = vunpack.c.h.b16 %v2657
    %v2894 = vunpack.c.l.b16 %v2658
    %v2895 = vunpack.c.h.b16 %v2658
    %v2896 = vunpack.c.l.b16 %v2659
    %v2897 = vunpack.c.h.b16 %v2659
    %v2898 = vunpack.c.l.b16 %v2660
    %v2899 = vunpack.c.h.b16 %v2660
    %v2900 = vunpack.c.l.b16 %v2661
    %v2901 = vunpack.c.h.b16 %v2661
    %v2902 = vunpack.c.l.b16 %v2662
    %v2903 = vunpack.c.h.b16 %v2662
    %v2904 = vunpack.c.l.b16 %v2663
    %v2905 = vunpack.c.h.b16 %v2663
    %v2906 = vunpack.c.l.b16 %v2664
    %v2907 = vunpack.c.h.b16 %v2664
    %v2908 = vunpack.c.l.b16 %v2665
    %v2909 = vunpack.c.h.b16 %v2665
    %v2910 = vunpack.c.l.b16 %v2666
    %v2911 = vunpack.c.h.b16 %v2666
    %v2912 = vunpack.c.l.b16 %v2667
    %v2913 = vunpack.c.h.b16 %v2667
    %v2914 = vunpack.c.l.b16 %v2668
    %v2915 = vunpack.c.h.b16 %v2668
    %v2916 = vunpack.c.l.b16 %v2669
    %v2917 = vunpack.c.h.b16 %v2669
    %v2918 = vunpack.c.l.b16 %v2670
    %v2919 = vunpack.c.h.b16 %v2670
    %v2920 = vunpack.c.l.b16 %v2671
    %v2921 = vunpack.c.h.b16 %v2671
    %v2922 = vunpack.c.l.b16 %v2672
    %v2923 = vunpack.c.h.b16 %v2672
    %v2924 = vunpack.c.l.b16 %v2673
    %v2925 = vunpack.c.h.b16 %v2673
    %v2926 = vunpack.c.l.b16 %v2674
    %v2927 = vunpack.c.h.b16 %v2674
    %v2928 = vunpack.c.l.b16 %v2675
    %v2929 = vunpack.c.h.b16 %v2675
    %v2930 = vunpack.c.l.b16 %v2676
    %v2931 = vunpack.c.h.b16 %v2676
    %v2932 = vunpack.c.l.b16 %v2677
    %v2933 = vunpack.c.h.b16 %v2677
    %v2934 = vunpack.c.l.b16 %v2678
    %v2935 = vunpack.c.h.b16 %v2678
    %v2936 = vunpack.c.l.b16 %v2679
    %v2937 = vunpack.c.h.b16 %v2679
    %v2938 = vunpack.c.l.b16 %v2680
    %v2939 = vunpack.c.h.b16 %v2680
    %v2940 = vunpack.c.l.b16 %v2681
    %v2941 = vunpack.c.h.b16 %v2681
    %v2942 = vunpack.c.l.b16 %v2682
    %v2943 = vunpack.c.h.b16 %v2682
    %v2944 = vunpack.c.l.b16 %v2683
    %v2945 = vunpack.c.h.b16 %v2683
    %v2946 = vunpack.c.l.b16 %v2684
    %v2947 = vunpack.c.h.b16 %v2684
    %v2948 = vunpack.c.l.b16 %v2685
    %v2949 = vunpack.c.h.b16 %v2685
    %v2950 = vunpack.c.l.b16 %v2686
    %v2951 = vunpack.c.h.b16 %v2686
    %v2952 = vunpack.c.l.b16 %v2687
    %v2953 = vunpack.c.h.b16 %v2687
    %v2954 = vunpack.c.l.b16 %v2688
    %v2955 = vunpack.c.h.b16 %v2688
    %v2956 = vunpack.c.l.b16 %v2689
    %v2957 = vunpack.c.h.b16 %v2689
    %v2958 = vunpack.c.l.b16 %v2690
    %v2959 = vunpack.c.h.b16 %v2690
    %v2960 = vunpack.c.l.b16 %v2691
    %v2961 = vunpack.c.h.b16 %v2691
    %v2962 = vunpack.c.l.b16 %v2692
    %v2963 = vunpack.c.h.b16 %v2692
    %v2964 = vunpack.c.l.b16 %v2693
    %v2965 = vunpack.c.h.b16 %v2693
    %v2966 = vunpack.c.l.b16 %v2694
    %v2967 = vunpack.c.h.b16 %v2694
    %v2968 = vunpack.c.l.b16 %v2695
    %v2969 = vunpack.c.h.b16 %v2695
    %v2970 = vunpack.c.l.b16 %v2696
    %v2971 = vunpack.c.h.b16 %v2696
    %v2972 = vunpack.c.l.b16 %v2697
    %v2973 = vunpack.c.h.b16 %v2697
    %v2974 = vunpack.c.l.b16 %v2698
    %v2975 = vunpack.c.h.b16 %v2698
    %v2976 = vunpack.c.l.b16 %v2699
    %v2977 = vunpack.c.h.b16 %v2699
    %v2978 = vunpack.c.l.b16 %v2700
    %v2979 = vunpack.c.h.b16 %v2700
    %v2980 = vunpack.c.l.b16 %v2701
    %v2981 = vunpack.c.h.b16 %v2701
    %v2982 = vunpack.c.l.b16 %v2702
    %v2983 = vunpack.c.h.b16 %v2702
    %v2984 = vunpack.c.l.b16 %v2703
    %v2985 = vunpack.c.h.b16 %v2703
    %v2986 = vunpack.c.l.b16 %v2704
    %v2987 = vunpack.c.h.b16 %v2704
    %v2988 = vunpack.c.l.b16 %v2705
    %v2989 = vunpack.c.h.b16 %v2705
    %v2990 = vunpack.c.l.b16 %v2706
    %v2991 = vunpack.c.h.b16 %v2706
    %v2992 = vunpack.c.l.b16 %v2707
    %v2993 = vunpack.c.h.b16 %v2707
    %v2994 = vunpack.c.l.b16 %v2708
    %v2995 = vunpack.c.h.b16 %v2708
    %v2996 = vunpack.c.l.b16 %v2709
    %v2997 = vunpack.c.h.b16 %v2709
    %v2998 = vunpack.c.l.b16 %v2710
    %v2999 = vunpack.c.h.b16 %v2710
    %v3000 = vunpack.c.l.b16 %v2711
    %v3001 = vunpack.c.h.b16 %v2711
    %v3002 = vunpack.c.l.b16 %v2712
    %v3003 = vunpack.c.h.b16 %v2712
    %v3004 = vunpack.c.l.b16 %v2713
    %v3005 = vunpack.c.h.b16 %v2713
    %v3006 = vunpack.c.l.b16 %v2714
    %v3007 = vunpack.c.h.b16 %v2714
    %v3008 = vunpack.c.l.b16 %v2715
    %v3009 = vunpack.c.h.b16 %v2715
    %v3010 = vunpack.c.l.b16 %v2716
    %v3011 = vunpack.c.h.b16 %v2716
    %v3012 = vunpack.c.l.b16 %v2717
    %v3013 = vunpack.c.h.b16 %v2717
    %v3014 = vunpack.c.l.b16 %v2718
    %v3015 = vunpack.c.h.b16 %v2718
    %v3016 = vunpack.c.l.b16 %v2719
    %v3017 = vunpack.c.h.b16 %v2719
    %v3018 = vunpack.c.l.b16 %v2720
    %v3019 = vunpack.c.h.b16 %v2720
    %v3020 = vunpack.c.l.b16 %v2721
    %v3021 = vunpack.c.h.b16 %v2721
    %v3022 = vpack.c.b16 %v2832, %v2830
    %v3023 = vpack.c.b16 %v2833, %v2831
    %v3024 = vpack.c.b16 %v2836, %v2834
    %v3025 = vpack.c.b16 %v2837, %v2835
    %v3026 = vpack.c.b16 %v2840, %v2838
    %v3027 = vpack.c.b16 %v2841, %v2839
    %v3028 = vpack.c.b16 %v2844, %v2842
    %v3029 = vpack.c.b16 %v2845, %v2843
    %v3030 = vpack.c.b16 %v2848, %v2846
    %v3031 = vpack.c.b16 %v2849, %v2847
    %v3032 = vpack.c.b16 %v2852, %v2850
    %v3033 = vpack.c.b16 %v2853, %v2851
    %v3034 = vpack.c.b16 %v2856, %v2854
    %v3035 = vpack.c.b16 %v2857, %v2855
    %v3036 = vpack.c.b16 %v2860, %v2858
    %v3037 = vpack.c.b16 %v2861, %v2859
    %v3038 = vpack.c.b16 %v2864, %v2862
    %v3039 = vpack.c.b16 %v2865, %v2863
    %v3040 = vpack.c.b16 %v2868, %v2866
    %v3041 = vpack.c.b16 %v2869, %v2867
    %v3042 = vpack.c.b16 %v2872, %v2870
    %v3043 = vpack.c.b16 %v2873, %v2871
    %v3044 = vpack.c.b16 %v2876, %v2874
    %v3045 = vpack.c.b16 %v2877, %v2875
    %v3046 = vpack.c.b16 %v2880, %v2878
    %v3047 = vpack.c.b16 %v2881, %v2879
    %v3048 = vpack.c.b16 %v2884, %v2882
    %v3049 = vpack.c.b16 %v2885, %v2883
    %v3050 = vpack.c.b16 %v2888, %v2886
    %v3051 = vpack.c.b16 %v2889, %v2887
    %v3052 = vpack.c.b16 %v2892, %v2890
    %v3053 = vpack.c.b16 %v2893, %v2891
    %v3054 = vpack.c.b16 %v2896, %v2894
    %v3055 = vpack.c.b16 %v2897, %v2895
    %v3056 = vpack.c.b16 %v2900, %v2898
    %v3057 = vpack.c.b16 %v2901, %v2899
    %v3058 = vpack.c.b16 %v2904, %v2902
    %v3059 = vpack.c.b16 %v2905, %v2903
    %v3060 = vpack.c.b16 %v2908, %v2906
    %v3061 = vpack.c.b16 %v2909, %v2907
    %v3062 = vpack.c.b16 %v2912, %v2910
    %v3063 = vpack.c.b16 %v2913, %v2911
    %v3064 = vpack.c.b16 %v2916, %v2914
    %v3065 = vpack.c.b16 %v2917, %v2915
    %v3066 = vpack.c.b16 %v2920, %v2918
    %v3067 = vpack.c.b16 %v2921, %v2919
    %v3068 = vpack.c.b16 %v2924, %v2922
    %v3069 = vpack.c.b16 %v2925, %v2923
    %v3070 = vpack.c.b16 %v2928, %v2926
    %v3071 = vpack.c.b16 %v2929, %v2927
    %v3072 = vpack.c.b16 %v2932, %v2930
    %v3073 = vpack.c.b16 %v2933, %v2931
    %v3074 = vpack.c.b16 %v2936, %v2934
    %v3075 = vpack.c.b16 %v2937, %v2935
    %v3076 = vpack.c.b16 %v2940, %v2938
    %v3077 = vpack.c.b16 %v2941, %v2939
    %v3078 = vpack.c.b16 %v2944, %v2942
    %v3079 = vpack.c.b16 %v2945, %v2943
    %v3080 = vpack.c.b16 %v2948, %v2946
    %v3081 = vpack.c.b16 %v2949, %v2947
    %v3082 = vpack.c.b16 %v2952, %v2950
    %v3083 = vpack.c.b16 %v2953, %v2951
    %v3084 = vpack.c.b16 %v2956, %v2954
    %v3085 = vpack.c.b16 %v2957, %v2955
    %v3086 = vpack.c.b16 %v2960, %v2958
    %v3087 = vpack.c.b16 %v2961, %v2959
    %v3088 = vpack.c.b16 %v2964, %v2962
    %v3089 = vpack.c.b16 %v2965, %v2963
    %v3090 = vpack.c.b16 %v2968, %v2966
    %v3091 = vpack.c.b16 %v2969, %v2967
    %v3092 = vpack.c.b16 %v2972, %v2970
    %v3093 = vpack.c.b16 %v2973, %v2971
    %v3094 = vpack.c.b16 %v2976, %v2974
    %v3095 = vpack.c.b16 %v2977, %v2975
    %v3096 = vpack.c.b16 %v2980, %v2978
    %v3097 = vpack.c.b16 %v2981, %v2979
    %v3098 = vpack.c.b16 %v2984, %v2982
    %v3099 = vpack.c.b16 %v2985, %v2983
    %v3100 = vpack.c.b16 %v2988, %v2986
    %v3101 = vpack.c.b16 %v2989, %v2987
    %v3102 = vpack.c.b16 %v2992, %v2990
    %v3103 = vpack.c.b16 %v2993, %v2991
    %v3104 = vpack.c.b16 %v2996, %v2994
    %v3105 = vpack.c.b16 %v2997, %v2995
    %v3106 = vpack.c.b16 %v3000, %v2998
    %v3107 = vpack.c.b16 %v3001, %v2999
    %v3108 = vpack.c.b16 %v3004, %v3002
    %v3109 = vpack.c.b16 %v3005, %v3003
    %v3110 = vpack.c.b16 %v3008, %v3006
    %v3111 = vpack.c.b16 %v3009, %v3007
    %v3112 = vpack.c.b16 %v3012, %v3010
    %v3113 = vpack.c.b16 %v3013, %v3011
    %v3114 = vpack.c.b16 %v3016, %v3014
    %v3115 = vpack.c.b16 %v3017, %v3015
    %v3116 = vpack.c.b16 %v3020, %v3018
    %v3117 = vpack.c.b16 %v3021, %v3019
    %3214 = vmatprep.subr.bf16.mxu0 %v3023
    %3215 = vmatpush1.bf16.msra.mxu0 %v3022
    %3216 = vmatprep.subr.bf16.mxu0 %v3025
    %3217 = vmatpush1.bf16.msra.mxu0 %v3024
    %3218 = vmatprep.subr.bf16.mxu0 %v3027
    %3219 = vmatpush1.bf16.msra.mxu0 %v3026
    %3220 = vmatprep.subr.bf16.mxu0 %v3029
    %3221 = vmatpush1.bf16.msra.mxu0 %v3028
    %3222 = vmatprep.subr.bf16.mxu0 %v3031
    %3223 = vmatpush1.bf16.msra.mxu0 %v3030
    %3224 = vmatprep.subr.bf16.mxu0 %v3033
    %3225 = vmatpush1.bf16.msra.mxu0 %v3032
    %3226 = vmatprep.subr.bf16.mxu0 %v3035
    %3227 = vmatpush1.bf16.msra.mxu0 %v3034
    %3228 = vmatprep.subr.bf16.mxu0 %v3037
    %3229 = vmatpush1.bf16.msra.mxu0 %v3036
    %3230 = vmatprep.subr.bf16.mxu0 %v3039
    %3231 = vmatpush1.bf16.msra.mxu0 %v3038
    %3232 = vmatprep.subr.bf16.mxu0 %v3041
    %3233 = vmatpush1.bf16.msra.mxu0 %v3040
    %3234 = vmatprep.subr.bf16.mxu0 %v3043
    %3235 = vmatpush1.bf16.msra.mxu0 %v3042
    %3236 = vmatprep.subr.bf16.mxu0 %v3045
    %3237 = vmatpush1.bf16.msra.mxu0 %v3044
    %3238 = vmatprep.subr.bf16.mxu0 %v3047
    %3239 = vmatpush1.bf16.msra.mxu0 %v3046
    %3240 = vmatprep.subr.bf16.mxu0 %v3049
    %3241 = vmatpush1.bf16.msra.mxu0 %v3048
    %3242 = vmatprep.subr.bf16.mxu0 %v3051
    %3243 = vmatpush1.bf16.msra.mxu0 %v3050
    %3244 = vmatprep.subr.bf16.mxu0 %v3053
    %3245 = vmatpush1.bf16.msra.mxu0 %v3052
    %3246 = vmatprep.mubr.bf16.mxu0 %v2621
    %3247 = vmatmul.mubr.bf16.gmra.mrb[0].mxu0 %v2620
    %v3248 = vpop.f32.mrb[0].mxu0
    %v3249 = vadd.f32 %v2727, %v3248
    %v3250 = vpop.f32.mrb[0].mxu0
    %v3251 = vadd.f32 %v2731, %v3250
    %v3252 = vpop.f32.mrb[0].mxu0
    %v3253 = vpop.f32.mrb[0].mxu0
    %3254 = vdwg.mxu0
    %3255 = vmatprep.subr.bf16.mxu0 %v3055
    %3256 = vmatpush1.bf16.msra.mxu0 %v3054
    %3257 = vmatprep.subr.bf16.mxu0 %v3057
    %3258 = vmatpush1.bf16.msra.mxu0 %v3056
    %3259 = vmatprep.subr.bf16.mxu0 %v3059
    %3260 = vmatpush1.bf16.msra.mxu0 %v3058
    %3261 = vmatprep.subr.bf16.mxu0 %v3061
    %3262 = vmatpush1.bf16.msra.mxu0 %v3060
    %3263 = vmatprep.subr.bf16.mxu0 %v3063
    %3264 = vmatpush1.bf16.msra.mxu0 %v3062
    %3265 = vmatprep.subr.bf16.mxu0 %v3065
    %3266 = vmatpush1.bf16.msra.mxu0 %v3064
    %3267 = vmatprep.subr.bf16.mxu0 %v3067
    %3268 = vmatpush1.bf16.msra.mxu0 %v3066
    %3269 = vmatprep.subr.bf16.mxu0 %v3069
    %3270 = vmatpush1.bf16.msra.mxu0 %v3068
    %3271 = vmatprep.subr.bf16.mxu0 %v3071
    %3272 = vmatpush1.bf16.msra.mxu0 %v3070
    %3273 = vmatprep.subr.bf16.mxu0 %v3073
    %3274 = vmatpush1.bf16.msra.mxu0 %v3072
    %3275 = vmatprep.subr.bf16.mxu0 %v3075
    %3276 = vmatpush1.bf16.msra.mxu0 %v3074
    %3277 = vmatprep.subr.bf16.mxu0 %v3077
    %3278 = vmatpush1.bf16.msra.mxu0 %v3076
    %3279 = vmatprep.subr.bf16.mxu0 %v3079
    %3280 = vmatpush1.bf16.msra.mxu0 %v3078
    %3281 = vmatprep.subr.bf16.mxu0 %v3081
    %3282 = vmatpush1.bf16.msra.mxu0 %v3080
    %3283 = vmatprep.subr.bf16.mxu0 %v3083
    %3284 = vmatpush1.bf16.msra.mxu0 %v3082
    %3285 = vmatprep.subr.bf16.mxu0 %v3085
    %3286 = vmatpush1.bf16.msra.mxu0 %v3084
    %3287 = vmatprep.mubr.bf16.mxu0 %v2623
    %3288 = vmatmul.mubr.bf16.gmra.mrb[0].mxu0 %v2622
    %v3289 = vpop.f32.mrb[0].mxu0
    %v3290 = vadd.f32 %v3249, %v3289
    %v3291 = vpop.f32.mrb[0].mxu0
    %v3292 = vadd.f32 %v3251, %v3291
    %v3293 = vpop.f32.mrb[0].mxu0
    %v3294 = vpop.f32.mrb[0].mxu0
    %3295 = vdwg.mxu0
    %3296 = vmatprep.subr.bf16.mxu0 %v3087
    %3297 = vmatpush1.bf16.msra.mxu0 %v3086
    %3298 = vmatprep.subr.bf16.mxu0 %v3089
    %3299 = vmatpush1.bf16.msra.mxu0 %v3088
    %3300 = vmatprep.subr.bf16.mxu0 %v3091
    %3301 = vmatpush1.bf16.msra.mxu0 %v3090
    %3302 = vmatprep.subr.bf16.mxu0 %v3093
    %3303 = vmatpush1.bf16.msra.mxu0 %v3092
    %3304 = vmatprep.subr.bf16.mxu0 %v3095
    %3305 = vmatpush1.bf16.msra.mxu0 %v3094
    %3306 = vmatprep.subr.bf16.mxu0 %v3097
    %3307 = vmatpush1.bf16.msra.mxu0 %v3096
    %3308 = vmatprep.subr.bf16.mxu0 %v3099
    %3309 = vmatpush1.bf16.msra.mxu0 %v3098
    %3310 = vmatprep.subr.bf16.mxu0 %v3101
    %3311 = vmatpush1.bf16.msra.mxu0 %v3100
    %3312 = vmatprep.subr.bf16.mxu0 %v3103
    %3313 = vmatpush1.bf16.msra.mxu0 %v3102
    %3314 = vmatprep.subr.bf16.mxu0 %v3105
    %3315 = vmatpush1.bf16.msra.mxu0 %v3104
    %3316 = vmatprep.subr.bf16.mxu0 %v3107
    %3317 = vmatpush1.bf16.msra.mxu0 %v3106
    %3318 = vmatprep.subr.bf16.mxu0 %v3109
    %3319 = vmatpush1.bf16.msra.mxu0 %v3108
    %3320 = vmatprep.subr.bf16.mxu0 %v3111
    %3321 = vmatpush1.bf16.msra.mxu0 %v3110
    %3322 = vmatprep.subr.bf16.mxu0 %v3113
    %3323 = vmatpush1.bf16.msra.mxu0 %v3112
    %3324 = vmatprep.subr.bf16.mxu0 %v3115
    %3325 = vmatpush1.bf16.msra.mxu0 %v3114
    %3326 = vmatprep.subr.bf16.mxu0 %v3117
    %3327 = vmatpush1.bf16.msra.mxu0 %v3116
    %3328 = vmatprep.mubr.bf16.mxu0 %v2625
    %3329 = vmatmul.mubr.bf16.gmra.mrb[0].mxu0 %v2624
    %v3330 = vpop.f32.mrb[0].mxu0
    %v3331 = vadd.f32 %v3290, %v3330
    %v3332 = vpop.f32.mrb[0].mxu0
    %v3333 = vadd.f32 %v3292, %v3332
    %v3334 = vpop.f32.mrb[0].mxu0
    %v3335 = vpop.f32.mrb[0].mxu0
    %3336 = vdwg.mxu0
    %v3337 = vmax.f32 %v3333, -4.0
    %v3338 = vmin.f32 %v3337, 15.0
    %v3339 = vmul.f32 %v3338, 1.442695
    %v3340 = vpow.pop %v3339
    %v3341 = vmul.f32 %v3340, %v241
    %v3342 = vadd.f32 %v3331, %v3341
    %v3343 = vld [vmem:[#allocation16] sm:$0xff]
    %v3344 = vld [vmem:[#allocation16 + $0x8] sm:$0xff]
    %v3345 = vld [vmem:[#allocation16 + $0x10] sm:$0xff]
    %v3346 = vld [vmem:[#allocation16 + $0x18] sm:$0xff]
    %v3347 = vld [vmem:[#allocation16 + $0x20] sm:$0xff]
    %v3348 = vld [vmem:[#allocation16 + $0x28] sm:$0xff]
    %v3349 = vld [vmem:[#allocation16 + $0x30] sm:$0xff]
    %v3350 = vld [vmem:[#allocation16 + $0x38] sm:$0xff]
    %v3351 = vld [vmem:[#allocation16 + $0x40] sm:$0xff]
    %v3352 = vld [vmem:[#allocation16 + $0x48] sm:$0xff]
    %v3353 = vld [vmem:[#allocation16 + $0x50] sm:$0xff]
    %v3354 = vld [vmem:[#allocation16 + $0x58] sm:$0xff]
    %v3355 = vpack.c.bf16 %v3342, %v3342
    %v3356 = vld [vmem:[#allocation17] sm:$0xff]
    %v3357 = vld [vmem:[#allocation17 + $0x8] sm:$0xff]
    %v3358 = vld [vmem:[#allocation17 + $0x10] sm:$0xff]
    %v3359 = vld [vmem:[#allocation17 + $0x18] sm:$0xff]
    %v3360 = vld [vmem:[#allocation17 + $0x20] sm:$0xff]
    %v3361 = vld [vmem:[#allocation17 + $0x28] sm:$0xff]
    %v3362 = vld [vmem:[#allocation17 + $0x30] sm:$0xff]
    %v3363 = vld [vmem:[#allocation17 + $0x38] sm:$0xff]
    %v3364 = vld [vmem:[#allocation17 + $0x40] sm:$0xff]
    %v3365 = vld [vmem:[#allocation17 + $0x48] sm:$0xff]
    %v3366 = vld [vmem:[#allocation17 + $0x50] sm:$0xff]
    %v3367 = vld [vmem:[#allocation17 + $0x58] sm:$0xff]
    %v3368 = vld [vmem:[#allocation17 + $0x60] sm:$0xff]
    %v3369 = vld [vmem:[#allocation17 + $0x68] sm:$0xff]
    %v3370 = vld [vmem:[#allocation17 + $0x70] sm:$0xff]
    %v3371 = vld [vmem:[#allocation17 + $0x78] sm:$0xff]
    %v3372 = vld [vmem:[#allocation17 + $0x80] sm:$0xff]
    %v3373 = vld [vmem:[#allocation17 + $0x88] sm:$0xff]
    %v3374 = vld [vmem:[#allocation17 + $0x90] sm:$0xff]
    %v3375 = vld [vmem:[#allocation17 + $0x98] sm:$0xff]
    %v3376 = vld [vmem:[#allocation17 + $0xa0] sm:$0xff]
    %v3377 = vld [vmem:[#allocation17 + $0xa8] sm:$0xff]
    %v3378 = vld [vmem:[#allocation17 + $0xb0] sm:$0xff]
    %v3379 = vld [vmem:[#allocation17 + $0xb8] sm:$0xff]
    %v3380 = vld [vmem:[#allocation17 + $0xc0] sm:$0xff]
    %v3381 = vld [vmem:[#allocation17 + $0xc8] sm:$0xff]
    %v3382 = vld [vmem:[#allocation17 + $0xd0] sm:$0xff]
    %v3383 = vld [vmem:[#allocation17 + $0xd8] sm:$0xff]
    %v3384 = vld [vmem:[#allocation17 + $0xe0] sm:$0xff]
    %v3385 = vld [vmem:[#allocation17 + $0xe8] sm:$0xff]
    %v3386 = vld [vmem:[#allocation17 + $0xf0] sm:$0xff]
    %v3387 = vld [vmem:[#allocation17 + $0xf8] sm:$0xff]
    %v3388 = vld [vmem:[#allocation17 + $0x100] sm:$0xff]
    %v3389 = vld [vmem:[#allocation17 + $0x108] sm:$0xff]
    %v3390 = vld [vmem:[#allocation17 + $0x110] sm:$0xff]
    %v3391 = vld [vmem:[#allocation17 + $0x118] sm:$0xff]
    %v3392 = vld [vmem:[#allocation17 + $0x120] sm:$0xff]
    %v3393 = vld [vmem:[#allocation17 + $0x128] sm:$0xff]
    %v3394 = vld [vmem:[#allocation17 + $0x130] sm:$0xff]
    %v3395 = vld [vmem:[#allocation17 + $0x138] sm:$0xff]
    %v3396 = vld [vmem:[#allocation17 + $0x140] sm:$0xff]
    %v3397 = vld [vmem:[#allocation17 + $0x148] sm:$0xff]
    %v3398 = vld [vmem:[#allocation17 + $0x150] sm:$0xff]
    %v3399 = vld [vmem:[#allocation17 + $0x158] sm:$0xff]
    %v3400 = vld [vmem:[#allocation17 + $0x160] sm:$0xff]
    %v3401 = vld [vmem:[#allocation17 + $0x168] sm:$0xff]
    %v3402 = vld [vmem:[#allocation17 + $0x170] sm:$0xff]
    %v3403 = vld [vmem:[#allocation17 + $0x178] sm:$0xff]
    %v3452 = vunpack.c.l.b16 %v3356
    %v3453 = vunpack.c.h.b16 %v3356
    %v3454 = vunpack.c.l.b16 %v3357
    %v3455 = vunpack.c.h.b16 %v3357
    %v3456 = vunpack.c.l.b16 %v3358
    %v3457 = vunpack.c.h.b16 %v3358
    %v3458 = vunpack.c.l.b16 %v3359
    %v3459 = vunpack.c.h.b16 %v3359
    %v3460 = vunpack.c.l.b16 %v3360
    %v3461 = vunpack.c.h.b16 %v3360
    %v3462 = vunpack.c.l.b16 %v3361
    %v3463 = vunpack.c.h.b16 %v3361
    %v3464 = vunpack.c.l.b16 %v3362
    %v3465 = vunpack.c.h.b16 %v3362
    %v3466 = vunpack.c.l.b16 %v3363
    %v3467 = vunpack.c.h.b16 %v3363
    %v3468 = vunpack.c.l.b16 %v3364
    %v3469 = vunpack.c.h.b16 %v3364
    %v3470 = vunpack.c.l.b16 %v3365
    %v3471 = vunpack.c.h.b16 %v3365
    %v3472 = vunpack.c.l.b16 %v3366
    %v3473 = vunpack.c.h.b16 %v3366
    %v3474 = vunpack.c.l.b16 %v3367
    %v3475 = vunpack.c.h.b16 %v3367
    %v3476 = vunpack.c.l.b16 %v3368
    %v3477 = vunpack.c.h.b16 %v3368
    %v3478 = vunpack.c.l.b16 %v3369
    %v3479 = vunpack.c.h.b16 %v3369
    %v3480 = vunpack.c.l.b16 %v3370
    %v3481 = vunpack.c.h.b16 %v3370
    %v3482 = vunpack.c.l.b16 %v3371
    %v3483 = vunpack.c.h.b16 %v3371
    %v3484 = vunpack.c.l.b16 %v3372
    %v3485 = vunpack.c.h.b16 %v3372
    %v3486 = vunpack.c.l.b16 %v3373
    %v3487 = vunpack.c.h.b16 %v3373
    %v3488 = vunpack.c.l.b16 %v3374
    %v3489 = vunpack.c.h.b16 %v3374
    %v3490 = vunpack.c.l.b16 %v3375
    %v3491 = vunpack.c.h.b16 %v3375
    %v3492 = vunpack.c.l.b16 %v3376
    %v3493 = vunpack.c.h.b16 %v3376
    %v3494 = vunpack.c.l.b16 %v3377
    %v3495 = vunpack.c.h.b16 %v3377
    %v3496 = vunpack.c.l.b16 %v3378
    %v3497 = vunpack.c.h.b16 %v3378
    %v3498 = vunpack.c.l.b16 %v3379
    %v3499 = vunpack.c.h.b16 %v3379
    %v3500 = vunpack.c.l.b16 %v3380
    %v3501 = vunpack.c.h.b16 %v3380
    %v3502 = vunpack.c.l.b16 %v3381
    %v3503 = vunpack.c.h.b16 %v3381
    %v3504 = vunpack.c.l.b16 %v3382
    %v3505 = vunpack.c.h.b16 %v3382
    %v3506 = vunpack.c.l.b16 %v3383
    %v3507 = vunpack.c.h.b16 %v3383
    %v3508 = vunpack.c.l.b16 %v3384
    %v3509 = vunpack.c.h.b16 %v3384
    %v3510 = vunpack.c.l.b16 %v3385
    %v3511 = vunpack.c.h.b16 %v3385
    %v3512 = vunpack.c.l.b16 %v3386
    %v3513 = vunpack.c.h.b16 %v3386
    %v3514 = vunpack.c.l.b16 %v3387
    %v3515 = vunpack.c.h.b16 %v3387
    %v3516 = vunpack.c.l.b16 %v3388
    %v3517 = vunpack.c.h.b16 %v3388
    %v3518 = vunpack.c.l.b16 %v3389
    %v3519 = vunpack.c.h.b16 %v3389
    %v3520 = vunpack.c.l.b16 %v3390
    %v3521 = vunpack.c.h.b16 %v3390
    %v3522 = vunpack.c.l.b16 %v3391
    %v3523 = vunpack.c.h.b16 %v3391
    %v3524 = vunpack.c.l.b16 %v3392
    %v3525 = vunpack.c.h.b16 %v3392
    %v3526 = vunpack.c.l.b16 %v3393
    %v3527 = vunpack.c.h.b16 %v3393
    %v3528 = vunpack.c.l.b16 %v3394
    %v3529 = vunpack.c.h.b16 %v3394
    %v3530 = vunpack.c.l.b16 %v3395
    %v3531 = vunpack.c.h.b16 %v3395
    %v3532 = vunpack.c.l.b16 %v3396
    %v3533 = vunpack.c.h.b16 %v3396
    %v3534 = vunpack.c.l.b16 %v3397
    %v3535 = vunpack.c.h.b16 %v3397
    %v3536 = vunpack.c.l.b16 %v3398
    %v3537 = vunpack.c.h.b16 %v3398
    %v3538 = vunpack.c.l.b16 %v3399
    %v3539 = vunpack.c.h.b16 %v3399
    %v3540 = vunpack.c.l.b16 %v3400
    %v3541 = vunpack.c.h.b16 %v3400
    %v3542 = vunpack.c.l.b16 %v3401
    %v3543 = vunpack.c.h.b16 %v3401
    %v3544 = vunpack.c.l.b16 %v3402
    %v3545 = vunpack.c.h.b16 %v3402
    %v3546 = vunpack.c.l.b16 %v3403
    %v3547 = vunpack.c.h.b16 %v3403
    %v3548 = vpack.c.b16 %v3458, %v3452
    %v3549 = vpack.c.b16 %v3459, %v3453
    %v3550 = vpack.c.b16 %v3460, %v3454
    %v3551 = vpack.c.b16 %v3461, %v3455
    %v3552 = vpack.c.b16 %v3462, %v3456
    %v3553 = vpack.c.b16 %v3463, %v3457
    %v3554 = vpack.c.b16 %v3470, %v3464
    %v3555 = vpack.c.b16 %v3471, %v3465
    %v3556 = vpack.c.b16 %v3472, %v3466
    %v3557 = vpack.c.b16 %v3473, %v3467
    %v3558 = vpack.c.b16 %v3474, %v3468
    %v3559 = vpack.c.b16 %v3475, %v3469
    %v3560 = vpack.c.b16 %v3482, %v3476
    %v3561 = vpack.c.b16 %v3483, %v3477
    %v3562 = vpack.c.b16 %v3484, %v3478
    %v3563 = vpack.c.b16 %v3485, %v3479
    %v3564 = vpack.c.b16 %v3486, %v3480
    %v3565 = vpack.c.b16 %v3487, %v3481
    %v3566 = vpack.c.b16 %v3494, %v3488
    %v3567 = vpack.c.b16 %v3495, %v3489
    %v3568 = vpack.c.b16 %v3496, %v3490
    %v3569 = vpack.c.b16 %v3497, %v3491
    %v3570 = vpack.c.b16 %v3498, %v3492
    %v3571 = vpack.c.b16 %v3499, %v3493
    %v3572 = vpack.c.b16 %v3506, %v3500
    %v3573 = vpack.c.b16 %v3507, %v3501
    %v3574 = vpack.c.b16 %v3508, %v3502
    %v3575 = vpack.c.b16 %v3509, %v3503
    %v3576 = vpack.c.b16 %v3510, %v3504
    %v3577 = vpack.c.b16 %v3511, %v3505
    %v3578 = vpack.c.b16 %v3518, %v3512
    %v3579 = vpack.c.b16 %v3519, %v3513
    %v3580 = vpack.c.b16 %v3520, %v3514
    %v3581 = vpack.c.b16 %v3521, %v3515
    %v3582 = vpack.c.b16 %v3522, %v3516
    %v3583 = vpack.c.b16 %v3523, %v3517
    %v3584 = vpack.c.b16 %v3530, %v3524
    %v3585 = vpack.c.b16 %v3531, %v3525
    %v3586 = vpack.c.b16 %v3532, %v3526
    %v3587 = vpack.c.b16 %v3533, %v3527
    %v3588 = vpack.c.b16 %v3534, %v3528
    %v3589 = vpack.c.b16 %v3535, %v3529
    %v3590 = vpack.c.b16 %v3542, %v3536
    %v3591 = vpack.c.b16 %v3543, %v3537
    %v3592 = vpack.c.b16 %v3544, %v3538
    %v3593 = vpack.c.b16 %v3545, %v3539
    %v3594 = vpack.c.b16 %v3546, %v3540
    %v3595 = vpack.c.b16 %v3547, %v3541
    %3644 = vmatprep.subr.bf16.mxu0 %v3549
    %3645 = vmatpush1.bf16.msra.mxu0 %v3548
    %3646 = vmatprep.subr.bf16.mxu0 %v3555
    %3647 = vmatpush1.bf16.msra.mxu0 %v3554
    %3648 = vmatprep.subr.bf16.mxu0 %v3561
    %3649 = vmatpush1.bf16.msra.mxu0 %v3560
    %3650 = vmatprep.subr.bf16.mxu0 %v3567
    %3651 = vmatpush1.bf16.msra.mxu0 %v3566
    %3652 = vmatprep.subr.bf16.mxu0 %v3573
    %3653 = vmatpush1.bf16.msra.mxu0 %v3572
    %3654 = vmatprep.subr.bf16.mxu0 %v3579
    %3655 = vmatpush1.bf16.msra.mxu0 %v3578
    %3656 = vmatprep.subr.bf16.mxu0 %v3585
    %3657 = vmatpush1.bf16.msra.mxu0 %v3584
    %3658 = vmatprep.subr.bf16.mxu0 %v3591
    %3659 = vmatpush1.bf16.msra.mxu0 %v3590
    %3660 = vmatprep.subr.bf16.mxu0 0
    %3661 = vmatpush1.bf16.msra.mxu0 0
    %3662 = vmatprep.subr.bf16.mxu0 0
    %3663 = vmatpush1.bf16.msra.mxu0 0
    %3664 = vmatprep.subr.bf16.mxu0 0
    %3665 = vmatpush1.bf16.msra.mxu0 0
    %3666 = vmatprep.subr.bf16.mxu0 0
    %3667 = vmatpush1.bf16.msra.mxu0 0
    %3668 = vmatprep.subr.bf16.mxu0 0
    %3669 = vmatpush1.bf16.msra.mxu0 0
    %3670 = vmatprep.subr.bf16.mxu0 0
    %3671 = vmatpush1.bf16.msra.mxu0 0
    %3672 = vmatprep.subr.bf16.mxu0 0
    %3673 = vmatpush1.bf16.msra.mxu0 0
    %3674 = vmatprep.subr.bf16.mxu0 0
    %3675 = vmatpush1.bf16.msra.mxu0 0
    %3676 = vmatprep.mubr.bf16.mxu0 0
    %3677 = vmatmul.mubr.bf16.gmra.mrb[0].mxu0 %v3355
    %v3678 = vpop.f32.mrb[0].mxu0
    %v3679 = vadd.f32 0.0, %v3678
    %v3680 = vpop.f32.mrb[0].mxu0
    %v3681 = vadd.f32 0.0, %v3680
    %v3682 = vpop.f32.mrb[0].mxu0
    %v3683 = vpop.f32.mrb[0].mxu0
    %3684 = vdwg.mxu0
    %3685 = vmatprep.subr.bf16.mxu0 %v3551
    %3686 = vmatpush1.bf16.msra.mxu0 %v3550
    %3687 = vmatprep.subr.bf16.mxu0 %v3557
    %3688 = vmatpush1.bf16.msra.mxu0 %v3556
    %3689 = vmatprep.subr.bf16.mxu0 %v3563
    %3690 = vmatpush1.bf16.msra.mxu0 %v3562
    %3691 = vmatprep.subr.bf16.mxu0 %v3569
    %3692 = vmatpush1.bf16.msra.mxu0 %v3568
    %3693 = vmatprep.subr.bf16.mxu0 %v3575
    %3694 = vmatpush1.bf16.msra.mxu0 %v3574
    %3695 = vmatprep.subr.bf16.mxu0 %v3581
    %3696 = vmatpush1.bf16.msra.mxu0 %v3580
    %3697 = vmatprep.subr.bf16.mxu0 %v3587
    %3698 = vmatpush1.bf16.msra.mxu0 %v3586
    %3699 = vmatprep.subr.bf16.mxu0 %v3593
    %3700 = vmatpush1.bf16.msra.mxu0 %v3592
    %3701 = vmatprep.subr.bf16.mxu0 0
    %3702 = vmatpush1.bf16.msra.mxu0 0
    %3703 = vmatprep.subr.bf16.mxu0 0
    %3704 = vmatpush1.bf16.msra.mxu0 0
    %3705 = vmatprep.subr.bf16.mxu0 0
    %3706 = vmatpush1.bf16.msra.mxu0 0
    %3707 = vmatprep.subr.bf16.mxu0 0
    %3708 = vmatpush1.bf16.msra.mxu0 0
    %3709 = vmatprep.subr.bf16.mxu0 0
    %3710 = vmatpush1.bf16.msra.mxu0 0
    %3711 = vmatprep.subr.bf16.mxu0 0
    %3712 = vmatpush1.bf16.msra.mxu0 0
    %3713 = vmatprep.subr.bf16.mxu0 0
    %3714 = vmatpush1.bf16.msra.mxu0 0
    %3715 = vmatprep.subr.bf16.mxu0 0
    %3716 = vmatpush1.bf16.msra.mxu0 0
    %3717 = vmatprep.mubr.bf16.mxu0 0
    %3718 = vmatmul.mubr.bf16.gmra.mrb[0].mxu0 %v3355
    %v3719 = vpop.f32.mrb[0].mxu0
    %v3720 = vadd.f32 0.0, %v3719
    %v3721 = vpop.f32.mrb[0].mxu0
    %v3722 = vadd.f32 0.0, %v3721
    %v3723 = vpop.f32.mrb[0].mxu0
    %v3724 = vpop.f32.mrb[0].mxu0
    %3725 = vdwg.mxu0
    %3726 = vmatprep.subr.bf16.mxu0 %v3553
    %3727 = vmatpush1.bf16.msra.mxu0 %v3552
    %3728 = vmatprep.subr.bf16.mxu0 %v3559
    %3729 = vmatpush1.bf16.msra.mxu0 %v3558
    %3730 = vmatprep.subr.bf16.mxu0 %v3565
    %3731 = vmatpush1.bf16.msra.mxu0 %v3564
    %3732 = vmatprep.subr.bf16.mxu0 %v3571
    %3733 = vmatpush1.bf16.msra.mxu0 %v3570
    %3734 = vmatprep.subr.bf16.mxu0 %v3577
    %3735 = vmatpush1.bf16.msra.mxu0 %v3576
    %3736 = vmatprep.subr.bf16.mxu0 %v3583
    %3737 = vmatpush1.bf16.msra.mxu0 %v3582
    %3738 = vmatprep.subr.bf16.mxu0 %v3589
    %3739 = vmatpush1.bf16.msra.mxu0 %v3588
    %3740 = vmatprep.subr.bf16.mxu0 %v3595
    %3741 = vmatpush1.bf16.msra.mxu0 %v3594
    %3742 = vmatprep.subr.bf16.mxu0 0
    %3743 = vmatpush1.bf16.msra.mxu0 0
    %3744 = vmatprep.subr.bf16.mxu0 0
    %3745 = vmatpush1.bf16.msra.mxu0 0
    %3746 = vmatprep.subr.bf16.mxu0 0
    %3747 = vmatpush1.bf16.msra.mxu0 0
    %3748 = vmatprep.subr.bf16.mxu0 0
    %3749 = vmatpush1.bf16.msra.mxu0 0
    %3750 = vmatprep.subr.bf16.mxu0 0
    %3751 = vmatpush1.bf16.msra.mxu0 0
    %3752 = vmatprep.subr.bf16.mxu0 0
    %3753 = vmatpush1.bf16.msra.mxu0 0
    %3754 = vmatprep.subr.bf16.mxu0 0
    %3755 = vmatpush1.bf16.msra.mxu0 0
    %3756 = vmatprep.subr.bf16.mxu0 0
    %3757 = vmatpush1.bf16.msra.mxu0 0
    %3758 = vmatprep.mubr.bf16.mxu0 0
    %3759 = vmatmul.mubr.bf16.gmra.mrb[0].mxu0 %v3355
    %v3760 = vpop.f32.mrb[0].mxu0
    %v3761 = vadd.f32 0.0, %v3760
    %v3762 = vpop.f32.mrb[0].mxu0
    %v3763 = vadd.f32 0.0, %v3762
    %v3764 = vpop.f32.mrb[0].mxu0
    %v3765 = vpop.f32.mrb[0].mxu0
    %3766 = vdwg.mxu0
    %v3779 = vunpack.c.l.b16 %v3343
    %v3780 = vunpack.c.h.b16 %v3343
    %v3781 = vunpack.c.l.b16 %v3344
    %v3782 = vunpack.c.h.b16 %v3344
    %v3783 = vunpack.c.l.b16 %v3345
    %v3784 = vunpack.c.h.b16 %v3345
    %v3785 = vunpack.c.l.b16 %v3346
    %v3786 = vunpack.c.h.b16 %v3346
    %v3787 = vunpack.c.l.b16 %v3347
    %v3788 = vunpack.c.h.b16 %v3347
    %v3789 = vunpack.c.l.b16 %v3348
    %v3790 = vunpack.c.h.b16 %v3348
    %v3791 = vunpack.c.l.b16 %v3349
    %v3792 = vunpack.c.h.b16 %v3349
    %v3793 = vunpack.c.l.b16 %v3350
    %v3794 = vunpack.c.h.b16 %v3350
    %v3795 = vunpack.c.l.b16 %v3351
    %v3796 = vunpack.c.h.b16 %v3351
    %v3797 = vunpack.c.l.b16 %v3352
    %v3798 = vunpack.c.h.b16 %v3352
    %v3799 = vunpack.c.l.b16 %v3353
    %v3800 = vunpack.c.h.b16 %v3353
    %v3801 = vunpack.c.l.b16 %v3354
    %v3802 = vunpack.c.h.b16 %v3354
    %v3803 = vpack.c.b16 %v3785, %v3779
    %v3804 = vpack.c.b16 %v3786, %v3780
    %v3805 = vpack.c.b16 %v3787, %v3781
    %v3806 = vpack.c.b16 %v3788, %v3782
    %v3807 = vpack.c.b16 %v3789, %v3783
    %v3808 = vpack.c.b16 %v3790, %v3784
    %v3809 = vpack.c.b16 %v3797, %v3791
    %v3810 = vpack.c.b16 %v3798, %v3792
    %v3811 = vpack.c.b16 %v3799, %v3793
    %v3812 = vpack.c.b16 %v3800, %v3794
    %v3813 = vpack.c.b16 %v3801, %v3795
    %v3814 = vpack.c.b16 %v3802, %v3796
    %3827 = vmatprep.subr.bf16.mxu0 %v3804
    %3828 = vmatpush1.bf16.msra.mxu0 %v3803
    %3829 = vmatprep.subr.bf16.mxu0 %v3810
    %3830 = vmatpush1.bf16.msra.mxu0 %v3809
    %3831 = vmatprep.subr.bf16.mxu0 0
    %3832 = vmatpush1.bf16.msra.mxu0 0
    %3833 = vmatprep.subr.bf16.mxu0 0
    %3834 = vmatpush1.bf16.msra.mxu0 0
    %3835 = vmatprep.subr.bf16.mxu0 0
    %3836 = vmatpush1.bf16.msra.mxu0 0
    %3837 = vmatprep.subr.bf16.mxu0 0
    %3838 = vmatpush1.bf16.msra.mxu0 0
    %3839 = vmatprep.subr.bf16.mxu0 0
    %3840 = vmatpush1.bf16.msra.mxu0 0
    %3841 = vmatprep.subr.bf16.mxu0 0
    %3842 = vmatpush1.bf16.msra.mxu0 0
    %3843 = vmatprep.subr.bf16.mxu0 0
    %3844 = vmatpush1.bf16.msra.mxu0 0
    %3845 = vmatprep.subr.bf16.mxu0 0
    %3846 = vmatpush1.bf16.msra.mxu0 0
    %3847 = vmatprep.subr.bf16.mxu0 0
    %3848 = vmatpush1.bf16.msra.mxu0 0
    %3849 = vmatprep.subr.bf16.mxu0 0
    %3850 = vmatpush1.bf16.msra.mxu0 0
    %3851 = vmatprep.subr.bf16.mxu0 0
    %3852 = vmatpush1.bf16.msra.mxu0 0
    %3853 = vmatprep.subr.bf16.mxu0 0
    %3854 = vmatpush1.bf16.msra.mxu0 0
    %3855 = vmatprep.subr.bf16.mxu0 0
    %3856 = vmatpush1.bf16.msra.mxu0 0
    %3857 = vmatprep.subr.bf16.mxu0 0
    %3858 = vmatpush1.bf16.msra.mxu0 0
    %3859 = vmatprep.mubr.bf16.mxu0 0
    %3860 = vmatmul.mubr.bf16.gmra.mrb[0].mxu0 %v348
    %v3861 = vpop.f32.mrb[0].mxu0
    %v3862 = vadd.f32 %v3679, %v3861
    %v3863 = vpop.f32.mrb[0].mxu0
    %v3864 = vadd.f32 %v3681, %v3863
    %v3865 = vpop.f32.mrb[0].mxu0
    %v3866 = vpop.f32.mrb[0].mxu0
    %3867 = vdwg.mxu0
    %3868 = vmatprep.subr.bf16.mxu0 %v3806
    %3869 = vmatpush1.bf16.msra.mxu0 %v3805
    %3870 = vmatprep.subr.bf16.mxu0 %v3812
    %3871 = vmatpush1.bf16.msra.mxu0 %v3811
    %3872 = vmatprep.subr.bf16.mxu0 0
    %3873 = vmatpush1.bf16.msra.mxu0 0
    %3874 = vmatprep.subr.bf16.mxu0 0
    %3875 = vmatpush1.bf16.msra.mxu0 0
    %3876 = vmatprep.subr.bf16.mxu0 0
    %3877 = vmatpush1.bf16.msra.mxu0 0
    %3878 = vmatprep.subr.bf16.mxu0 0
    %3879 = vmatpush1.bf16.msra.mxu0 0
    %3880 = vmatprep.subr.bf16.mxu0 0
    %3881 = vmatpush1.bf16.msra.mxu0 0
    %3882 = vmatprep.subr.bf16.mxu0 0
    %3883 = vmatpush1.bf16.msra.mxu0 0
    %3884 = vmatprep.subr.bf16.mxu0 0
    %3885 = vmatpush1.bf16.msra.mxu0 0
    %3886 = vmatprep.subr.bf16.mxu0 0
    %3887 = vmatpush1.bf16.msra.mxu0 0
    %3888 = vmatprep.subr.bf16.mxu0 0
    %3889 = vmatpush1.bf16.msra.mxu0 0
    %3890 = vmatprep.subr.bf16.mxu0 0
    %3891 = vmatpush1.bf16.msra.mxu0 0
    %3892 = vmatprep.subr.bf16.mxu0 0
    %3893 = vmatpush1.bf16.msra.mxu0 0
    %3894 = vmatprep.subr.bf16.mxu0 0
    %3895 = vmatpush1.bf16.msra.mxu0 0
    %3896 = vmatprep.subr.bf16.mxu0 0
    %3897 = vmatpush1.bf16.msra.mxu0 0
    %3898 = vmatprep.subr.bf16.mxu0 0
    %3899 = vmatpush1.bf16.msra.mxu0 0
    %3900 = vmatprep.mubr.bf16.mxu0 0
    %3901 = vmatmul.mubr.bf16.gmra.mrb[0].mxu0 %v348
    %v3902 = vpop.f32.mrb[0].mxu0
    %v3903 = vadd.f32 %v3720, %v3902
    %v3904 = vpop.f32.mrb[0].mxu0
    %v3905 = vadd.f32 %v3722, %v3904
    %v3906 = vpop.f32.mrb[0].mxu0
    %v3907 = vpop.f32.mrb[0].mxu0
    %3908 = vdwg.mxu0
    %3909 = vmatprep.subr.bf16.mxu0 %v3808
    %3910 = vmatpush1.bf16.msra.mxu0 %v3807
    %3911 = vmatprep.subr.bf16.mxu0 %v3814
    %3912 = vmatpush1.bf16.msra.mxu0 %v3813
    %3913 = vmatprep.subr.bf16.mxu0 0
    %3914 = vmatpush1.bf16.msra.mxu0 0
    %3915 = vmatprep.subr.bf16.mxu0 0
    %3916 = vmatpush1.bf16.msra.mxu0 0
    %3917 = vmatprep.subr.bf16.mxu0 0
    %3918 = vmatpush1.bf16.msra.mxu0 0
    %3919 = vmatprep.subr.bf16.mxu0 0
    %3920 = vmatpush1.bf16.msra.mxu0 0
    %3921 = vmatprep.subr.bf16.mxu0 0
    %3922 = vmatpush1.bf16.msra.mxu0 0
    %3923 = vmatprep.subr.bf16.mxu0 0
    %3924 = vmatpush1.bf16.msra.mxu0 0
    %3925 = vmatprep.subr.bf16.mxu0 0
    %3926 = vmatpush1.bf16.msra.mxu0 0
    %3927 = vmatprep.subr.bf16.mxu0 0
    %3928 = vmatpush1.bf16.msra.mxu0 0
    %3929 = vmatprep.subr.bf16.mxu0 0
    %3930 = vmatpush1.bf16.msra.mxu0 0
    %3931 = vmatprep.subr.bf16.mxu0 0
    %3932 = vmatpush1.bf16.msra.mxu0 0
    %3933 = vmatprep.subr.bf16.mxu0 0
    %3934 = vmatpush1.bf16.msra.mxu0 0
    %3935 = vmatprep.subr.bf16.mxu0 0
    %3936 = vmatpush1.bf16.msra.mxu0 0
    %3937 = vmatprep.subr.bf16.mxu0 0
    %3938 = vmatpush1.bf16.msra.mxu0 0
    %3939 = vmatprep.subr.bf16.mxu0 0
    %3940 = vmatpush1.bf16.msra.mxu0 0
    %3941 = vmatprep.mubr.bf16.mxu0 0
    %3942 = vmatmul.mubr.bf16.gmra.mrb[0].mxu0 %v348
    %v3943 = vpop.f32.mrb[0].mxu0
    %v3944 = vadd.f32 %v3761, %v3943
    %v3945 = vpop.f32.mrb[0].mxu0
    %v3946 = vadd.f32 %v3763, %v3945
    %v3947 = vpop.f32.mrb[0].mxu0
    %v3948 = vpop.f32.mrb[0].mxu0
    %3949 = vdwg.mxu0
    %v3950 = vld [vmem:[#allocation19] sm:$0x3f]
    %v3952 = vlaneseq
    %v3953 = vshrl.u32 %v3952, 7
    %v3954 = vsub.s32 0, %v3953
    %v3955 = vrot.slane %v3950, %v3954
    %v3956 = vlaneseq
    %v3957 = vshrl.u32 %v3956, 7
    %v3958 = vsub.s32 1, %v3957
    %v3959 = vrot.slane %v3950, %v3958
    %v3960 = vlaneseq
    %v3961 = vshrl.u32 %v3960, 7
    %v3962 = vsub.s32 2, %v3961
    %v3963 = vrot.slane %v3950, %v3962
    %v3964 = vlaneseq
    %v3965 = vshrl.u32 %v3964, 7
    %v3966 = vsub.s32 3, %v3965
    %v3967 = vrot.slane %v3950, %v3966
    %v3968 = vlaneseq
    %v3969 = vshrl.u32 %v3968, 7
    %v3970 = vsub.s32 4, %v3969
    %v3971 = vrot.slane %v3950, %v3970
    %v3972 = vlaneseq
    %v3973 = vshrl.u32 %v3972, 7
    %v3974 = vsub.s32 5, %v3973
    %v3975 = vrot.slane %v3950, %v3974
    %v3982 = vadd.f32 %v3862, %v3955
    %v3983 = vadd.f32 %v3864, %v3959
    %v3984 = vadd.f32 %v3903, %v3963
    %v3985 = vadd.f32 %v3905, %v3967
    %v3986 = vadd.f32 %v3944, %v3971
    %v3987 = vadd.f32 %v3946, %v3975
    %v3988 = vmax.f32 %v3982, 0.0
    %v3989 = vmax.f32 %v3983, 0.0
    %v3990 = vmax.f32 %v3984, 0.0
    %v3991 = vmax.f32 %v3985, 0.0
    %v3992 = vmax.f32 %v3986, 0.0
    %v3993 = vmax.f32 %v3987, 0.0
    %v3994 = vpack.c.bf16 %v3988, %v3988
    %v3995 = vpack.c.bf16 %v3989, %v3989
    %v3996 = vpack.c.bf16 %v3990, %v3990
    %v3997 = vpack.c.bf16 %v3991, %v3991
    %v3998 = vpack.c.bf16 %v3992, %v3992
    %v3999 = vpack.c.bf16 %v3993, %v3993
    %v4000 = vld [vmem:[#allocation20] sm:$0xff]
    %v4001 = vld [vmem:[#allocation20 + $0x8] sm:$0xff]
    %v4002 = vld [vmem:[#allocation20 + $0x10] sm:$0xff]
    %v4003 = vld [vmem:[#allocation20 + $0x18] sm:$0xff]
    %v4004 = vld [vmem:[#allocation20 + $0x20] sm:$0xff]
    %v4005 = vld [vmem:[#allocation20 + $0x28] sm:$0xff]
    %v4006 = vld [vmem:[#allocation20 + $0x30] sm:$0xff]
    %v4007 = vld [vmem:[#allocation20 + $0x38] sm:$0xff]
    %v4008 = vld [vmem:[#allocation20 + $0x40] sm:$0xff]
    %v4009 = vld [vmem:[#allocation20 + $0x48] sm:$0xff]
    %v4010 = vld [vmem:[#allocation20 + $0x50] sm:$0xff]
    %v4011 = vld [vmem:[#allocation20 + $0x58] sm:$0xff]
    %v4012 = vld [vmem:[#allocation20 + $0x60] sm:$0xff]
    %v4013 = vld [vmem:[#allocation20 + $0x68] sm:$0xff]
    %v4014 = vld [vmem:[#allocation20 + $0x70] sm:$0xff]
    %v4015 = vld [vmem:[#allocation20 + $0x78] sm:$0xff]
    %v4016 = vld [vmem:[#allocation20 + $0x80] sm:$0xff]
    %v4017 = vld [vmem:[#allocation20 + $0x88] sm:$0xff]
    %v4018 = vld [vmem:[#allocation20 + $0x90] sm:$0xff]
    %v4019 = vld [vmem:[#allocation20 + $0x98] sm:$0xff]
    %v4020 = vld [vmem:[#allocation20 + $0xa0] sm:$0xff]
    %v4021 = vld [vmem:[#allocation20 + $0xa8] sm:$0xff]
    %v4022 = vld [vmem:[#allocation20 + $0xb0] sm:$0xff]
    %v4023 = vld [vmem:[#allocation20 + $0xb8] sm:$0xff]
    %v4024 = vld [vmem:[#allocation20 + $0xc0] sm:$0xff]
    %v4025 = vld [vmem:[#allocation20 + $0xc8] sm:$0xff]
    %v4026 = vld [vmem:[#allocation20 + $0xd0] sm:$0xff]
    %v4027 = vld [vmem:[#allocation20 + $0xd8] sm:$0xff]
    %v4028 = vld [vmem:[#allocation20 + $0xe0] sm:$0xff]
    %v4029 = vld [vmem:[#allocation20 + $0xe8] sm:$0xff]
    %v4030 = vld [vmem:[#allocation20 + $0xf0] sm:$0xff]
    %v4031 = vld [vmem:[#allocation20 + $0xf8] sm:$0xff]
    %v4032 = vld [vmem:[#allocation20 + $0x100] sm:$0xff]
    %v4033 = vld [vmem:[#allocation20 + $0x108] sm:$0xff]
    %v4034 = vld [vmem:[#allocation20 + $0x110] sm:$0xff]
    %v4035 = vld [vmem:[#allocation20 + $0x118] sm:$0xff]
    %v4036 = vld [vmem:[#allocation20 + $0x120] sm:$0xff]
    %v4037 = vld [vmem:[#allocation20 + $0x128] sm:$0xff]
    %v4038 = vld [vmem:[#allocation20 + $0x130] sm:$0xff]
    %v4039 = vld [vmem:[#allocation20 + $0x138] sm:$0xff]
    %v4040 = vld [vmem:[#allocation20 + $0x140] sm:$0xff]
    %v4041 = vld [vmem:[#allocation20 + $0x148] sm:$0xff]
    %v4042 = vld [vmem:[#allocation20 + $0x150] sm:$0xff]
    %v4043 = vld [vmem:[#allocation20 + $0x158] sm:$0xff]
    %v4044 = vld [vmem:[#allocation20 + $0x160] sm:$0xff]
    %v4045 = vld [vmem:[#allocation20 + $0x168] sm:$0xff]
    %v4046 = vld [vmem:[#allocation20 + $0x170] sm:$0xff]
    %v4047 = vld [vmem:[#allocation20 + $0x178] sm:$0xff]
    %v4048 = vld [vmem:[#allocation20 + $0x180] sm:$0xff]
    %v4049 = vld [vmem:[#allocation20 + $0x188] sm:$0xff]
    %v4050 = vld [vmem:[#allocation20 + $0x190] sm:$0xff]
    %v4051 = vld [vmem:[#allocation20 + $0x198] sm:$0xff]
    %v4052 = vld [vmem:[#allocation20 + $0x1a0] sm:$0xff]
    %v4053 = vld [vmem:[#allocation20 + $0x1a8] sm:$0xff]
    %v4054 = vld [vmem:[#allocation20 + $0x1b0] sm:$0xff]
    %v4055 = vld [vmem:[#allocation20 + $0x1b8] sm:$0xff]
    %v4056 = vld [vmem:[#allocation20 + $0x1c0] sm:$0xff]
    %v4057 = vld [vmem:[#allocation20 + $0x1c8] sm:$0xff]
    %v4058 = vld [vmem:[#allocation20 + $0x1d0] sm:$0xff]
    %v4059 = vld [vmem:[#allocation20 + $0x1d8] sm:$0xff]
    %v4060 = vld [vmem:[#allocation20 + $0x1e0] sm:$0xff]
    %v4061 = vld [vmem:[#allocation20 + $0x1e8] sm:$0xff]
    %v4062 = vld [vmem:[#allocation20 + $0x1f0] sm:$0xff]
    %v4063 = vld [vmem:[#allocation20 + $0x1f8] sm:$0xff]
    %v4064 = vld [vmem:[#allocation20 + $0x200] sm:$0xff]
    %v4065 = vld [vmem:[#allocation20 + $0x208] sm:$0xff]
    %v4066 = vld [vmem:[#allocation20 + $0x210] sm:$0xff]
    %v4067 = vld [vmem:[#allocation20 + $0x218] sm:$0xff]
    %v4068 = vld [vmem:[#allocation20 + $0x220] sm:$0xff]
    %v4069 = vld [vmem:[#allocation20 + $0x228] sm:$0xff]
    %v4070 = vld [vmem:[#allocation20 + $0x230] sm:$0xff]
    %v4071 = vld [vmem:[#allocation20 + $0x238] sm:$0xff]
    %v4072 = vld [vmem:[#allocation20 + $0x240] sm:$0xff]
    %v4073 = vld [vmem:[#allocation20 + $0x248] sm:$0xff]
    %v4074 = vld [vmem:[#allocation20 + $0x250] sm:$0xff]
    %v4075 = vld [vmem:[#allocation20 + $0x258] sm:$0xff]
    %v4076 = vld [vmem:[#allocation20 + $0x260] sm:$0xff]
    %v4077 = vld [vmem:[#allocation20 + $0x268] sm:$0xff]
    %v4078 = vld [vmem:[#allocation20 + $0x270] sm:$0xff]
    %v4079 = vld [vmem:[#allocation20 + $0x278] sm:$0xff]
    %v4080 = vld [vmem:[#allocation20 + $0x280] sm:$0xff]
    %v4081 = vld [vmem:[#allocation20 + $0x288] sm:$0xff]
    %v4082 = vld [vmem:[#allocation20 + $0x290] sm:$0xff]
    %v4083 = vld [vmem:[#allocation20 + $0x298] sm:$0xff]
    %v4084 = vld [vmem:[#allocation20 + $0x2a0] sm:$0xff]
    %v4085 = vld [vmem:[#allocation20 + $0x2a8] sm:$0xff]
    %v4086 = vld [vmem:[#allocation20 + $0x2b0] sm:$0xff]
    %v4087 = vld [vmem:[#allocation20 + $0x2b8] sm:$0xff]
    %v4088 = vld [vmem:[#allocation20 + $0x2c0] sm:$0xff]
    %v4089 = vld [vmem:[#allocation20 + $0x2c8] sm:$0xff]
    %v4090 = vld [vmem:[#allocation20 + $0x2d0] sm:$0xff]
    %v4091 = vld [vmem:[#allocation20 + $0x2d8] sm:$0xff]
    %v4092 = vld [vmem:[#allocation20 + $0x2e0] sm:$0xff]
    %v4093 = vld [vmem:[#allocation20 + $0x2e8] sm:$0xff]
    %v4094 = vld [vmem:[#allocation20 + $0x2f0] sm:$0xff]
    %v4095 = vld [vmem:[#allocation20 + $0x2f8] sm:$0xff]
    %v4096 = vld [vmem:[#allocation20 + $0x300] sm:$0xff]
    %v4097 = vld [vmem:[#allocation20 + $0x308] sm:$0xff]
    %v4098 = vld [vmem:[#allocation20 + $0x310] sm:$0xff]
    %v4099 = vld [vmem:[#allocation20 + $0x318] sm:$0xff]
    %v4100 = vld [vmem:[#allocation20 + $0x320] sm:$0xff]
    %v4101 = vld [vmem:[#allocation20 + $0x328] sm:$0xff]
    %v4102 = vld [vmem:[#allocation20 + $0x330] sm:$0xff]
    %v4103 = vld [vmem:[#allocation20 + $0x338] sm:$0xff]
    %v4104 = vld [vmem:[#allocation20 + $0x340] sm:$0xff]
    %v4105 = vld [vmem:[#allocation20 + $0x348] sm:$0xff]
    %v4106 = vld [vmem:[#allocation20 + $0x350] sm:$0xff]
    %v4107 = vld [vmem:[#allocation20 + $0x358] sm:$0xff]
    %v4108 = vld [vmem:[#allocation20 + $0x360] sm:$0xff]
    %v4109 = vld [vmem:[#allocation20 + $0x368] sm:$0xff]
    %v4110 = vld [vmem:[#allocation20 + $0x370] sm:$0xff]
    %v4111 = vld [vmem:[#allocation20 + $0x378] sm:$0xff]
    %v4112 = vld [vmem:[#allocation20 + $0x380] sm:$0xff]
    %v4113 = vld [vmem:[#allocation20 + $0x388] sm:$0xff]
    %v4114 = vld [vmem:[#allocation20 + $0x390] sm:$0xff]
    %v4115 = vld [vmem:[#allocation20 + $0x398] sm:$0xff]
    %v4116 = vld [vmem:[#allocation20 + $0x3a0] sm:$0xff]
    %v4117 = vld [vmem:[#allocation20 + $0x3a8] sm:$0xff]
    %v4118 = vld [vmem:[#allocation20 + $0x3b0] sm:$0xff]
    %v4119 = vld [vmem:[#allocation20 + $0x3b8] sm:$0xff]
    %v4120 = vld [vmem:[#allocation20 + $0x3c0] sm:$0xff]
    %v4121 = vld [vmem:[#allocation20 + $0x3c8] sm:$0xff]
    %v4122 = vld [vmem:[#allocation20 + $0x3d0] sm:$0xff]
    %v4123 = vld [vmem:[#allocation20 + $0x3d8] sm:$0xff]
    %v4124 = vld [vmem:[#allocation20 + $0x3e0] sm:$0xff]
    %v4125 = vld [vmem:[#allocation20 + $0x3e8] sm:$0xff]
    %v4126 = vld [vmem:[#allocation20 + $0x3f0] sm:$0xff]
    %v4127 = vld [vmem:[#allocation20 + $0x3f8] sm:$0xff]
    %v4128 = vld [vmem:[#allocation20 + $0x400] sm:$0xff]
    %v4129 = vld [vmem:[#allocation20 + $0x408] sm:$0xff]
    %v4130 = vld [vmem:[#allocation20 + $0x410] sm:$0xff]
    %v4131 = vld [vmem:[#allocation20 + $0x418] sm:$0xff]
    %v4132 = vld [vmem:[#allocation20 + $0x420] sm:$0xff]
    %v4133 = vld [vmem:[#allocation20 + $0x428] sm:$0xff]
    %v4134 = vld [vmem:[#allocation20 + $0x430] sm:$0xff]
    %v4135 = vld [vmem:[#allocation20 + $0x438] sm:$0xff]
    %v4136 = vld [vmem:[#allocation20 + $0x440] sm:$0xff]
    %v4137 = vld [vmem:[#allocation20 + $0x448] sm:$0xff]
    %v4138 = vld [vmem:[#allocation20 + $0x450] sm:$0xff]
    %v4139 = vld [vmem:[#allocation20 + $0x458] sm:$0xff]
    %v4140 = vld [vmem:[#allocation20 + $0x460] sm:$0xff]
    %v4141 = vld [vmem:[#allocation20 + $0x468] sm:$0xff]
    %v4142 = vld [vmem:[#allocation20 + $0x470] sm:$0xff]
    %v4143 = vld [vmem:[#allocation20 + $0x478] sm:$0xff]
    %v4144 = vld [vmem:[#allocation20 + $0x480] sm:$0xff]
    %v4145 = vld [vmem:[#allocation20 + $0x488] sm:$0xff]
    %v4146 = vld [vmem:[#allocation20 + $0x490] sm:$0xff]
    %v4147 = vld [vmem:[#allocation20 + $0x498] sm:$0xff]
    %v4148 = vld [vmem:[#allocation20 + $0x4a0] sm:$0xff]
    %v4149 = vld [vmem:[#allocation20 + $0x4a8] sm:$0xff]
    %v4150 = vld [vmem:[#allocation20 + $0x4b0] sm:$0xff]
    %v4151 = vld [vmem:[#allocation20 + $0x4b8] sm:$0xff]
    %v4152 = vld [vmem:[#allocation20 + $0x4c0] sm:$0xff]
    %v4153 = vld [vmem:[#allocation20 + $0x4c8] sm:$0xff]
    %v4154 = vld [vmem:[#allocation20 + $0x4d0] sm:$0xff]
    %v4155 = vld [vmem:[#allocation20 + $0x4d8] sm:$0xff]
    %v4156 = vld [vmem:[#allocation20 + $0x4e0] sm:$0xff]
    %v4157 = vld [vmem:[#allocation20 + $0x4e8] sm:$0xff]
    %v4158 = vld [vmem:[#allocation20 + $0x4f0] sm:$0xff]
    %v4159 = vld [vmem:[#allocation20 + $0x4f8] sm:$0xff]
    %v4160 = vld [vmem:[#allocation20 + $0x500] sm:$0xff]
    %v4161 = vld [vmem:[#allocation20 + $0x508] sm:$0xff]
    %v4162 = vld [vmem:[#allocation20 + $0x510] sm:$0xff]
    %v4163 = vld [vmem:[#allocation20 + $0x518] sm:$0xff]
    %v4164 = vld [vmem:[#allocation20 + $0x520] sm:$0xff]
    %v4165 = vld [vmem:[#allocation20 + $0x528] sm:$0xff]
    %v4166 = vld [vmem:[#allocation20 + $0x530] sm:$0xff]
    %v4167 = vld [vmem:[#allocation20 + $0x538] sm:$0xff]
    %v4168 = vld [vmem:[#allocation20 + $0x540] sm:$0xff]
    %v4169 = vld [vmem:[#allocation20 + $0x548] sm:$0xff]
    %v4170 = vld [vmem:[#allocation20 + $0x550] sm:$0xff]
    %v4171 = vld [vmem:[#allocation20 + $0x558] sm:$0xff]
    %v4172 = vld [vmem:[#allocation20 + $0x560] sm:$0xff]
    %v4173 = vld [vmem:[#allocation20 + $0x568] sm:$0xff]
    %v4174 = vld [vmem:[#allocation20 + $0x570] sm:$0xff]
    %v4175 = vld [vmem:[#allocation20 + $0x578] sm:$0xff]
    %v4176 = vld [vmem:[#allocation20 + $0x580] sm:$0xff]
    %v4177 = vld [vmem:[#allocation20 + $0x588] sm:$0xff]
    %v4178 = vld [vmem:[#allocation20 + $0x590] sm:$0xff]
    %v4179 = vld [vmem:[#allocation20 + $0x598] sm:$0xff]
    %v4180 = vld [vmem:[#allocation20 + $0x5a0] sm:$0xff]
    %v4181 = vld [vmem:[#allocation20 + $0x5a8] sm:$0xff]
    %v4182 = vld [vmem:[#allocation20 + $0x5b0] sm:$0xff]
    %v4183 = vld [vmem:[#allocation20 + $0x5b8] sm:$0xff]
    %v4184 = vld [vmem:[#allocation20 + $0x5c0] sm:$0xff]
    %v4185 = vld [vmem:[#allocation20 + $0x5c8] sm:$0xff]
    %v4186 = vld [vmem:[#allocation20 + $0x5d0] sm:$0xff]
    %v4187 = vld [vmem:[#allocation20 + $0x5d8] sm:$0xff]
    %v4188 = vld [vmem:[#allocation20 + $0x5e0] sm:$0xff]
    %v4189 = vld [vmem:[#allocation20 + $0x5e8] sm:$0xff]
    %v4190 = vld [vmem:[#allocation20 + $0x5f0] sm:$0xff]
    %v4191 = vld [vmem:[#allocation20 + $0x5f8] sm:$0xff]
    %v4192 = vld [vmem:[#allocation20 + $0x600] sm:$0xff]
    %v4193 = vld [vmem:[#allocation20 + $0x608] sm:$0xff]
    %v4194 = vld [vmem:[#allocation20 + $0x610] sm:$0xff]
    %v4195 = vld [vmem:[#allocation20 + $0x618] sm:$0xff]
    %v4196 = vld [vmem:[#allocation20 + $0x620] sm:$0xff]
    %v4197 = vld [vmem:[#allocation20 + $0x628] sm:$0xff]
    %v4198 = vld [vmem:[#allocation20 + $0x630] sm:$0xff]
    %v4199 = vld [vmem:[#allocation20 + $0x638] sm:$0xff]
    %v4200 = vld [vmem:[#allocation20 + $0x640] sm:$0xff]
    %v4201 = vld [vmem:[#allocation20 + $0x648] sm:$0xff]
    %v4202 = vld [vmem:[#allocation20 + $0x650] sm:$0xff]
    %v4203 = vld [vmem:[#allocation20 + $0x658] sm:$0xff]
    %v4204 = vld [vmem:[#allocation20 + $0x660] sm:$0xff]
    %v4205 = vld [vmem:[#allocation20 + $0x668] sm:$0xff]
    %v4206 = vld [vmem:[#allocation20 + $0x670] sm:$0xff]
    %v4207 = vld [vmem:[#allocation20 + $0x678] sm:$0xff]
    %v4208 = vld [vmem:[#allocation20 + $0x680] sm:$0xff]
    %v4209 = vld [vmem:[#allocation20 + $0x688] sm:$0xff]
    %v4210 = vld [vmem:[#allocation20 + $0x690] sm:$0xff]
    %v4211 = vld [vmem:[#allocation20 + $0x698] sm:$0xff]
    %v4212 = vld [vmem:[#allocation20 + $0x6a0] sm:$0xff]
    %v4213 = vld [vmem:[#allocation20 + $0x6a8] sm:$0xff]
    %v4214 = vld [vmem:[#allocation20 + $0x6b0] sm:$0xff]
    %v4215 = vld [vmem:[#allocation20 + $0x6b8] sm:$0xff]
    %v4216 = vld [vmem:[#allocation20 + $0x6c0] sm:$0xff]
    %v4217 = vld [vmem:[#allocation20 + $0x6c8] sm:$0xff]
    %v4218 = vld [vmem:[#allocation20 + $0x6d0] sm:$0xff]
    %v4219 = vld [vmem:[#allocation20 + $0x6d8] sm:$0xff]
    %v4220 = vld [vmem:[#allocation20 + $0x6e0] sm:$0xff]
    %v4221 = vld [vmem:[#allocation20 + $0x6e8] sm:$0xff]
    %v4222 = vld [vmem:[#allocation20 + $0x6f0] sm:$0xff]
    %v4223 = vld [vmem:[#allocation20 + $0x6f8] sm:$0xff]
    %v4224 = vld [vmem:[#allocation20 + $0x700] sm:$0xff]
    %v4225 = vld [vmem:[#allocation20 + $0x708] sm:$0xff]
    %v4226 = vld [vmem:[#allocation20 + $0x710] sm:$0xff]
    %v4227 = vld [vmem:[#allocation20 + $0x718] sm:$0xff]
    %v4228 = vld [vmem:[#allocation20 + $0x720] sm:$0xff]
    %v4229 = vld [vmem:[#allocation20 + $0x728] sm:$0xff]
    %v4230 = vld [vmem:[#allocation20 + $0x730] sm:$0xff]
    %v4231 = vld [vmem:[#allocation20 + $0x738] sm:$0xff]
    %v4232 = vld [vmem:[#allocation20 + $0x740] sm:$0xff]
    %v4233 = vld [vmem:[#allocation20 + $0x748] sm:$0xff]
    %v4234 = vld [vmem:[#allocation20 + $0x750] sm:$0xff]
    %v4235 = vld [vmem:[#allocation20 + $0x758] sm:$0xff]
    %v4236 = vld [vmem:[#allocation20 + $0x760] sm:$0xff]
    %v4237 = vld [vmem:[#allocation20 + $0x768] sm:$0xff]
    %v4238 = vld [vmem:[#allocation20 + $0x770] sm:$0xff]
    %v4239 = vld [vmem:[#allocation20 + $0x778] sm:$0xff]
    %v4240 = vld [vmem:[#allocation20 + $0x780] sm:$0xff]
    %v4241 = vld [vmem:[#allocation20 + $0x788] sm:$0xff]
    %v4242 = vld [vmem:[#allocation20 + $0x790] sm:$0xff]
    %v4243 = vld [vmem:[#allocation20 + $0x798] sm:$0xff]
    %v4244 = vld [vmem:[#allocation20 + $0x7a0] sm:$0xff]
    %v4245 = vld [vmem:[#allocation20 + $0x7a8] sm:$0xff]
    %v4246 = vld [vmem:[#allocation20 + $0x7b0] sm:$0xff]
    %v4247 = vld [vmem:[#allocation20 + $0x7b8] sm:$0xff]
    %v4248 = vld [vmem:[#allocation20 + $0x7c0] sm:$0xff]
    %v4249 = vld [vmem:[#allocation20 + $0x7c8] sm:$0xff]
    %v4250 = vld [vmem:[#allocation20 + $0x7d0] sm:$0xff]
    %v4251 = vld [vmem:[#allocation20 + $0x7d8] sm:$0xff]
    %v4252 = vld [vmem:[#allocation20 + $0x7e0] sm:$0xff]
    %v4253 = vld [vmem:[#allocation20 + $0x7e8] sm:$0xff]
    %v4254 = vld [vmem:[#allocation20 + $0x7f0] sm:$0xff]
    %v4255 = vld [vmem:[#allocation20 + $0x7f8] sm:$0xff]
    %v4256 = vld [vmem:[#allocation20 + $0x800] sm:$0xff]
    %v4257 = vld [vmem:[#allocation20 + $0x808] sm:$0xff]
    %v4258 = vld [vmem:[#allocation20 + $0x810] sm:$0xff]
    %v4259 = vld [vmem:[#allocation20 + $0x818] sm:$0xff]
    %v4260 = vld [vmem:[#allocation20 + $0x820] sm:$0xff]
    %v4261 = vld [vmem:[#allocation20 + $0x828] sm:$0xff]
    %v4262 = vld [vmem:[#allocation20 + $0x830] sm:$0xff]
    %v4263 = vld [vmem:[#allocation20 + $0x838] sm:$0xff]
    %v4264 = vld [vmem:[#allocation20 + $0x840] sm:$0xff]
    %v4265 = vld [vmem:[#allocation20 + $0x848] sm:$0xff]
    %v4266 = vld [vmem:[#allocation20 + $0x850] sm:$0xff]
    %v4267 = vld [vmem:[#allocation20 + $0x858] sm:$0xff]
    %v4268 = vld [vmem:[#allocation20 + $0x860] sm:$0xff]
    %v4269 = vld [vmem:[#allocation20 + $0x868] sm:$0xff]
    %v4270 = vld [vmem:[#allocation20 + $0x870] sm:$0xff]
    %v4271 = vld [vmem:[#allocation20 + $0x878] sm:$0xff]
    %v4272 = vld [vmem:[#allocation20 + $0x880] sm:$0xff]
    %v4273 = vld [vmem:[#allocation20 + $0x888] sm:$0xff]
    %v4274 = vld [vmem:[#allocation20 + $0x890] sm:$0xff]
    %v4275 = vld [vmem:[#allocation20 + $0x898] sm:$0xff]
    %v4276 = vld [vmem:[#allocation20 + $0x8a0] sm:$0xff]
    %v4277 = vld [vmem:[#allocation20 + $0x8a8] sm:$0xff]
    %v4278 = vld [vmem:[#allocation20 + $0x8b0] sm:$0xff]
    %v4279 = vld [vmem:[#allocation20 + $0x8b8] sm:$0xff]
    %v4280 = vld [vmem:[#allocation20 + $0x8c0] sm:$0xff]
    %v4281 = vld [vmem:[#allocation20 + $0x8c8] sm:$0xff]
    %v4282 = vld [vmem:[#allocation20 + $0x8d0] sm:$0xff]
    %v4283 = vld [vmem:[#allocation20 + $0x8d8] sm:$0xff]
    %v4284 = vld [vmem:[#allocation20 + $0x8e0] sm:$0xff]
    %v4285 = vld [vmem:[#allocation20 + $0x8e8] sm:$0xff]
    %v4286 = vld [vmem:[#allocation20 + $0x8f0] sm:$0xff]
    %v4287 = vld [vmem:[#allocation20 + $0x8f8] sm:$0xff]
    %v4288 = vld [vmem:[#allocation22] sm:$0x3f]
    %v4290 = vlaneseq
    %v4291 = vshrl.u32 %v4290, 7
    %v4292 = vsub.s32 0, %v4291
    %v4293 = vrot.slane %v4288, %v4292
    %v4294 = vlaneseq
    %v4295 = vshrl.u32 %v4294, 7
    %v4296 = vsub.s32 1, %v4295
    %v4297 = vrot.slane %v4288, %v4296
    %v4298 = vlaneseq
    %v4299 = vshrl.u32 %v4298, 7
    %v4300 = vsub.s32 2, %v4299
    %v4301 = vrot.slane %v4288, %v4300
    %v4302 = vlaneseq
    %v4303 = vshrl.u32 %v4302, 7
    %v4304 = vsub.s32 3, %v4303
    %v4305 = vrot.slane %v4288, %v4304
    %v4306 = vlaneseq
    %v4307 = vshrl.u32 %v4306, 7
    %v4308 = vsub.s32 4, %v4307
    %v4309 = vrot.slane %v4288, %v4308
    %v4310 = vlaneseq
    %v4311 = vshrl.u32 %v4310, 7
    %v4312 = vsub.s32 5, %v4311
    %v4313 = vrot.slane %v4288, %v4312
    %v4608 = vunpack.c.l.b16 %v4000
    %v4609 = vunpack.c.h.b16 %v4000
    %v4610 = vunpack.c.l.b16 %v4001
    %v4611 = vunpack.c.h.b16 %v4001
    %v4612 = vunpack.c.l.b16 %v4002
    %v4613 = vunpack.c.h.b16 %v4002
    %v4614 = vunpack.c.l.b16 %v4003
    %v4615 = vunpack.c.h.b16 %v4003
    %v4616 = vunpack.c.l.b16 %v4004
    %v4617 = vunpack.c.h.b16 %v4004
    %v4618 = vunpack.c.l.b16 %v4005
    %v4619 = vunpack.c.h.b16 %v4005
    %v4620 = vunpack.c.l.b16 %v4006
    %v4621 = vunpack.c.h.b16 %v4006
    %v4622 = vunpack.c.l.b16 %v4007
    %v4623 = vunpack.c.h.b16 %v4007
    %v4624 = vunpack.c.l.b16 %v4008
    %v4625 = vunpack.c.h.b16 %v4008
    %v4626 = vunpack.c.l.b16 %v4009
    %v4627 = vunpack.c.h.b16 %v4009
    %v4628 = vunpack.c.l.b16 %v4010
    %v4629 = vunpack.c.h.b16 %v4010
    %v4630 = vunpack.c.l.b16 %v4011
    %v4631 = vunpack.c.h.b16 %v4011
    %v4632 = vunpack.c.l.b16 %v4012
    %v4633 = vunpack.c.h.b16 %v4012
    %v4634 = vunpack.c.l.b16 %v4013
    %v4635 = vunpack.c.h.b16 %v4013
    %v4636 = vunpack.c.l.b16 %v4014
    %v4637 = vunpack.c.h.b16 %v4014
    %v4638 = vunpack.c.l.b16 %v4015
    %v4639 = vunpack.c.h.b16 %v4015
    %v4640 = vunpack.c.l.b16 %v4016
    %v4641 = vunpack.c.h.b16 %v4016
    %v4642 = vunpack.c.l.b16 %v4017
    %v4643 = vunpack.c.h.b16 %v4017
    %v4644 = vunpack.c.l.b16 %v4018
    %v4645 = vunpack.c.h.b16 %v4018
    %v4646 = vunpack.c.l.b16 %v4019
    %v4647 = vunpack.c.h.b16 %v4019
    %v4648 = vunpack.c.l.b16 %v4020
    %v4649 = vunpack.c.h.b16 %v4020
    %v4650 = vunpack.c.l.b16 %v4021
    %v4651 = vunpack.c.h.b16 %v4021
    %v4652 = vunpack.c.l.b16 %v4022
    %v4653 = vunpack.c.h.b16 %v4022
    %v4654 = vunpack.c.l.b16 %v4023
    %v4655 = vunpack.c.h.b16 %v4023
    %v4656 = vunpack.c.l.b16 %v4024
    %v4657 = vunpack.c.h.b16 %v4024
    %v4658 = vunpack.c.l.b16 %v4025
    %v4659 = vunpack.c.h.b16 %v4025
    %v4660 = vunpack.c.l.b16 %v4026
    %v4661 = vunpack.c.h.b16 %v4026
    %v4662 = vunpack.c.l.b16 %v4027
    %v4663 = vunpack.c.h.b16 %v4027
    %v4664 = vunpack.c.l.b16 %v4028
    %v4665 = vunpack.c.h.b16 %v4028
    %v4666 = vunpack.c.l.b16 %v4029
    %v4667 = vunpack.c.h.b16 %v4029
    %v4668 = vunpack.c.l.b16 %v4030
    %v4669 = vunpack.c.h.b16 %v4030
    %v4670 = vunpack.c.l.b16 %v4031
    %v4671 = vunpack.c.h.b16 %v4031
    %v4672 = vunpack.c.l.b16 %v4032
    %v4673 = vunpack.c.h.b16 %v4032
    %v4674 = vunpack.c.l.b16 %v4033
    %v4675 = vunpack.c.h.b16 %v4033
    %v4676 = vunpack.c.l.b16 %v4034
    %v4677 = vunpack.c.h.b16 %v4034
    %v4678 = vunpack.c.l.b16 %v4035
    %v4679 = vunpack.c.h.b16 %v4035
    %v4680 = vunpack.c.l.b16 %v4036
    %v4681 = vunpack.c.h.b16 %v4036
    %v4682 = vunpack.c.l.b16 %v4037
    %v4683 = vunpack.c.h.b16 %v4037
    %v4684 = vunpack.c.l.b16 %v4038
    %v4685 = vunpack.c.h.b16 %v4038
    %v4686 = vunpack.c.l.b16 %v4039
    %v4687 = vunpack.c.h.b16 %v4039
    %v4688 = vunpack.c.l.b16 %v4040
    %v4689 = vunpack.c.h.b16 %v4040
    %v4690 = vunpack.c.l.b16 %v4041
    %v4691 = vunpack.c.h.b16 %v4041
    %v4692 = vunpack.c.l.b16 %v4042
    %v4693 = vunpack.c.h.b16 %v4042
    %v4694 = vunpack.c.l.b16 %v4043
    %v4695 = vunpack.c.h.b16 %v4043
    %v4696 = vunpack.c.l.b16 %v4044
    %v4697 = vunpack.c.h.b16 %v4044
    %v4698 = vunpack.c.l.b16 %v4045
    %v4699 = vunpack.c.h.b16 %v4045
    %v4700 = vunpack.c.l.b16 %v4046
    %v4701 = vunpack.c.h.b16 %v4046
    %v4702 = vunpack.c.l.b16 %v4047
    %v4703 = vunpack.c.h.b16 %v4047
    %v4704 = vunpack.c.l.b16 %v4048
    %v4705 = vunpack.c.h.b16 %v4048
    %v4706 = vunpack.c.l.b16 %v4049
    %v4707 = vunpack.c.h.b16 %v4049
    %v4708 = vunpack.c.l.b16 %v4050
    %v4709 = vunpack.c.h.b16 %v4050
    %v4710 = vunpack.c.l.b16 %v4051
    %v4711 = vunpack.c.h.b16 %v4051
    %v4712 = vunpack.c.l.b16 %v4052
    %v4713 = vunpack.c.h.b16 %v4052
    %v4714 = vunpack.c.l.b16 %v4053
    %v4715 = vunpack.c.h.b16 %v4053
    %v4716 = vunpack.c.l.b16 %v4054
    %v4717 = vunpack.c.h.b16 %v4054
    %v4718 = vunpack.c.l.b16 %v4055
    %v4719 = vunpack.c.h.b16 %v4055
    %v4720 = vunpack.c.l.b16 %v4056
    %v4721 = vunpack.c.h.b16 %v4056
    %v4722 = vunpack.c.l.b16 %v4057
    %v4723 = vunpack.c.h.b16 %v4057
    %v4724 = vunpack.c.l.b16 %v4058
    %v4725 = vunpack.c.h.b16 %v4058
    %v4726 = vunpack.c.l.b16 %v4059
    %v4727 = vunpack.c.h.b16 %v4059
    %v4728 = vunpack.c.l.b16 %v4060
    %v4729 = vunpack.c.h.b16 %v4060
    %v4730 = vunpack.c.l.b16 %v4061
    %v4731 = vunpack.c.h.b16 %v4061
    %v4732 = vunpack.c.l.b16 %v4062
    %v4733 = vunpack.c.h.b16 %v4062
    %v4734 = vunpack.c.l.b16 %v4063
    %v4735 = vunpack.c.h.b16 %v4063
    %v4736 = vunpack.c.l.b16 %v4064
    %v4737 = vunpack.c.h.b16 %v4064
    %v4738 = vunpack.c.l.b16 %v4065
    %v4739 = vunpack.c.h.b16 %v4065
    %v4740 = vunpack.c.l.b16 %v4066
    %v4741 = vunpack.c.h.b16 %v4066
    %v4742 = vunpack.c.l.b16 %v4067
    %v4743 = vunpack.c.h.b16 %v4067
    %v4744 = vunpack.c.l.b16 %v4068
    %v4745 = vunpack.c.h.b16 %v4068
    %v4746 = vunpack.c.l.b16 %v4069
    %v4747 = vunpack.c.h.b16 %v4069
    %v4748 = vunpack.c.l.b16 %v4070
    %v4749 = vunpack.c.h.b16 %v4070
    %v4750 = vunpack.c.l.b16 %v4071
    %v4751 = vunpack.c.h.b16 %v4071
    %v4752 = vunpack.c.l.b16 %v4072
    %v4753 = vunpack.c.h.b16 %v4072
    %v4754 = vunpack.c.l.b16 %v4073
    %v4755 = vunpack.c.h.b16 %v4073
    %v4756 = vunpack.c.l.b16 %v4074
    %v4757 = vunpack.c.h.b16 %v4074
    %v4758 = vunpack.c.l.b16 %v4075
    %v4759 = vunpack.c.h.b16 %v4075
    %v4760 = vunpack.c.l.b16 %v4076
    %v4761 = vunpack.c.h.b16 %v4076
    %v4762 = vunpack.c.l.b16 %v4077
    %v4763 = vunpack.c.h.b16 %v4077
    %v4764 = vunpack.c.l.b16 %v4078
    %v4765 = vunpack.c.h.b16 %v4078
    %v4766 = vunpack.c.l.b16 %v4079
    %v4767 = vunpack.c.h.b16 %v4079
    %v4768 = vunpack.c.l.b16 %v4080
    %v4769 = vunpack.c.h.b16 %v4080
    %v4770 = vunpack.c.l.b16 %v4081
    %v4771 = vunpack.c.h.b16 %v4081
    %v4772 = vunpack.c.l.b16 %v4082
    %v4773 = vunpack.c.h.b16 %v4082
    %v4774 = vunpack.c.l.b16 %v4083
    %v4775 = vunpack.c.h.b16 %v4083
    %v4776 = vunpack.c.l.b16 %v4084
    %v4777 = vunpack.c.h.b16 %v4084
    %v4778 = vunpack.c.l.b16 %v4085
    %v4779 = vunpack.c.h.b16 %v4085
    %v4780 = vunpack.c.l.b16 %v4086
    %v4781 = vunpack.c.h.b16 %v4086
    %v4782 = vunpack.c.l.b16 %v4087
    %v4783 = vunpack.c.h.b16 %v4087
    %v4784 = vunpack.c.l.b16 %v4088
    %v4785 = vunpack.c.h.b16 %v4088
    %v4786 = vunpack.c.l.b16 %v4089
    %v4787 = vunpack.c.h.b16 %v4089
    %v4788 = vunpack.c.l.b16 %v4090
    %v4789 = vunpack.c.h.b16 %v4090
    %v4790 = vunpack.c.l.b16 %v4091
    %v4791 = vunpack.c.h.b16 %v4091
    %v4792 = vunpack.c.l.b16 %v4092
    %v4793 = vunpack.c.h.b16 %v4092
    %v4794 = vunpack.c.l.b16 %v4093
    %v4795 = vunpack.c.h.b16 %v4093
    %v4796 = vunpack.c.l.b16 %v4094
    %v4797 = vunpack.c.h.b16 %v4094
    %v4798 = vunpack.c.l.b16 %v4095
    %v4799 = vunpack.c.h.b16 %v4095
    %v4800 = vunpack.c.l.b16 %v4096
    %v4801 = vunpack.c.h.b16 %v4096
    %v4802 = vunpack.c.l.b16 %v4097
    %v4803 = vunpack.c.h.b16 %v4097
    %v4804 = vunpack.c.l.b16 %v4098
    %v4805 = vunpack.c.h.b16 %v4098
    %v4806 = vunpack.c.l.b16 %v4099
    %v4807 = vunpack.c.h.b16 %v4099
    %v4808 = vunpack.c.l.b16 %v4100
    %v4809 = vunpack.c.h.b16 %v4100
    %v4810 = vunpack.c.l.b16 %v4101
    %v4811 = vunpack.c.h.b16 %v4101
    %v4812 = vunpack.c.l.b16 %v4102
    %v4813 = vunpack.c.h.b16 %v4102
    %v4814 = vunpack.c.l.b16 %v4103
    %v4815 = vunpack.c.h.b16 %v4103
    %v4816 = vunpack.c.l.b16 %v4104
    %v4817 = vunpack.c.h.b16 %v4104
    %v4818 = vunpack.c.l.b16 %v4105
    %v4819 = vunpack.c.h.b16 %v4105
    %v4820 = vunpack.c.l.b16 %v4106
    %v4821 = vunpack.c.h.b16 %v4106
    %v4822 = vunpack.c.l.b16 %v4107
    %v4823 = vunpack.c.h.b16 %v4107
    %v4824 = vunpack.c.l.b16 %v4108
    %v4825 = vunpack.c.h.b16 %v4108
    %v4826 = vunpack.c.l.b16 %v4109
    %v4827 = vunpack.c.h.b16 %v4109
    %v4828 = vunpack.c.l.b16 %v4110
    %v4829 = vunpack.c.h.b16 %v4110
    %v4830 = vunpack.c.l.b16 %v4111
    %v4831 = vunpack.c.h.b16 %v4111
    %v4832 = vunpack.c.l.b16 %v4112
    %v4833 = vunpack.c.h.b16 %v4112
    %v4834 = vunpack.c.l.b16 %v4113
    %v4835 = vunpack.c.h.b16 %v4113
    %v4836 = vunpack.c.l.b16 %v4114
    %v4837 = vunpack.c.h.b16 %v4114
    %v4838 = vunpack.c.l.b16 %v4115
    %v4839 = vunpack.c.h.b16 %v4115
    %v4840 = vunpack.c.l.b16 %v4116
    %v4841 = vunpack.c.h.b16 %v4116
    %v4842 = vunpack.c.l.b16 %v4117
    %v4843 = vunpack.c.h.b16 %v4117
    %v4844 = vunpack.c.l.b16 %v4118
    %v4845 = vunpack.c.h.b16 %v4118
    %v4846 = vunpack.c.l.b16 %v4119
    %v4847 = vunpack.c.h.b16 %v4119
    %v4848 = vunpack.c.l.b16 %v4120
    %v4849 = vunpack.c.h.b16 %v4120
    %v4850 = vunpack.c.l.b16 %v4121
    %v4851 = vunpack.c.h.b16 %v4121
    %v4852 = vunpack.c.l.b16 %v4122
    %v4853 = vunpack.c.h.b16 %v4122
    %v4854 = vunpack.c.l.b16 %v4123
    %v4855 = vunpack.c.h.b16 %v4123
    %v4856 = vunpack.c.l.b16 %v4124
    %v4857 = vunpack.c.h.b16 %v4124
    %v4858 = vunpack.c.l.b16 %v4125
    %v4859 = vunpack.c.h.b16 %v4125
    %v4860 = vunpack.c.l.b16 %v4126
    %v4861 = vunpack.c.h.b16 %v4126
    %v4862 = vunpack.c.l.b16 %v4127
    %v4863 = vunpack.c.h.b16 %v4127
    %v4864 = vunpack.c.l.b16 %v4128
    %v4865 = vunpack.c.h.b16 %v4128
    %v4866 = vunpack.c.l.b16 %v4129
    %v4867 = vunpack.c.h.b16 %v4129
    %v4868 = vunpack.c.l.b16 %v4130
    %v4869 = vunpack.c.h.b16 %v4130
    %v4870 = vunpack.c.l.b16 %v4131
    %v4871 = vunpack.c.h.b16 %v4131
    %v4872 = vunpack.c.l.b16 %v4132
    %v4873 = vunpack.c.h.b16 %v4132
    %v4874 = vunpack.c.l.b16 %v4133
    %v4875 = vunpack.c.h.b16 %v4133
    %v4876 = vunpack.c.l.b16 %v4134
    %v4877 = vunpack.c.h.b16 %v4134
    %v4878 = vunpack.c.l.b16 %v4135
    %v4879 = vunpack.c.h.b16 %v4135
    %v4880 = vunpack.c.l.b16 %v4136
    %v4881 = vunpack.c.h.b16 %v4136
    %v4882 = vunpack.c.l.b16 %v4137
    %v4883 = vunpack.c.h.b16 %v4137
    %v4884 = vunpack.c.l.b16 %v4138
    %v4885 = vunpack.c.h.b16 %v4138
    %v4886 = vunpack.c.l.b16 %v4139
    %v4887 = vunpack.c.h.b16 %v4139
    %v4888 = vunpack.c.l.b16 %v4140
    %v4889 = vunpack.c.h.b16 %v4140
    %v4890 = vunpack.c.l.b16 %v4141
    %v4891 = vunpack.c.h.b16 %v4141
    %v4892 = vunpack.c.l.b16 %v4142
    %v4893 = vunpack.c.h.b16 %v4142
    %v4894 = vunpack.c.l.b16 %v4143
    %v4895 = vunpack.c.h.b16 %v4143
    %v4896 = vunpack.c.l.b16 %v4144
    %v4897 = vunpack.c.h.b16 %v4144
    %v4898 = vunpack.c.l.b16 %v4145
    %v4899 = vunpack.c.h.b16 %v4145
    %v4900 = vunpack.c.l.b16 %v4146
    %v4901 = vunpack.c.h.b16 %v4146
    %v4902 = vunpack.c.l.b16 %v4147
    %v4903 = vunpack.c.h.b16 %v4147
    %v4904 = vunpack.c.l.b16 %v4148
    %v4905 = vunpack.c.h.b16 %v4148
    %v4906 = vunpack.c.l.b16 %v4149
    %v4907 = vunpack.c.h.b16 %v4149
    %v4908 = vunpack.c.l.b16 %v4150
    %v4909 = vunpack.c.h.b16 %v4150
    %v4910 = vunpack.c.l.b16 %v4151
    %v4911 = vunpack.c.h.b16 %v4151
    %v4912 = vunpack.c.l.b16 %v4152
    %v4913 = vunpack.c.h.b16 %v4152
    %v4914 = vunpack.c.l.b16 %v4153
    %v4915 = vunpack.c.h.b16 %v4153
    %v4916 = vunpack.c.l.b16 %v4154
    %v4917 = vunpack.c.h.b16 %v4154
    %v4918 = vunpack.c.l.b16 %v4155
    %v4919 = vunpack.c.h.b16 %v4155
    %v4920 = vunpack.c.l.b16 %v4156
    %v4921 = vunpack.c.h.b16 %v4156
    %v4922 = vunpack.c.l.b16 %v4157
    %v4923 = vunpack.c.h.b16 %v4157
    %v4924 = vunpack.c.l.b16 %v4158
    %v4925 = vunpack.c.h.b16 %v4158
    %v4926 = vunpack.c.l.b16 %v4159
    %v4927 = vunpack.c.h.b16 %v4159
    %v4928 = vunpack.c.l.b16 %v4160
    %v4929 = vunpack.c.h.b16 %v4160
    %v4930 = vunpack.c.l.b16 %v4161
    %v4931 = vunpack.c.h.b16 %v4161
    %v4932 = vunpack.c.l.b16 %v4162
    %v4933 = vunpack.c.h.b16 %v4162
    %v4934 = vunpack.c.l.b16 %v4163
    %v4935 = vunpack.c.h.b16 %v4163
    %v4936 = vunpack.c.l.b16 %v4164
    %v4937 = vunpack.c.h.b16 %v4164
    %v4938 = vunpack.c.l.b16 %v4165
    %v4939 = vunpack.c.h.b16 %v4165
    %v4940 = vunpack.c.l.b16 %v4166
    %v4941 = vunpack.c.h.b16 %v4166
    %v4942 = vunpack.c.l.b16 %v4167
    %v4943 = vunpack.c.h.b16 %v4167
    %v4944 = vunpack.c.l.b16 %v4168
    %v4945 = vunpack.c.h.b16 %v4168
    %v4946 = vunpack.c.l.b16 %v4169
    %v4947 = vunpack.c.h.b16 %v4169
    %v4948 = vunpack.c.l.b16 %v4170
    %v4949 = vunpack.c.h.b16 %v4170
    %v4950 = vunpack.c.l.b16 %v4171
    %v4951 = vunpack.c.h.b16 %v4171
    %v4952 = vunpack.c.l.b16 %v4172
    %v4953 = vunpack.c.h.b16 %v4172
    %v4954 = vunpack.c.l.b16 %v4173
    %v4955 = vunpack.c.h.b16 %v4173
    %v4956 = vunpack.c.l.b16 %v4174
    %v4957 = vunpack.c.h.b16 %v4174
    %v4958 = vunpack.c.l.b16 %v4175
    %v4959 = vunpack.c.h.b16 %v4175
    %v4960 = vunpack.c.l.b16 %v4176
    %v4961 = vunpack.c.h.b16 %v4176
    %v4962 = vunpack.c.l.b16 %v4177
    %v4963 = vunpack.c.h.b16 %v4177
    %v4964 = vunpack.c.l.b16 %v4178
    %v4965 = vunpack.c.h.b16 %v4178
    %v4966 = vunpack.c.l.b16 %v4179
    %v4967 = vunpack.c.h.b16 %v4179
    %v4968 = vunpack.c.l.b16 %v4180
    %v4969 = vunpack.c.h.b16 %v4180
    %v4970 = vunpack.c.l.b16 %v4181
    %v4971 = vunpack.c.h.b16 %v4181
    %v4972 = vunpack.c.l.b16 %v4182
    %v4973 = vunpack.c.h.b16 %v4182
    %v4974 = vunpack.c.l.b16 %v4183
    %v4975 = vunpack.c.h.b16 %v4183
    %v4976 = vunpack.c.l.b16 %v4184
    %v4977 = vunpack.c.h.b16 %v4184
    %v4978 = vunpack.c.l.b16 %v4185
    %v4979 = vunpack.c.h.b16 %v4185
    %v4980 = vunpack.c.l.b16 %v4186
    %v4981 = vunpack.c.h.b16 %v4186
    %v4982 = vunpack.c.l.b16 %v4187
    %v4983 = vunpack.c.h.b16 %v4187
    %v4984 = vunpack.c.l.b16 %v4188
    %v4985 = vunpack.c.h.b16 %v4188
    %v4986 = vunpack.c.l.b16 %v4189
    %v4987 = vunpack.c.h.b16 %v4189
    %v4988 = vunpack.c.l.b16 %v4190
    %v4989 = vunpack.c.h.b16 %v4190
    %v4990 = vunpack.c.l.b16 %v4191
    %v4991 = vunpack.c.h.b16 %v4191
    %v4992 = vunpack.c.l.b16 %v4192
    %v4993 = vunpack.c.h.b16 %v4192
    %v4994 = vunpack.c.l.b16 %v4193
    %v4995 = vunpack.c.h.b16 %v4193
    %v4996 = vunpack.c.l.b16 %v4194
    %v4997 = vunpack.c.h.b16 %v4194
    %v4998 = vunpack.c.l.b16 %v4195
    %v4999 = vunpack.c.h.b16 %v4195
    %v5000 = vunpack.c.l.b16 %v4196
    %v5001 = vunpack.c.h.b16 %v4196
    %v5002 = vunpack.c.l.b16 %v4197
    %v5003 = vunpack.c.h.b16 %v4197
    %v5004 = vunpack.c.l.b16 %v4198
    %v5005 = vunpack.c.h.b16 %v4198
    %v5006 = vunpack.c.l.b16 %v4199
    %v5007 = vunpack.c.h.b16 %v4199
    %v5008 = vunpack.c.l.b16 %v4200
    %v5009 = vunpack.c.h.b16 %v4200
    %v5010 = vunpack.c.l.b16 %v4201
    %v5011 = vunpack.c.h.b16 %v4201
    %v5012 = vunpack.c.l.b16 %v4202
    %v5013 = vunpack.c.h.b16 %v4202
    %v5014 = vunpack.c.l.b16 %v4203
    %v5015 = vunpack.c.h.b16 %v4203
    %v5016 = vunpack.c.l.b16 %v4204
    %v5017 = vunpack.c.h.b16 %v4204
    %v5018 = vunpack.c.l.b16 %v4205
    %v5019 = vunpack.c.h.b16 %v4205
    %v5020 = vunpack.c.l.b16 %v4206
    %v5021 = vunpack.c.h.b16 %v4206
    %v5022 = vunpack.c.l.b16 %v4207
    %v5023 = vunpack.c.h.b16 %v4207
    %v5024 = vunpack.c.l.b16 %v4208
    %v5025 = vunpack.c.h.b16 %v4208
    %v5026 = vunpack.c.l.b16 %v4209
    %v5027 = vunpack.c.h.b16 %v4209
    %v5028 = vunpack.c.l.b16 %v4210
    %v5029 = vunpack.c.h.b16 %v4210
    %v5030 = vunpack.c.l.b16 %v4211
    %v5031 = vunpack.c.h.b16 %v4211
    %v5032 = vunpack.c.l.b16 %v4212
    %v5033 = vunpack.c.h.b16 %v4212
    %v5034 = vunpack.c.l.b16 %v4213
    %v5035 = vunpack.c.h.b16 %v4213
    %v5036 = vunpack.c.l.b16 %v4214
    %v5037 = vunpack.c.h.b16 %v4214
    %v5038 = vunpack.c.l.b16 %v4215
    %v5039 = vunpack.c.h.b16 %v4215
    %v5040 = vunpack.c.l.b16 %v4216
    %v5041 = vunpack.c.h.b16 %v4216
    %v5042 = vunpack.c.l.b16 %v4217
    %v5043 = vunpack.c.h.b16 %v4217
    %v5044 = vunpack.c.l.b16 %v4218
    %v5045 = vunpack.c.h.b16 %v4218
    %v5046 = vunpack.c.l.b16 %v4219
    %v5047 = vunpack.c.h.b16 %v4219
    %v5048 = vunpack.c.l.b16 %v4220
    %v5049 = vunpack.c.h.b16 %v4220
    %v5050 = vunpack.c.l.b16 %v4221
    %v5051 = vunpack.c.h.b16 %v4221
    %v5052 = vunpack.c.l.b16 %v4222
    %v5053 = vunpack.c.h.b16 %v4222
    %v5054 = vunpack.c.l.b16 %v4223
    %v5055 = vunpack.c.h.b16 %v4223
    %v5056 = vunpack.c.l.b16 %v4224
    %v5057 = vunpack.c.h.b16 %v4224
    %v5058 = vunpack.c.l.b16 %v4225
    %v5059 = vunpack.c.h.b16 %v4225
    %v5060 = vunpack.c.l.b16 %v4226
    %v5061 = vunpack.c.h.b16 %v4226
    %v5062 = vunpack.c.l.b16 %v4227
    %v5063 = vunpack.c.h.b16 %v4227
    %v5064 = vunpack.c.l.b16 %v4228
    %v5065 = vunpack.c.h.b16 %v4228
    %v5066 = vunpack.c.l.b16 %v4229
    %v5067 = vunpack.c.h.b16 %v4229
    %v5068 = vunpack.c.l.b16 %v4230
    %v5069 = vunpack.c.h.b16 %v4230
    %v5070 = vunpack.c.l.b16 %v4231
    %v5071 = vunpack.c.h.b16 %v4231
    %v5072 = vunpack.c.l.b16 %v4232
    %v5073 = vunpack.c.h.b16 %v4232
    %v5074 = vunpack.c.l.b16 %v4233
    %v5075 = vunpack.c.h.b16 %v4233
    %v5076 = vunpack.c.l.b16 %v4234
    %v5077 = vunpack.c.h.b16 %v4234
    %v5078 = vunpack.c.l.b16 %v4235
    %v5079 = vunpack.c.h.b16 %v4235
    %v5080 = vunpack.c.l.b16 %v4236
    %v5081 = vunpack.c.h.b16 %v4236
    %v5082 = vunpack.c.l.b16 %v4237
    %v5083 = vunpack.c.h.b16 %v4237
    %v5084 = vunpack.c.l.b16 %v4238
    %v5085 = vunpack.c.h.b16 %v4238
    %v5086 = vunpack.c.l.b16 %v4239
    %v5087 = vunpack.c.h.b16 %v4239
    %v5088 = vunpack.c.l.b16 %v4240
    %v5089 = vunpack.c.h.b16 %v4240
    %v5090 = vunpack.c.l.b16 %v4241
    %v5091 = vunpack.c.h.b16 %v4241
    %v5092 = vunpack.c.l.b16 %v4242
    %v5093 = vunpack.c.h.b16 %v4242
    %v5094 = vunpack.c.l.b16 %v4243
    %v5095 = vunpack.c.h.b16 %v4243
    %v5096 = vunpack.c.l.b16 %v4244
    %v5097 = vunpack.c.h.b16 %v4244
    %v5098 = vunpack.c.l.b16 %v4245
    %v5099 = vunpack.c.h.b16 %v4245
    %v5100 = vunpack.c.l.b16 %v4246
    %v5101 = vunpack.c.h.b16 %v4246
    %v5102 = vunpack.c.l.b16 %v4247
    %v5103 = vunpack.c.h.b16 %v4247
    %v5104 = vunpack.c.l.b16 %v4248
    %v5105 = vunpack.c.h.b16 %v4248
    %v5106 = vunpack.c.l.b16 %v4249
    %v5107 = vunpack.c.h.b16 %v4249
    %v5108 = vunpack.c.l.b16 %v4250
    %v5109 = vunpack.c.h.b16 %v4250
    %v5110 = vunpack.c.l.b16 %v4251
    %v5111 = vunpack.c.h.b16 %v4251
    %v5112 = vunpack.c.l.b16 %v4252
    %v5113 = vunpack.c.h.b16 %v4252
    %v5114 = vunpack.c.l.b16 %v4253
    %v5115 = vunpack.c.h.b16 %v4253
    %v5116 = vunpack.c.l.b16 %v4254
    %v5117 = vunpack.c.h.b16 %v4254
    %v5118 = vunpack.c.l.b16 %v4255
    %v5119 = vunpack.c.h.b16 %v4255
    %v5120 = vunpack.c.l.b16 %v4256
    %v5121 = vunpack.c.h.b16 %v4256
    %v5122 = vunpack.c.l.b16 %v4257
    %v5123 = vunpack.c.h.b16 %v4257
    %v5124 = vunpack.c.l.b16 %v4258
    %v5125 = vunpack.c.h.b16 %v4258
    %v5126 = vunpack.c.l.b16 %v4259
    %v5127 = vunpack.c.h.b16 %v4259
    %v5128 = vunpack.c.l.b16 %v4260
    %v5129 = vunpack.c.h.b16 %v4260
    %v5130 = vunpack.c.l.b16 %v4261
    %v5131 = vunpack.c.h.b16 %v4261
    %v5132 = vunpack.c.l.b16 %v4262
    %v5133 = vunpack.c.h.b16 %v4262
    %v5134 = vunpack.c.l.b16 %v4263
    %v5135 = vunpack.c.h.b16 %v4263
    %v5136 = vunpack.c.l.b16 %v4264
    %v5137 = vunpack.c.h.b16 %v4264
    %v5138 = vunpack.c.l.b16 %v4265
    %v5139 = vunpack.c.h.b16 %v4265
    %v5140 = vunpack.c.l.b16 %v4266
    %v5141 = vunpack.c.h.b16 %v4266
    %v5142 = vunpack.c.l.b16 %v4267
    %v5143 = vunpack.c.h.b16 %v4267
    %v5144 = vunpack.c.l.b16 %v4268
    %v5145 = vunpack.c.h.b16 %v4268
    %v5146 = vunpack.c.l.b16 %v4269
    %v5147 = vunpack.c.h.b16 %v4269
    %v5148 = vunpack.c.l.b16 %v4270
    %v5149 = vunpack.c.h.b16 %v4270
    %v5150 = vunpack.c.l.b16 %v4271
    %v5151 = vunpack.c.h.b16 %v4271
    %v5152 = vunpack.c.l.b16 %v4272
    %v5153 = vunpack.c.h.b16 %v4272
    %v5154 = vunpack.c.l.b16 %v4273
    %v5155 = vunpack.c.h.b16 %v4273
    %v5156 = vunpack.c.l.b16 %v4274
    %v5157 = vunpack.c.h.b16 %v4274
    %v5158 = vunpack.c.l.b16 %v4275
    %v5159 = vunpack.c.h.b16 %v4275
    %v5160 = vunpack.c.l.b16 %v4276
    %v5161 = vunpack.c.h.b16 %v4276
    %v5162 = vunpack.c.l.b16 %v4277
    %v5163 = vunpack.c.h.b16 %v4277
    %v5164 = vunpack.c.l.b16 %v4278
    %v5165 = vunpack.c.h.b16 %v4278
    %v5166 = vunpack.c.l.b16 %v4279
    %v5167 = vunpack.c.h.b16 %v4279
    %v5168 = vunpack.c.l.b16 %v4280
    %v5169 = vunpack.c.h.b16 %v4280
    %v5170 = vunpack.c.l.b16 %v4281
    %v5171 = vunpack.c.h.b16 %v4281
    %v5172 = vunpack.c.l.b16 %v4282
    %v5173 = vunpack.c.h.b16 %v4282
    %v5174 = vunpack.c.l.b16 %v4283
    %v5175 = vunpack.c.h.b16 %v4283
    %v5176 = vunpack.c.l.b16 %v4284
    %v5177 = vunpack.c.h.b16 %v4284
    %v5178 = vunpack.c.l.b16 %v4285
    %v5179 = vunpack.c.h.b16 %v4285
    %v5180 = vunpack.c.l.b16 %v4286
    %v5181 = vunpack.c.h.b16 %v4286
    %v5182 = vunpack.c.l.b16 %v4287
    %v5183 = vunpack.c.h.b16 %v4287
    %v5184 = vpack.c.b16 %v4614, %v4608
    %v5185 = vpack.c.b16 %v4615, %v4609
    %v5186 = vpack.c.b16 %v4616, %v4610
    %v5187 = vpack.c.b16 %v4617, %v4611
    %v5188 = vpack.c.b16 %v4618, %v4612
    %v5189 = vpack.c.b16 %v4619, %v4613
    %v5190 = vpack.c.b16 %v4626, %v4620
    %v5191 = vpack.c.b16 %v4627, %v4621
    %v5192 = vpack.c.b16 %v4628, %v4622
    %v5193 = vpack.c.b16 %v4629, %v4623
    %v5194 = vpack.c.b16 %v4630, %v4624
    %v5195 = vpack.c.b16 %v4631, %v4625
    %v5196 = vpack.c.b16 %v4638, %v4632
    %v5197 = vpack.c.b16 %v4639, %v4633
    %v5198 = vpack.c.b16 %v4640, %v4634
    %v5199 = vpack.c.b16 %v4641, %v4635
    %v5200 = vpack.c.b16 %v4642, %v4636
    %v5201 = vpack.c.b16 %v4643, %v4637
    %v5202 = vpack.c.b16 %v4650, %v4644
    %v5203 = vpack.c.b16 %v4651, %v4645
    %v5204 = vpack.c.b16 %v4652, %v4646
    %v5205 = vpack.c.b16 %v4653, %v4647
    %v5206 = vpack.c.b16 %v4654, %v4648
    %v5207 = vpack.c.b16 %v4655, %v4649
    %v5208 = vpack.c.b16 %v4662, %v4656
    %v5209 = vpack.c.b16 %v4663, %v4657
    %v5210 = vpack.c.b16 %v4664, %v4658
    %v5211 = vpack.c.b16 %v4665, %v4659
    %v5212 = vpack.c.b16 %v4666, %v4660
    %v5213 = vpack.c.b16 %v4667, %v4661
    %v5214 = vpack.c.b16 %v4674, %v4668
    %v5215 = vpack.c.b16 %v4675, %v4669
    %v5216 = vpack.c.b16 %v4676, %v4670
    %v5217 = vpack.c.b16 %v4677, %v4671
    %v5218 = vpack.c.b16 %v4678, %v4672
    %v5219 = vpack.c.b16 %v4679, %v4673
    %v5220 = vpack.c.b16 %v4686, %v4680
    %v5221 = vpack.c.b16 %v4687, %v4681
    %v5222 = vpack.c.b16 %v4688, %v4682
    %v5223 = vpack.c.b16 %v4689, %v4683
    %v5224 = vpack.c.b16 %v4690, %v4684
    %v5225 = vpack.c.b16 %v4691, %v4685
    %v5226 = vpack.c.b16 %v4698, %v4692
    %v5227 = vpack.c.b16 %v4699, %v4693
    %v5228 = vpack.c.b16 %v4700, %v4694
    %v5229 = vpack.c.b16 %v4701, %v4695
    %v5230 = vpack.c.b16 %v4702, %v4696
    %v5231 = vpack.c.b16 %v4703, %v4697
    %v5232 = vpack.c.b16 %v4710, %v4704
    %v5233 = vpack.c.b16 %v4711, %v4705
    %v5234 = vpack.c.b16 %v4712, %v4706
    %v5235 = vpack.c.b16 %v4713, %v4707
    %v5236 = vpack.c.b16 %v4714, %v4708
    %v5237 = vpack.c.b16 %v4715, %v4709
    %v5238 = vpack.c.b16 %v4722, %v4716
    %v5239 = vpack.c.b16 %v4723, %v4717
    %v5240 = vpack.c.b16 %v4724, %v4718
    %v5241 = vpack.c.b16 %v4725, %v4719
    %v5242 = vpack.c.b16 %v4726, %v4720
    %v5243 = vpack.c.b16 %v4727, %v4721
    %v5244 = vpack.c.b16 %v4734, %v4728
    %v5245 = vpack.c.b16 %v4735, %v4729
    %v5246 = vpack.c.b16 %v4736, %v4730
    %v5247 = vpack.c.b16 %v4737, %v4731
    %v5248 = vpack.c.b16 %v4738, %v4732
    %v5249 = vpack.c.b16 %v4739, %v4733
    %v5250 = vpack.c.b16 %v4746, %v4740
    %v5251 = vpack.c.b16 %v4747, %v4741
    %v5252 = vpack.c.b16 %v4748, %v4742
    %v5253 = vpack.c.b16 %v4749, %v4743
    %v5254 = vpack.c.b16 %v4750, %v4744
    %v5255 = vpack.c.b16 %v4751, %v4745
    %v5256 = vpack.c.b16 %v4758, %v4752
    %v5257 = vpack.c.b16 %v4759, %v4753
    %v5258 = vpack.c.b16 %v4760, %v4754
    %v5259 = vpack.c.b16 %v4761, %v4755
    %v5260 = vpack.c.b16 %v4762, %v4756
    %v5261 = vpack.c.b16 %v4763, %v4757
    %v5262 = vpack.c.b16 %v4770, %v4764
    %v5263 = vpack.c.b16 %v4771, %v4765
    %v5264 = vpack.c.b16 %v4772, %v4766
    %v5265 = vpack.c.b16 %v4773, %v4767
    %v5266 = vpack.c.b16 %v4774, %v4768
    %v5267 = vpack.c.b16 %v4775, %v4769
    %v5268 = vpack.c.b16 %v4782, %v4776
    %v5269 = vpack.c.b16 %v4783, %v4777
    %v5270 = vpack.c.b16 %v4784, %v4778
    %v5271 = vpack.c.b16 %v4785, %v4779
    %v5272 = vpack.c.b16 %v4786, %v4780
    %v5273 = vpack.c.b16 %v4787, %v4781
    %v5274 = vpack.c.b16 %v4794, %v4788
    %v5275 = vpack.c.b16 %v4795, %v4789
    %v5276 = vpack.c.b16 %v4796, %v4790
    %v5277 = vpack.c.b16 %v4797, %v4791
    %v5278 = vpack.c.b16 %v4798, %v4792
    %v5279 = vpack.c.b16 %v4799, %v4793
    %v5280 = vpack.c.b16 %v4806, %v4800
    %v5281 = vpack.c.b16 %v4807, %v4801
    %v5282 = vpack.c.b16 %v4808, %v4802
    %v5283 = vpack.c.b16 %v4809, %v4803
    %v5284 = vpack.c.b16 %v4810, %v4804
    %v5285 = vpack.c.b16 %v4811, %v4805
    %v5286 = vpack.c.b16 %v4818, %v4812
    %v5287 = vpack.c.b16 %v4819, %v4813
    %v5288 = vpack.c.b16 %v4820, %v4814
    %v5289 = vpack.c.b16 %v4821, %v4815
    %v5290 = vpack.c.b16 %v4822, %v4816
    %v5291 = vpack.c.b16 %v4823, %v4817
    %v5292 = vpack.c.b16 %v4830, %v4824
    %v5293 = vpack.c.b16 %v4831, %v4825
    %v5294 = vpack.c.b16 %v4832, %v4826
    %v5295 = vpack.c.b16 %v4833, %v4827
    %v5296 = vpack.c.b16 %v4834, %v4828
    %v5297 = vpack.c.b16 %v4835, %v4829
    %v5298 = vpack.c.b16 %v4842, %v4836
    %v5299 = vpack.c.b16 %v4843, %v4837
    %v5300 = vpack.c.b16 %v4844, %v4838
    %v5301 = vpack.c.b16 %v4845, %v4839
    %v5302 = vpack.c.b16 %v4846, %v4840
    %v5303 = vpack.c.b16 %v4847, %v4841
    %v5304 = vpack.c.b16 %v4854, %v4848
    %v5305 = vpack.c.b16 %v4855, %v4849
    %v5306 = vpack.c.b16 %v4856, %v4850
    %v5307 = vpack.c.b16 %v4857, %v4851
    %v5308 = vpack.c.b16 %v4858, %v4852
    %v5309 = vpack.c.b16 %v4859, %v4853
    %v5310 = vpack.c.b16 %v4866, %v4860
    %v5311 = vpack.c.b16 %v4867, %v4861
    %v5312 = vpack.c.b16 %v4868, %v4862
    %v5313 = vpack.c.b16 %v4869, %v4863
    %v5314 = vpack.c.b16 %v4870, %v4864
    %v5315 = vpack.c.b16 %v4871, %v4865
    %v5316 = vpack.c.b16 %v4878, %v4872
    %v5317 = vpack.c.b16 %v4879, %v4873
    %v5318 = vpack.c.b16 %v4880, %v4874
    %v5319 = vpack.c.b16 %v4881, %v4875
    %v5320 = vpack.c.b16 %v4882, %v4876
    %v5321 = vpack.c.b16 %v4883, %v4877
    %v5322 = vpack.c.b16 %v4890, %v4884
    %v5323 = vpack.c.b16 %v4891, %v4885
    %v5324 = vpack.c.b16 %v4892, %v4886
    %v5325 = vpack.c.b16 %v4893, %v4887
    %v5326 = vpack.c.b16 %v4894, %v4888
    %v5327 = vpack.c.b16 %v4895, %v4889
    %v5328 = vpack.c.b16 %v4902, %v4896
    %v5329 = vpack.c.b16 %v4903, %v4897
    %v5330 = vpack.c.b16 %v4904, %v4898
    %v5331 = vpack.c.b16 %v4905, %v4899
    %v5332 = vpack.c.b16 %v4906, %v4900
    %v5333 = vpack.c.b16 %v4907, %v4901
    %v5334 = vpack.c.b16 %v4914, %v4908
    %v5335 = vpack.c.b16 %v4915, %v4909
    %v5336 = vpack.c.b16 %v4916, %v4910
    %v5337 = vpack.c.b16 %v4917, %v4911
    %v5338 = vpack.c.b16 %v4918, %v4912
    %v5339 = vpack.c.b16 %v4919, %v4913
    %v5340 = vpack.c.b16 %v4926, %v4920
    %v5341 = vpack.c.b16 %v4927, %v4921
    %v5342 = vpack.c.b16 %v4928, %v4922
    %v5343 = vpack.c.b16 %v4929, %v4923
    %v5344 = vpack.c.b16 %v4930, %v4924
    %v5345 = vpack.c.b16 %v4931, %v4925
    %v5346 = vpack.c.b16 %v4938, %v4932
    %v5347 = vpack.c.b16 %v4939, %v4933
    %v5348 = vpack.c.b16 %v4940, %v4934
    %v5349 = vpack.c.b16 %v4941, %v4935
    %v5350 = vpack.c.b16 %v4942, %v4936
    %v5351 = vpack.c.b16 %v4943, %v4937
    %v5352 = vpack.c.b16 %v4950, %v4944
    %v5353 = vpack.c.b16 %v4951, %v4945
    %v5354 = vpack.c.b16 %v4952, %v4946
    %v5355 = vpack.c.b16 %v4953, %v4947
    %v5356 = vpack.c.b16 %v4954, %v4948
    %v5357 = vpack.c.b16 %v4955, %v4949
    %v5358 = vpack.c.b16 %v4962, %v4956
    %v5359 = vpack.c.b16 %v4963, %v4957
    %v5360 = vpack.c.b16 %v4964, %v4958
    %v5361 = vpack.c.b16 %v4965, %v4959
    %v5362 = vpack.c.b16 %v4966, %v4960
    %v5363 = vpack.c.b16 %v4967, %v4961
    %v5364 = vpack.c.b16 %v4974, %v4968
    %v5365 = vpack.c.b16 %v4975, %v4969
    %v5366 = vpack.c.b16 %v4976, %v4970
    %v5367 = vpack.c.b16 %v4977, %v4971
    %v5368 = vpack.c.b16 %v4978, %v4972
    %v5369 = vpack.c.b16 %v4979, %v4973
    %v5370 = vpack.c.b16 %v4986, %v4980
    %v5371 = vpack.c.b16 %v4987, %v4981
    %v5372 = vpack.c.b16 %v4988, %v4982
    %v5373 = vpack.c.b16 %v4989, %v4983
    %v5374 = vpack.c.b16 %v4990, %v4984
    %v5375 = vpack.c.b16 %v4991, %v4985
    %v5376 = vpack.c.b16 %v4998, %v4992
    %v5377 = vpack.c.b16 %v4999, %v4993
    %v5378 = vpack.c.b16 %v5000, %v4994
    %v5379 = vpack.c.b16 %v5001, %v4995
    %v5380 = vpack.c.b16 %v5002, %v4996
    %v5381 = vpack.c.b16 %v5003, %v4997
    %v5382 = vpack.c.b16 %v5010, %v5004
    %v5383 = vpack.c.b16 %v5011, %v5005
    %v5384 = vpack.c.b16 %v5012, %v5006
    %v5385 = vpack.c.b16 %v5013, %v5007
    %v5386 = vpack.c.b16 %v5014, %v5008
    %v5387 = vpack.c.b16 %v5015, %v5009
    %v5388 = vpack.c.b16 %v5022, %v5016
    %v5389 = vpack.c.b16 %v5023, %v5017
    %v5390 = vpack.c.b16 %v5024, %v5018
    %v5391 = vpack.c.b16 %v5025, %v5019
    %v5392 = vpack.c.b16 %v5026, %v5020
    %v5393 = vpack.c.b16 %v5027, %v5021
    %v5394 = vpack.c.b16 %v5034, %v5028
    %v5395 = vpack.c.b16 %v5035, %v5029
    %v5396 = vpack.c.b16 %v5036, %v5030
    %v5397 = vpack.c.b16 %v5037, %v5031
    %v5398 = vpack.c.b16 %v5038, %v5032
    %v5399 = vpack.c.b16 %v5039, %v5033
    %v5400 = vpack.c.b16 %v5046, %v5040
    %v5401 = vpack.c.b16 %v5047, %v5041
    %v5402 = vpack.c.b16 %v5048, %v5042
    %v5403 = vpack.c.b16 %v5049, %v5043
    %v5404 = vpack.c.b16 %v5050, %v5044
    %v5405 = vpack.c.b16 %v5051, %v5045
    %v5406 = vpack.c.b16 %v5058, %v5052
    %v5407 = vpack.c.b16 %v5059, %v5053
    %v5408 = vpack.c.b16 %v5060, %v5054
    %v5409 = vpack.c.b16 %v5061, %v5055
    %v5410 = vpack.c.b16 %v5062, %v5056
    %v5411 = vpack.c.b16 %v5063, %v5057
    %v5412 = vpack.c.b16 %v5070, %v5064
    %v5413 = vpack.c.b16 %v5071, %v5065
    %v5414 = vpack.c.b16 %v5072, %v5066
    %v5415 = vpack.c.b16 %v5073, %v5067
    %v5416 = vpack.c.b16 %v5074, %v5068
    %v5417 = vpack.c.b16 %v5075, %v5069
    %v5418 = vpack.c.b16 %v5082, %v5076
    %v5419 = vpack.c.b16 %v5083, %v5077
    %v5420 = vpack.c.b16 %v5084, %v5078
    %v5421 = vpack.c.b16 %v5085, %v5079
    %v5422 = vpack.c.b16 %v5086, %v5080
    %v5423 = vpack.c.b16 %v5087, %v5081
    %v5424 = vpack.c.b16 %v5094, %v5088
    %v5425 = vpack.c.b16 %v5095, %v5089
    %v5426 = vpack.c.b16 %v5096, %v5090
    %v5427 = vpack.c.b16 %v5097, %v5091
    %v5428 = vpack.c.b16 %v5098, %v5092
    %v5429 = vpack.c.b16 %v5099, %v5093
    %v5430 = vpack.c.b16 %v5106, %v5100
    %v5431 = vpack.c.b16 %v5107, %v5101
    %v5432 = vpack.c.b16 %v5108, %v5102
    %v5433 = vpack.c.b16 %v5109, %v5103
    %v5434 = vpack.c.b16 %v5110, %v5104
    %v5435 = vpack.c.b16 %v5111, %v5105
    %v5436 = vpack.c.b16 %v5118, %v5112
    %v5437 = vpack.c.b16 %v5119, %v5113
    %v5438 = vpack.c.b16 %v5120, %v5114
    %v5439 = vpack.c.b16 %v5121, %v5115
    %v5440 = vpack.c.b16 %v5122, %v5116
    %v5441 = vpack.c.b16 %v5123, %v5117
    %v5442 = vpack.c.b16 %v5130, %v5124
    %v5443 = vpack.c.b16 %v5131, %v5125
    %v5444 = vpack.c.b16 %v5132, %v5126
    %v5445 = vpack.c.b16 %v5133, %v5127
    %v5446 = vpack.c.b16 %v5134, %v5128
    %v5447 = vpack.c.b16 %v5135, %v5129
    %v5448 = vpack.c.b16 %v5142, %v5136
    %v5449 = vpack.c.b16 %v5143, %v5137
    %v5450 = vpack.c.b16 %v5144, %v5138
    %v5451 = vpack.c.b16 %v5145, %v5139
    %v5452 = vpack.c.b16 %v5146, %v5140
    %v5453 = vpack.c.b16 %v5147, %v5141
    %v5454 = vpack.c.b16 %v5154, %v5148
    %v5455 = vpack.c.b16 %v5155, %v5149
    %v5456 = vpack.c.b16 %v5156, %v5150
    %v5457 = vpack.c.b16 %v5157, %v5151
    %v5458 = vpack.c.b16 %v5158, %v5152
    %v5459 = vpack.c.b16 %v5159, %v5153
    %v5460 = vpack.c.b16 %v5166, %v5160
    %v5461 = vpack.c.b16 %v5167, %v5161
    %v5462 = vpack.c.b16 %v5168, %v5162
    %v5463 = vpack.c.b16 %v5169, %v5163
    %v5464 = vpack.c.b16 %v5170, %v5164
    %v5465 = vpack.c.b16 %v5171, %v5165
    %v5466 = vpack.c.b16 %v5178, %v5172
    %v5467 = vpack.c.b16 %v5179, %v5173
    %v5468 = vpack.c.b16 %v5180, %v5174
    %v5469 = vpack.c.b16 %v5181, %v5175
    %v5470 = vpack.c.b16 %v5182, %v5176
    %v5471 = vpack.c.b16 %v5183, %v5177
    %5760 = vmatprep.subr.bf16.mxu0 %v5185
    %5761 = vmatpush1.bf16.msra.mxu0 %v5184
    %5762 = vmatprep.subr.bf16.mxu0 %v5191
    %5763 = vmatpush1.bf16.msra.mxu0 %v5190
    %5764 = vmatprep.subr.bf16.mxu0 %v5197
    %5765 = vmatpush1.bf16.msra.mxu0 %v5196
    %5766 = vmatprep.subr.bf16.mxu0 %v5203
    %5767 = vmatpush1.bf16.msra.mxu0 %v5202
    %5768 = vmatprep.subr.bf16.mxu0 %v5209
    %5769 = vmatpush1.bf16.msra.mxu0 %v5208
    %5770 = vmatprep.subr.bf16.mxu0 %v5215
    %5771 = vmatpush1.bf16.msra.mxu0 %v5214
    %5772 = vmatprep.subr.bf16.mxu0 %v5221
    %5773 = vmatpush1.bf16.msra.mxu0 %v5220
    %5774 = vmatprep.subr.bf16.mxu0 %v5227
    %5775 = vmatpush1.bf16.msra.mxu0 %v5226
    %5776 = vmatprep.subr.bf16.mxu0 %v5233
    %5777 = vmatpush1.bf16.msra.mxu0 %v5232
    %5778 = vmatprep.subr.bf16.mxu0 %v5239
    %5779 = vmatpush1.bf16.msra.mxu0 %v5238
    %5780 = vmatprep.subr.bf16.mxu0 %v5245
    %5781 = vmatpush1.bf16.msra.mxu0 %v5244
    %5782 = vmatprep.subr.bf16.mxu0 %v5251
    %5783 = vmatpush1.bf16.msra.mxu0 %v5250
    %5784 = vmatprep.subr.bf16.mxu0 %v5257
    %5785 = vmatpush1.bf16.msra.mxu0 %v5256
    %5786 = vmatprep.subr.bf16.mxu0 %v5263
    %5787 = vmatpush1.bf16.msra.mxu0 %v5262
    %5788 = vmatprep.subr.bf16.mxu0 %v5269
    %5789 = vmatpush1.bf16.msra.mxu0 %v5268
    %5790 = vmatprep.subr.bf16.mxu0 %v5275
    %5791 = vmatpush1.bf16.msra.mxu0 %v5274
    %5792 = vmatprep.mubr.bf16.mxu0 %v3995
    %5793 = vmatmul.mubr.bf16.gmra.mrb[0].mxu0 %v3994
    %v5794 = vpop.f32.mrb[0].mxu0
    %v5795 = vadd.f32 %v4293, %v5794
    %v5796 = vpop.f32.mrb[0].mxu0
    %v5797 = vadd.f32 %v4297, %v5796
    %v5798 = vpop.f32.mrb[0].mxu0
    %v5799 = vpop.f32.mrb[0].mxu0
    %5800 = vdwg.mxu0
    %5801 = vmatprep.subr.bf16.mxu0 %v5281
    %5802 = vmatpush1.bf16.msra.mxu0 %v5280
    %5803 = vmatprep.subr.bf16.mxu0 %v5287
    %5804 = vmatpush1.bf16.msra.mxu0 %v5286
    %5805 = vmatprep.subr.bf16.mxu0 %v5293
    %5806 = vmatpush1.bf16.msra.mxu0 %v5292
    %5807 = vmatprep.subr.bf16.mxu0 %v5299
    %5808 = vmatpush1.bf16.msra.mxu0 %v5298
    %5809 = vmatprep.subr.bf16.mxu0 %v5305
    %5810 = vmatpush1.bf16.msra.mxu0 %v5304
    %5811 = vmatprep.subr.bf16.mxu0 %v5311
    %5812 = vmatpush1.bf16.msra.mxu0 %v5310
    %5813 = vmatprep.subr.bf16.mxu0 %v5317
    %5814 = vmatpush1.bf16.msra.mxu0 %v5316
    %5815 = vmatprep.subr.bf16.mxu0 %v5323
    %5816 = vmatpush1.bf16.msra.mxu0 %v5322
    %5817 = vmatprep.subr.bf16.mxu0 %v5329
    %5818 = vmatpush1.bf16.msra.mxu0 %v5328
    %5819 = vmatprep.subr.bf16.mxu0 %v5335
    %5820 = vmatpush1.bf16.msra.mxu0 %v5334
    %5821 = vmatprep.subr.bf16.mxu0 %v5341
    %5822 = vmatpush1.bf16.msra.mxu0 %v5340
    %5823 = vmatprep.subr.bf16.mxu0 %v5347
    %5824 = vmatpush1.bf16.msra.mxu0 %v5346
    %5825 = vmatprep.subr.bf16.mxu0 %v5353
    %5826 = vmatpush1.bf16.msra.mxu0 %v5352
    %5827 = vmatprep.subr.bf16.mxu0 %v5359
    %5828 = vmatpush1.bf16.msra.mxu0 %v5358
    %5829 = vmatprep.subr.bf16.mxu0 %v5365
    %5830 = vmatpush1.bf16.msra.mxu0 %v5364
    %5831 = vmatprep.subr.bf16.mxu0 %v5371
    %5832 = vmatpush1.bf16.msra.mxu0 %v5370
    %5833 = vmatprep.mubr.bf16.mxu0 %v3997
    %5834 = vmatmul.mubr.bf16.gmra.mrb[0].mxu0 %v3996
    %v5835 = vpop.f32.mrb[0].mxu0
    %v5836 = vadd.f32 %v5795, %v5835
    %v5837 = vpop.f32.mrb[0].mxu0
    %v5838 = vadd.f32 %v5797, %v5837
    %v5839 = vpop.f32.mrb[0].mxu0
    %v5840 = vpop.f32.mrb[0].mxu0
    %5841 = vdwg.mxu0
    %5842 = vmatprep.subr.bf16.mxu0 %v5377
    %5843 = vmatpush1.bf16.msra.mxu0 %v5376
    %5844 = vmatprep.subr.bf16.mxu0 %v5383
    %5845 = vmatpush1.bf16.msra.mxu0 %v5382
    %5846 = vmatprep.subr.bf16.mxu0 %v5389
    %5847 = vmatpush1.bf16.msra.mxu0 %v5388
    %5848 = vmatprep.subr.bf16.mxu0 %v5395
    %5849 = vmatpush1.bf16.msra.mxu0 %v5394
    %5850 = vmatprep.subr.bf16.mxu0 %v5401
    %5851 = vmatpush1.bf16.msra.mxu0 %v5400
    %5852 = vmatprep.subr.bf16.mxu0 %v5407
    %5853 = vmatpush1.bf16.msra.mxu0 %v5406
    %5854 = vmatprep.subr.bf16.mxu0 %v5413
    %5855 = vmatpush1.bf16.msra.mxu0 %v5412
    %5856 = vmatprep.subr.bf16.mxu0 %v5419
    %5857 = vmatpush1.bf16.msra.mxu0 %v5418
    %5858 = vmatprep.subr.bf16.mxu0 %v5425
    %5859 = vmatpush1.bf16.msra.mxu0 %v5424
    %5860 = vmatprep.subr.bf16.mxu0 %v5431
    %5861 = vmatpush1.bf16.msra.mxu0 %v5430
    %5862 = vmatprep.subr.bf16.mxu0 %v5437
    %5863 = vmatpush1.bf16.msra.mxu0 %v5436
    %5864 = vmatprep.subr.bf16.mxu0 %v5443
    %5865 = vmatpush1.bf16.msra.mxu0 %v5442
    %5866 = vmatprep.subr.bf16.mxu0 %v5449
    %5867 = vmatpush1.bf16.msra.mxu0 %v5448
    %5868 = vmatprep.subr.bf16.mxu0 %v5455
    %5869 = vmatpush1.bf16.msra.mxu0 %v5454
    %5870 = vmatprep.subr.bf16.mxu0 %v5461
    %5871 = vmatpush1.bf16.msra.mxu0 %v5460
    %5872 = vmatprep.subr.bf16.mxu0 %v5467
    %5873 = vmatpush1.bf16.msra.mxu0 %v5466
    %5874 = vmatprep.mubr.bf16.mxu0 %v3999
    %5875 = vmatmul.mubr.bf16.gmra.mrb[0].mxu0 %v3998
    %v5876 = vpop.f32.mrb[0].mxu0
    %v5877 = vadd.f32 %v5836, %v5876
    %v5878 = vpop.f32.mrb[0].mxu0
    %v5879 = vadd.f32 %v5838, %v5878
    %v5880 = vpop.f32.mrb[0].mxu0
    %v5881 = vpop.f32.mrb[0].mxu0
    %5882 = vdwg.mxu0
    %5883 = vmatprep.subr.bf16.mxu0 %v5187
    %5884 = vmatpush1.bf16.msra.mxu0 %v5186
    %5885 = vmatprep.subr.bf16.mxu0 %v5193
    %5886 = vmatpush1.bf16.msra.mxu0 %v5192
    %5887 = vmatprep.subr.bf16.mxu0 %v5199
    %5888 = vmatpush1.bf16.msra.mxu0 %v5198
    %5889 = vmatprep.subr.bf16.mxu0 %v5205
    %5890 = vmatpush1.bf16.msra.mxu0 %v5204
    %5891 = vmatprep.subr.bf16.mxu0 %v5211
    %5892 = vmatpush1.bf16.msra.mxu0 %v5210
    %5893 = vmatprep.subr.bf16.mxu0 %v5217
    %5894 = vmatpush1.bf16.msra.mxu0 %v5216
    %5895 = vmatprep.subr.bf16.mxu0 %v5223
    %5896 = vmatpush1.bf16.msra.mxu0 %v5222
    %5897 = vmatprep.subr.bf16.mxu0 %v5229
    %5898 = vmatpush1.bf16.msra.mxu0 %v5228
    %5899 = vmatprep.subr.bf16.mxu0 %v5235
    %5900 = vmatpush1.bf16.msra.mxu0 %v5234
    %5901 = vmatprep.subr.bf16.mxu0 %v5241
    %5902 = vmatpush1.bf16.msra.mxu0 %v5240
    %5903 = vmatprep.subr.bf16.mxu0 %v5247
    %5904 = vmatpush1.bf16.msra.mxu0 %v5246
    %5905 = vmatprep.subr.bf16.mxu0 %v5253
    %5906 = vmatpush1.bf16.msra.mxu0 %v5252
    %5907 = vmatprep.subr.bf16.mxu0 %v5259
    %5908 = vmatpush1.bf16.msra.mxu0 %v5258
    %5909 = vmatprep.subr.bf16.mxu0 %v5265
    %5910 = vmatpush1.bf16.msra.mxu0 %v5264
    %5911 = vmatprep.subr.bf16.mxu0 %v5271
    %5912 = vmatpush1.bf16.msra.mxu0 %v5270
    %5913 = vmatprep.subr.bf16.mxu0 %v5277
    %5914 = vmatpush1.bf16.msra.mxu0 %v5276
    %5915 = vmatprep.mubr.bf16.mxu0 %v3995
    %5916 = vmatmul.mubr.bf16.gmra.mrb[0].mxu0 %v3994
    %v5917 = vpop.f32.mrb[0].mxu0
    %v5918 = vadd.f32 %v4301, %v5917
    %v5919 = vpop.f32.mrb[0].mxu0
    %v5920 = vadd.f32 %v4305, %v5919
    %v5921 = vpop.f32.mrb[0].mxu0
    %v5922 = vpop.f32.mrb[0].mxu0
    %5923 = vdwg.mxu0
    %5924 = vmatprep.subr.bf16.mxu0 %v5283
    %5925 = vmatpush1.bf16.msra.mxu0 %v5282
    %5926 = vmatprep.subr.bf16.mxu0 %v5289
    %5927 = vmatpush1.bf16.msra.mxu0 %v5288
    %5928 = vmatprep.subr.bf16.mxu0 %v5295
    %5929 = vmatpush1.bf16.msra.mxu0 %v5294
    %5930 = vmatprep.subr.bf16.mxu0 %v5301
    %5931 = vmatpush1.bf16.msra.mxu0 %v5300
    %5932 = vmatprep.subr.bf16.mxu0 %v5307
    %5933 = vmatpush1.bf16.msra.mxu0 %v5306
    %5934 = vmatprep.subr.bf16.mxu0 %v5313
    %5935 = vmatpush1.bf16.msra.mxu0 %v5312
    %5936 = vmatprep.subr.bf16.mxu0 %v5319
    %5937 = vmatpush1.bf16.msra.mxu0 %v5318
    %5938 = vmatprep.subr.bf16.mxu0 %v5325
    %5939 = vmatpush1.bf16.msra.mxu0 %v5324
    %5940 = vmatprep.subr.bf16.mxu0 %v5331
    %5941 = vmatpush1.bf16.msra.mxu0 %v5330
    %5942 = vmatprep.subr.bf16.mxu0 %v5337
    %5943 = vmatpush1.bf16.msra.mxu0 %v5336
    %5944 = vmatprep.subr.bf16.mxu0 %v5343
    %5945 = vmatpush1.bf16.msra.mxu0 %v5342
    %5946 = vmatprep.subr.bf16.mxu0 %v5349
    %5947 = vmatpush1.bf16.msra.mxu0 %v5348
    %5948 = vmatprep.subr.bf16.mxu0 %v5355
    %5949 = vmatpush1.bf16.msra.mxu0 %v5354
    %5950 = vmatprep.subr.bf16.mxu0 %v5361
    %5951 = vmatpush1.bf16.msra.mxu0 %v5360
    %5952 = vmatprep.subr.bf16.mxu0 %v5367
    %5953 = vmatpush1.bf16.msra.mxu0 %v5366
    %5954 = vmatprep.subr.bf16.mxu0 %v5373
    %5955 = vmatpush1.bf16.msra.mxu0 %v5372
    %5956 = vmatprep.mubr.bf16.mxu0 %v3997
    %5957 = vmatmul.mubr.bf16.gmra.mrb[0].mxu0 %v3996
    %v5958 = vpop.f32.mrb[0].mxu0
    %v5959 = vadd.f32 %v5918, %v5958
    %v5960 = vpop.f32.mrb[0].mxu0
    %v5961 = vadd.f32 %v5920, %v5960
    %v5962 = vpop.f32.mrb[0].mxu0
    %v5963 = vpop.f32.mrb[0].mxu0
    %5964 = vdwg.mxu0
    %5965 = vmatprep.subr.bf16.mxu0 %v5379
    %5966 = vmatpush1.bf16.msra.mxu0 %v5378
    %5967 = vmatprep.subr.bf16.mxu0 %v5385
    %5968 = vmatpush1.bf16.msra.mxu0 %v5384
    %5969 = vmatprep.subr.bf16.mxu0 %v5391
    %5970 = vmatpush1.bf16.msra.mxu0 %v5390
    %5971 = vmatprep.subr.bf16.mxu0 %v5397
    %5972 = vmatpush1.bf16.msra.mxu0 %v5396
    %5973 = vmatprep.subr.bf16.mxu0 %v5403
    %5974 = vmatpush1.bf16.msra.mxu0 %v5402
    %5975 = vmatprep.subr.bf16.mxu0 %v5409
    %5976 = vmatpush1.bf16.msra.mxu0 %v5408
    %5977 = vmatprep.subr.bf16.mxu0 %v5415
    %5978 = vmatpush1.bf16.msra.mxu0 %v5414
    %5979 = vmatprep.subr.bf16.mxu0 %v5421
    %5980 = vmatpush1.bf16.msra.mxu0 %v5420
    %5981 = vmatprep.subr.bf16.mxu0 %v5427
    %5982 = vmatpush1.bf16.msra.mxu0 %v5426
    %5983 = vmatprep.subr.bf16.mxu0 %v5433
    %5984 = vmatpush1.bf16.msra.mxu0 %v5432
    %5985 = vmatprep.subr.bf16.mxu0 %v5439
    %5986 = vmatpush1.bf16.msra.mxu0 %v5438
    %5987 = vmatprep.subr.bf16.mxu0 %v5445
    %5988 = vmatpush1.bf16.msra.mxu0 %v5444
    %5989 = vmatprep.subr.bf16.mxu0 %v5451
    %5990 = vmatpush1.bf16.msra.mxu0 %v5450
    %5991 = vmatprep.subr.bf16.mxu0 %v5457
    %5992 = vmatpush1.bf16.msra.mxu0 %v5456
    %5993 = vmatprep.subr.bf16.mxu0 %v5463
    %5994 = vmatpush1.bf16.msra.mxu0 %v5462
    %5995 = vmatprep.subr.bf16.mxu0 %v5469
    %5996 = vmatpush1.bf16.msra.mxu0 %v5468
    %5997 = vmatprep.mubr.bf16.mxu0 %v3999
    %5998 = vmatmul.mubr.bf16.gmra.mrb[0].mxu0 %v3998
    %v5999 = vpop.f32.mrb[0].mxu0
    %v6000 = vadd.f32 %v5959, %v5999
    %v6001 = vpop.f32.mrb[0].mxu0
    %v6002 = vadd.f32 %v5961, %v6001
    %v6003 = vpop.f32.mrb[0].mxu0
    %v6004 = vpop.f32.mrb[0].mxu0
    %6005 = vdwg.mxu0
    %6006 = vmatprep.subr.bf16.mxu0 %v5189
    %6007 = vmatpush1.bf16.msra.mxu0 %v5188
    %6008 = vmatprep.subr.bf16.mxu0 %v5195
    %6009 = vmatpush1.bf16.msra.mxu0 %v5194
    %6010 = vmatprep.subr.bf16.mxu0 %v5201
    %6011 = vmatpush1.bf16.msra.mxu0 %v5200
    %6012 = vmatprep.subr.bf16.mxu0 %v5207
    %6013 = vmatpush1.bf16.msra.mxu0 %v5206
    %6014 = vmatprep.subr.bf16.mxu0 %v5213
    %6015 = vmatpush1.bf16.msra.mxu0 %v5212
    %6016 = vmatprep.subr.bf16.mxu0 %v5219
    %6017 = vmatpush1.bf16.msra.mxu0 %v5218
    %6018 = vmatprep.subr.bf16.mxu0 %v5225
    %6019 = vmatpush1.bf16.msra.mxu0 %v5224
    %6020 = vmatprep.subr.bf16.mxu0 %v5231
    %6021 = vmatpush1.bf16.msra.mxu0 %v5230
    %6022 = vmatprep.subr.bf16.mxu0 %v5237
    %6023 = vmatpush1.bf16.msra.mxu0 %v5236
    %6024 = vmatprep.subr.bf16.mxu0 %v5243
    %6025 = vmatpush1.bf16.msra.mxu0 %v5242
    %6026 = vmatprep.subr.bf16.mxu0 %v5249
    %6027 = vmatpush1.bf16.msra.mxu0 %v5248
    %6028 = vmatprep.subr.bf16.mxu0 %v5255
    %6029 = vmatpush1.bf16.msra.mxu0 %v5254
    %6030 = vmatprep.subr.bf16.mxu0 %v5261
    %6031 = vmatpush1.bf16.msra.mxu0 %v5260
    %6032 = vmatprep.subr.bf16.mxu0 %v5267
    %6033 = vmatpush1.bf16.msra.mxu0 %v5266
    %6034 = vmatprep.subr.bf16.mxu0 %v5273
    %6035 = vmatpush1.bf16.msra.mxu0 %v5272
    %6036 = vmatprep.subr.bf16.mxu0 %v5279
    %6037 = vmatpush1.bf16.msra.mxu0 %v5278
    %6038 = vmatprep.mubr.bf16.mxu0 %v3995
    %6039 = vmatmul.mubr.bf16.gmra.mrb[0].mxu0 %v3994
    %v6040 = vpop.f32.mrb[0].mxu0
    %v6041 = vadd.f32 %v4309, %v6040
    %v6042 = vpop.f32.mrb[0].mxu0
    %v6043 = vadd.f32 %v4313, %v6042
    %v6044 = vpop.f32.mrb[0].mxu0
    %v6045 = vpop.f32.mrb[0].mxu0
    %6046 = vdwg.mxu0
    %6047 = vmatprep.subr.bf16.mxu0 %v5285
    %6048 = vmatpush1.bf16.msra.mxu0 %v5284
    %6049 = vmatprep.subr.bf16.mxu0 %v5291
    %6050 = vmatpush1.bf16.msra.mxu0 %v5290
    %6051 = vmatprep.subr.bf16.mxu0 %v5297
    %6052 = vmatpush1.bf16.msra.mxu0 %v5296
    %6053 = vmatprep.subr.bf16.mxu0 %v5303
    %6054 = vmatpush1.bf16.msra.mxu0 %v5302
    %6055 = vmatprep.subr.bf16.mxu0 %v5309
    %6056 = vmatpush1.bf16.msra.mxu0 %v5308
    %6057 = vmatprep.subr.bf16.mxu0 %v5315
    %6058 = vmatpush1.bf16.msra.mxu0 %v5314
    %6059 = vmatprep.subr.bf16.mxu0 %v5321
    %6060 = vmatpush1.bf16.msra.mxu0 %v5320
    %6061 = vmatprep.subr.bf16.mxu0 %v5327
    %6062 = vmatpush1.bf16.msra.mxu0 %v5326
    %6063 = vmatprep.subr.bf16.mxu0 %v5333
    %6064 = vmatpush1.bf16.msra.mxu0 %v5332
    %6065 = vmatprep.subr.bf16.mxu0 %v5339
    %6066 = vmatpush1.bf16.msra.mxu0 %v5338
    %6067 = vmatprep.subr.bf16.mxu0 %v5345
    %6068 = vmatpush1.bf16.msra.mxu0 %v5344
    %6069 = vmatprep.subr.bf16.mxu0 %v5351
    %6070 = vmatpush1.bf16.msra.mxu0 %v5350
    %6071 = vmatprep.subr.bf16.mxu0 %v5357
    %6072 = vmatpush1.bf16.msra.mxu0 %v5356
    %6073 = vmatprep.subr.bf16.mxu0 %v5363
    %6074 = vmatpush1.bf16.msra.mxu0 %v5362
    %6075 = vmatprep.subr.bf16.mxu0 %v5369
    %6076 = vmatpush1.bf16.msra.mxu0 %v5368
    %6077 = vmatprep.subr.bf16.mxu0 %v5375
    %6078 = vmatpush1.bf16.msra.mxu0 %v5374
    %6079 = vmatprep.mubr.bf16.mxu0 %v3997
    %6080 = vmatmul.mubr.bf16.gmra.mrb[0].mxu0 %v3996
    %v6081 = vpop.f32.mrb[0].mxu0
    %v6082 = vadd.f32 %v6041, %v6081
    %v6083 = vpop.f32.mrb[0].mxu0
    %v6084 = vadd.f32 %v6043, %v6083
    %v6085 = vpop.f32.mrb[0].mxu0
    %v6086 = vpop.f32.mrb[0].mxu0
    %6087 = vdwg.mxu0
    %6088 = vmatprep.subr.bf16.mxu0 %v5381
    %6089 = vmatpush1.bf16.msra.mxu0 %v5380
    %6090 = vmatprep.subr.bf16.mxu0 %v5387
    %6091 = vmatpush1.bf16.msra.mxu0 %v5386
    %6092 = vmatprep.subr.bf16.mxu0 %v5393
    %6093 = vmatpush1.bf16.msra.mxu0 %v5392
    %6094 = vmatprep.subr.bf16.mxu0 %v5399
    %6095 = vmatpush1.bf16.msra.mxu0 %v5398
    %6096 = vmatprep.subr.bf16.mxu0 %v5405
    %6097 = vmatpush1.bf16.msra.mxu0 %v5404
    %6098 = vmatprep.subr.bf16.mxu0 %v5411
    %6099 = vmatpush1.bf16.msra.mxu0 %v5410
    %6100 = vmatprep.subr.bf16.mxu0 %v5417
    %6101 = vmatpush1.bf16.msra.mxu0 %v5416
    %6102 = vmatprep.subr.bf16.mxu0 %v5423
    %6103 = vmatpush1.bf16.msra.mxu0 %v5422
    %6104 = vmatprep.subr.bf16.mxu0 %v5429
    %6105 = vmatpush1.bf16.msra.mxu0 %v5428
    %6106 = vmatprep.subr.bf16.mxu0 %v5435
    %6107 = vmatpush1.bf16.msra.mxu0 %v5434
    %6108 = vmatprep.subr.bf16.mxu0 %v5441
    %6109 = vmatpush1.bf16.msra.mxu0 %v5440
    %6110 = vmatprep.subr.bf16.mxu0 %v5447
    %6111 = vmatpush1.bf16.msra.mxu0 %v5446
    %6112 = vmatprep.subr.bf16.mxu0 %v5453
    %6113 = vmatpush1.bf16.msra.mxu0 %v5452
    %6114 = vmatprep.subr.bf16.mxu0 %v5459
    %6115 = vmatpush1.bf16.msra.mxu0 %v5458
    %6116 = vmatprep.subr.bf16.mxu0 %v5465
    %6117 = vmatpush1.bf16.msra.mxu0 %v5464
    %6118 = vmatprep.subr.bf16.mxu0 %v5471
    %6119 = vmatpush1.bf16.msra.mxu0 %v5470
    %6120 = vmatprep.mubr.bf16.mxu0 %v3999
    %6121 = vmatmul.mubr.bf16.gmra.mrb[0].mxu0 %v3998
    %v6122 = vpop.f32.mrb[0].mxu0
    %v6123 = vadd.f32 %v6082, %v6122
    %v6124 = vpop.f32.mrb[0].mxu0
    %v6125 = vadd.f32 %v6084, %v6124
    %v6126 = vpop.f32.mrb[0].mxu0
    %v6127 = vpop.f32.mrb[0].mxu0
    %6128 = vdwg.mxu0
    %v6129 = vmax.f32 %v5877, 0.0
    %v6130 = vmax.f32 %v5879, 0.0
    %v6131 = vmax.f32 %v6000, 0.0
    %v6132 = vmax.f32 %v6002, 0.0
    %v6133 = vmax.f32 %v6123, 0.0
    %v6134 = vmax.f32 %v6125, 0.0
    %v6135 = vpack.c.bf16 %v6129, %v6129
    %v6136 = vpack.c.bf16 %v6130, %v6130
    %v6137 = vpack.c.bf16 %v6131, %v6131
    %v6138 = vpack.c.bf16 %v6132, %v6132
    %v6139 = vpack.c.bf16 %v6133, %v6133
    %v6140 = vpack.c.bf16 %v6134, %v6134
    %v6141 = vld [vmem:[#allocation23] sm:$0xf]
    %v6142 = vld [vmem:[#allocation23 + $0x4] sm:$0xf]
    %v6143 = vld [vmem:[#allocation23 + $0x8] sm:$0xf]
    %v6144 = vld [vmem:[#allocation23 + $0xc] sm:$0xf]
    %v6145 = vld [vmem:[#allocation23 + $0x10] sm:$0xf]
    %v6146 = vld [vmem:[#allocation23 + $0x14] sm:$0xf]
    %v6147 = vld [vmem:[#allocation23 + $0x18] sm:$0xf]
    %v6148 = vld [vmem:[#allocation23 + $0x1c] sm:$0xf]
    %v6149 = vld [vmem:[#allocation23 + $0x20] sm:$0xf]
    %v6150 = vld [vmem:[#allocation23 + $0x24] sm:$0xf]
    %v6151 = vld [vmem:[#allocation23 + $0x28] sm:$0xf]
    %v6152 = vld [vmem:[#allocation23 + $0x2c] sm:$0xf]
    %v6153 = vld [vmem:[#allocation23 + $0x30] sm:$0xf]
    %v6154 = vld [vmem:[#allocation23 + $0x34] sm:$0xf]
    %v6155 = vld [vmem:[#allocation23 + $0x38] sm:$0xf]
    %v6156 = vld [vmem:[#allocation23 + $0x3c] sm:$0xf]
    %v6157 = vld [vmem:[#allocation23 + $0x40] sm:$0xf]
    %v6158 = vld [vmem:[#allocation23 + $0x44] sm:$0xf]
    %v6159 = vld [vmem:[#allocation23 + $0x48] sm:$0xf]
    %v6160 = vld [vmem:[#allocation23 + $0x4c] sm:$0xf]
    %v6161 = vld [vmem:[#allocation23 + $0x50] sm:$0xf]
    %v6162 = vld [vmem:[#allocation23 + $0x54] sm:$0xf]
    %v6163 = vld [vmem:[#allocation23 + $0x58] sm:$0xf]
    %v6164 = vld [vmem:[#allocation23 + $0x5c] sm:$0xf]
    %v6165 = vld [vmem:[#allocation23 + $0x60] sm:$0xf]
    %v6166 = vld [vmem:[#allocation23 + $0x64] sm:$0xf]
    %v6167 = vld [vmem:[#allocation23 + $0x68] sm:$0xf]
    %v6168 = vld [vmem:[#allocation23 + $0x6c] sm:$0xf]
    %v6169 = vld [vmem:[#allocation23 + $0x70] sm:$0xf]
    %v6170 = vld [vmem:[#allocation23 + $0x74] sm:$0xf]
    %v6171 = vld [vmem:[#allocation23 + $0x78] sm:$0xf]
    %v6172 = vld [vmem:[#allocation23 + $0x7c] sm:$0xf]
    %v6173 = vld [vmem:[#allocation23 + $0x80] sm:$0xf]
    %v6174 = vld [vmem:[#allocation23 + $0x84] sm:$0xf]
    %v6175 = vld [vmem:[#allocation23 + $0x88] sm:$0xf]
    %v6176 = vld [vmem:[#allocation23 + $0x8c] sm:$0xf]
    %v6177 = vld [vmem:[#allocation23 + $0x90] sm:$0xf]
    %v6178 = vld [vmem:[#allocation23 + $0x94] sm:$0xf]
    %v6179 = vld [vmem:[#allocation23 + $0x98] sm:$0xf]
    %v6180 = vld [vmem:[#allocation23 + $0x9c] sm:$0xf]
    %v6181 = vld [vmem:[#allocation23 + $0xa0] sm:$0xf]
    %v6182 = vld [vmem:[#allocation23 + $0xa4] sm:$0xf]
    %v6183 = vld [vmem:[#allocation23 + $0xa8] sm:$0xf]
    %v6184 = vld [vmem:[#allocation23 + $0xac] sm:$0xf]
    %v6185 = vld [vmem:[#allocation23 + $0xb0] sm:$0xf]
    %v6186 = vld [vmem:[#allocation23 + $0xb4] sm:$0xf]
    %v6187 = vld [vmem:[#allocation23 + $0xb8] sm:$0xf]
    %v6188 = vld [vmem:[#allocation23 + $0xbc] sm:$0xf]
    %v6189 = vld [vmem:[#allocation23 + $0xc0] sm:$0xf]
    %v6190 = vld [vmem:[#allocation23 + $0xc4] sm:$0xf]
    %v6191 = vld [vmem:[#allocation23 + $0xc8] sm:$0xf]
    %v6192 = vld [vmem:[#allocation23 + $0xcc] sm:$0xf]
    %v6193 = vld [vmem:[#allocation23 + $0xd0] sm:$0xf]
    %v6194 = vld [vmem:[#allocation23 + $0xd4] sm:$0xf]
    %v6195 = vld [vmem:[#allocation23 + $0xd8] sm:$0xf]
    %v6196 = vld [vmem:[#allocation23 + $0xdc] sm:$0xf]
    %v6197 = vld [vmem:[#allocation23 + $0xe0] sm:$0xf]
    %v6198 = vld [vmem:[#allocation23 + $0xe4] sm:$0xf]
    %v6199 = vld [vmem:[#allocation23 + $0xe8] sm:$0xf]
    %v6200 = vld [vmem:[#allocation23 + $0xec] sm:$0xf]
    %v6201 = vld [vmem:[#allocation23 + $0xf0] sm:$0xf]
    %v6202 = vld [vmem:[#allocation23 + $0xf4] sm:$0xf]
    %v6203 = vld [vmem:[#allocation23 + $0xf8] sm:$0xf]
    %v6204 = vld [vmem:[#allocation23 + $0xfc] sm:$0xf]
    %v6205 = vld [vmem:[#allocation23 + $0x100] sm:$0xf]
    %v6206 = vld [vmem:[#allocation23 + $0x104] sm:$0xf]
    %v6207 = vld [vmem:[#allocation23 + $0x108] sm:$0xf]
    %v6208 = vld [vmem:[#allocation23 + $0x10c] sm:$0xf]
    %v6209 = vld [vmem:[#allocation23 + $0x110] sm:$0xf]
    %v6210 = vld [vmem:[#allocation23 + $0x114] sm:$0xf]
    %v6211 = vld [vmem:[#allocation23 + $0x118] sm:$0xf]
    %v6212 = vld [vmem:[#allocation23 + $0x11c] sm:$0xf]
    %v6213 = vld [vmem:[#allocation23 + $0x120] sm:$0xf]
    %v6214 = vld [vmem:[#allocation23 + $0x124] sm:$0xf]
    %v6215 = vld [vmem:[#allocation23 + $0x128] sm:$0xf]
    %v6216 = vld [vmem:[#allocation23 + $0x12c] sm:$0xf]
    %v6217 = vld [vmem:[#allocation23 + $0x130] sm:$0xf]
    %v6218 = vld [vmem:[#allocation23 + $0x134] sm:$0xf]
    %v6219 = vld [vmem:[#allocation23 + $0x138] sm:$0xf]
    %v6220 = vld [vmem:[#allocation23 + $0x13c] sm:$0xf]
    %v6221 = vld [vmem:[#allocation23 + $0x140] sm:$0xf]
    %v6222 = vld [vmem:[#allocation23 + $0x144] sm:$0xf]
    %v6223 = vld [vmem:[#allocation23 + $0x148] sm:$0xf]
    %v6224 = vld [vmem:[#allocation23 + $0x14c] sm:$0xf]
    %v6225 = vld [vmem:[#allocation23 + $0x150] sm:$0xf]
    %v6226 = vld [vmem:[#allocation23 + $0x154] sm:$0xf]
    %v6227 = vld [vmem:[#allocation23 + $0x158] sm:$0xf]
    %v6228 = vld [vmem:[#allocation23 + $0x15c] sm:$0xf]
    %v6229 = vld [vmem:[#allocation23 + $0x160] sm:$0xf]
    %v6230 = vld [vmem:[#allocation23 + $0x164] sm:$0xf]
    %v6231 = vld [vmem:[#allocation23 + $0x168] sm:$0xf]
    %v6232 = vld [vmem:[#allocation23 + $0x16c] sm:$0xf]
    %v6233 = vld [vmem:[#allocation23 + $0x170] sm:$0xf]
    %v6234 = vld [vmem:[#allocation23 + $0x174] sm:$0xf]
    %v6235 = vld [vmem:[#allocation23 + $0x178] sm:$0xf]
    %v6236 = vld [vmem:[#allocation23 + $0x17c] sm:$0xf]
    %v6237 = vld [vmem:[#allocation25] sm:$0x1]
    %v6239 = vlaneseq
    %v6240 = vshrl.u32 %v6239, 7
    %v6241 = vsub.s32 0, %v6240
    %v6242 = vrot.slane %v6237, %v6241
    %v6340 = vunpack.c.l.b16 %v6141
    %v6341 = vunpack.c.l.b16 %v6142
    %v6342 = vunpack.c.l.b16 %v6143
    %v6343 = vunpack.c.l.b16 %v6144
    %v6344 = vunpack.c.l.b16 %v6145
    %v6345 = vunpack.c.l.b16 %v6146
    %v6346 = vunpack.c.l.b16 %v6147
    %v6347 = vunpack.c.l.b16 %v6148
    %v6348 = vunpack.c.l.b16 %v6149
    %v6349 = vunpack.c.l.b16 %v6150
    %v6350 = vunpack.c.l.b16 %v6151
    %v6351 = vunpack.c.l.b16 %v6152
    %v6352 = vunpack.c.l.b16 %v6153
    %v6353 = vunpack.c.l.b16 %v6154
    %v6354 = vunpack.c.l.b16 %v6155
    %v6355 = vunpack.c.l.b16 %v6156
    %v6356 = vunpack.c.l.b16 %v6157
    %v6357 = vunpack.c.l.b16 %v6158
    %v6358 = vunpack.c.l.b16 %v6159
    %v6359 = vunpack.c.l.b16 %v6160
    %v6360 = vunpack.c.l.b16 %v6161
    %v6361 = vunpack.c.l.b16 %v6162
    %v6362 = vunpack.c.l.b16 %v6163
    %v6363 = vunpack.c.l.b16 %v6164
    %v6364 = vunpack.c.l.b16 %v6165
    %v6365 = vunpack.c.l.b16 %v6166
    %v6366 = vunpack.c.l.b16 %v6167
    %v6367 = vunpack.c.l.b16 %v6168
    %v6368 = vunpack.c.l.b16 %v6169
    %v6369 = vunpack.c.l.b16 %v6170
    %v6370 = vunpack.c.l.b16 %v6171
    %v6371 = vunpack.c.l.b16 %v6172
    %v6372 = vunpack.c.l.b16 %v6173
    %v6373 = vunpack.c.l.b16 %v6174
    %v6374 = vunpack.c.l.b16 %v6175
    %v6375 = vunpack.c.l.b16 %v6176
    %v6376 = vunpack.c.l.b16 %v6177
    %v6377 = vunpack.c.l.b16 %v6178
    %v6378 = vunpack.c.l.b16 %v6179
    %v6379 = vunpack.c.l.b16 %v6180
    %v6380 = vunpack.c.l.b16 %v6181
    %v6381 = vunpack.c.l.b16 %v6182
    %v6382 = vunpack.c.l.b16 %v6183
    %v6383 = vunpack.c.l.b16 %v6184
    %v6384 = vunpack.c.l.b16 %v6185
    %v6385 = vunpack.c.l.b16 %v6186
    %v6386 = vunpack.c.l.b16 %v6187
    %v6387 = vunpack.c.l.b16 %v6188
    %v6388 = vunpack.c.l.b16 %v6189
    %v6389 = vunpack.c.l.b16 %v6190
    %v6390 = vunpack.c.l.b16 %v6191
    %v6391 = vunpack.c.l.b16 %v6192
    %v6392 = vunpack.c.l.b16 %v6193
    %v6393 = vunpack.c.l.b16 %v6194
    %v6394 = vunpack.c.l.b16 %v6195
    %v6395 = vunpack.c.l.b16 %v6196
    %v6396 = vunpack.c.l.b16 %v6197
    %v6397 = vunpack.c.l.b16 %v6198
    %v6398 = vunpack.c.l.b16 %v6199
    %v6399 = vunpack.c.l.b16 %v6200
    %v6400 = vunpack.c.l.b16 %v6201
    %v6401 = vunpack.c.l.b16 %v6202
    %v6402 = vunpack.c.l.b16 %v6203
    %v6403 = vunpack.c.l.b16 %v6204
    %v6404 = vunpack.c.l.b16 %v6205
    %v6405 = vunpack.c.l.b16 %v6206
    %v6406 = vunpack.c.l.b16 %v6207
    %v6407 = vunpack.c.l.b16 %v6208
    %v6408 = vunpack.c.l.b16 %v6209
    %v6409 = vunpack.c.l.b16 %v6210
    %v6410 = vunpack.c.l.b16 %v6211
    %v6411 = vunpack.c.l.b16 %v6212
    %v6412 = vunpack.c.l.b16 %v6213
    %v6413 = vunpack.c.l.b16 %v6214
    %v6414 = vunpack.c.l.b16 %v6215
    %v6415 = vunpack.c.l.b16 %v6216
    %v6416 = vunpack.c.l.b16 %v6217
    %v6417 = vunpack.c.l.b16 %v6218
    %v6418 = vunpack.c.l.b16 %v6219
    %v6419 = vunpack.c.l.b16 %v6220
    %v6420 = vunpack.c.l.b16 %v6221
    %v6421 = vunpack.c.l.b16 %v6222
    %v6422 = vunpack.c.l.b16 %v6223
    %v6423 = vunpack.c.l.b16 %v6224
    %v6424 = vunpack.c.l.b16 %v6225
    %v6425 = vunpack.c.l.b16 %v6226
    %v6426 = vunpack.c.l.b16 %v6227
    %v6427 = vunpack.c.l.b16 %v6228
    %v6428 = vunpack.c.l.b16 %v6229
    %v6429 = vunpack.c.l.b16 %v6230
    %v6430 = vunpack.c.l.b16 %v6231
    %v6431 = vunpack.c.l.b16 %v6232
    %v6432 = vunpack.c.l.b16 %v6233
    %v6433 = vunpack.c.l.b16 %v6234
    %v6434 = vunpack.c.l.b16 %v6235
    %v6435 = vunpack.c.l.b16 %v6236
    %v6436 = vpack.c.b16 %v6341, %v6340
    %v6437 = vpack.c.b16 %v6343, %v6342
    %v6438 = vpack.c.b16 %v6345, %v6344
    %v6439 = vpack.c.b16 %v6347, %v6346
    %v6440 = vpack.c.b16 %v6349, %v6348
    %v6441 = vpack.c.b16 %v6351, %v6350
    %v6442 = vpack.c.b16 %v6353, %v6352
    %v6443 = vpack.c.b16 %v6355, %v6354
    %v6444 = vpack.c.b16 %v6357, %v6356
    %v6445 = vpack.c.b16 %v6359, %v6358
    %v6446 = vpack.c.b16 %v6361, %v6360
    %v6447 = vpack.c.b16 %v6363, %v6362
    %v6448 = vpack.c.b16 %v6365, %v6364
    %v6449 = vpack.c.b16 %v6367, %v6366
    %v6450 = vpack.c.b16 %v6369, %v6368
    %v6451 = vpack.c.b16 %v6371, %v6370
    %v6452 = vpack.c.b16 %v6373, %v6372
    %v6453 = vpack.c.b16 %v6375, %v6374
    %v6454 = vpack.c.b16 %v6377, %v6376
    %v6455 = vpack.c.b16 %v6379, %v6378
    %v6456 = vpack.c.b16 %v6381, %v6380
    %v6457 = vpack.c.b16 %v6383, %v6382
    %v6458 = vpack.c.b16 %v6385, %v6384
    %v6459 = vpack.c.b16 %v6387, %v6386
    %v6460 = vpack.c.b16 %v6389, %v6388
    %v6461 = vpack.c.b16 %v6391, %v6390
    %v6462 = vpack.c.b16 %v6393, %v6392
    %v6463 = vpack.c.b16 %v6395, %v6394
    %v6464 = vpack.c.b16 %v6397, %v6396
    %v6465 = vpack.c.b16 %v6399, %v6398
    %v6466 = vpack.c.b16 %v6401, %v6400
    %v6467 = vpack.c.b16 %v6403, %v6402
    %v6468 = vpack.c.b16 %v6405, %v6404
    %v6469 = vpack.c.b16 %v6407, %v6406
    %v6470 = vpack.c.b16 %v6409, %v6408
    %v6471 = vpack.c.b16 %v6411, %v6410
    %v6472 = vpack.c.b16 %v6413, %v6412
    %v6473 = vpack.c.b16 %v6415, %v6414
    %v6474 = vpack.c.b16 %v6417, %v6416
    %v6475 = vpack.c.b16 %v6419, %v6418
    %v6476 = vpack.c.b16 %v6421, %v6420
    %v6477 = vpack.c.b16 %v6423, %v6422
    %v6478 = vpack.c.b16 %v6425, %v6424
    %v6479 = vpack.c.b16 %v6427, %v6426
    %v6480 = vpack.c.b16 %v6429, %v6428
    %v6481 = vpack.c.b16 %v6431, %v6430
    %v6482 = vpack.c.b16 %v6433, %v6432
    %v6483 = vpack.c.b16 %v6435, %v6434
    %6532 = vmatprep.subr.bf16.mxu0 0
    %6533 = vmatpush1.bf16.msra.mxu0 %v6436
    %6534 = vmatprep.subr.bf16.mxu0 0
    %6535 = vmatpush1.bf16.msra.mxu0 %v6437
    %6536 = vmatprep.subr.bf16.mxu0 0
    %6537 = vmatpush1.bf16.msra.mxu0 %v6438
    %6538 = vmatprep.subr.bf16.mxu0 0
    %6539 = vmatpush1.bf16.msra.mxu0 %v6439
    %6540 = vmatprep.subr.bf16.mxu0 0
    %6541 = vmatpush1.bf16.msra.mxu0 %v6440
    %6542 = vmatprep.subr.bf16.mxu0 0
    %6543 = vmatpush1.bf16.msra.mxu0 %v6441
    %6544 = vmatprep.subr.bf16.mxu0 0
    %6545 = vmatpush1.bf16.msra.mxu0 %v6442
    %6546 = vmatprep.subr.bf16.mxu0 0
    %6547 = vmatpush1.bf16.msra.mxu0 %v6443
    %6548 = vmatprep.subr.bf16.mxu0 0
    %6549 = vmatpush1.bf16.msra.mxu0 %v6444
    %6550 = vmatprep.subr.bf16.mxu0 0
    %6551 = vmatpush1.bf16.msra.mxu0 %v6445
    %6552 = vmatprep.subr.bf16.mxu0 0
    %6553 = vmatpush1.bf16.msra.mxu0 %v6446
    %6554 = vmatprep.subr.bf16.mxu0 0
    %6555 = vmatpush1.bf16.msra.mxu0 %v6447
    %6556 = vmatprep.subr.bf16.mxu0 0
    %6557 = vmatpush1.bf16.msra.mxu0 %v6448
    %6558 = vmatprep.subr.bf16.mxu0 0
    %6559 = vmatpush1.bf16.msra.mxu0 %v6449
    %6560 = vmatprep.subr.bf16.mxu0 0
    %6561 = vmatpush1.bf16.msra.mxu0 %v6450
    %6562 = vmatprep.subr.bf16.mxu0 0
    %6563 = vmatpush1.bf16.msra.mxu0 %v6451
    %6564 = vmatprep.mubr.bf16.mxu0 %v6136
    %6565 = vmatmul.mubr.bf16.gmra.mrb[0].mxu0 %v6135
    %v6566 = vpop.f32.mrb[0].mxu0
    %v6567 = vadd.f32 %v6242, %v6566
    %v6568 = vpop.f32.mrb[0].mxu0
    %v6569 = vpop.f32.mrb[0].mxu0
    %v6570 = vpop.f32.mrb[0].mxu0
    %6571 = vdwg.mxu0
    %6572 = vmatprep.subr.bf16.mxu0 0
    %6573 = vmatpush1.bf16.msra.mxu0 %v6452
    %6574 = vmatprep.subr.bf16.mxu0 0
    %6575 = vmatpush1.bf16.msra.mxu0 %v6453
    %6576 = vmatprep.subr.bf16.mxu0 0
    %6577 = vmatpush1.bf16.msra.mxu0 %v6454
    %6578 = vmatprep.subr.bf16.mxu0 0
    %6579 = vmatpush1.bf16.msra.mxu0 %v6455
    %6580 = vmatprep.subr.bf16.mxu0 0
    %6581 = vmatpush1.bf16.msra.mxu0 %v6456
    %6582 = vmatprep.subr.bf16.mxu0 0
    %6583 = vmatpush1.bf16.msra.mxu0 %v6457
    %6584 = vmatprep.subr.bf16.mxu0 0
    %6585 = vmatpush1.bf16.msra.mxu0 %v6458
    %6586 = vmatprep.subr.bf16.mxu0 0
    %6587 = vmatpush1.bf16.msra.mxu0 %v6459
    %6588 = vmatprep.subr.bf16.mxu0 0
    %6589 = vmatpush1.bf16.msra.mxu0 %v6460
    %6590 = vmatprep.subr.bf16.mxu0 0
    %6591 = vmatpush1.bf16.msra.mxu0 %v6461
    %6592 = vmatprep.subr.bf16.mxu0 0
    %6593 = vmatpush1.bf16.msra.mxu0 %v6462
    %6594 = vmatprep.subr.bf16.mxu0 0
    %6595 = vmatpush1.bf16.msra.mxu0 %v6463
    %6596 = vmatprep.subr.bf16.mxu0 0
    %6597 = vmatpush1.bf16.msra.mxu0 %v6464
    %6598 = vmatprep.subr.bf16.mxu0 0
    %6599 = vmatpush1.bf16.msra.mxu0 %v6465
    %6600 = vmatprep.subr.bf16.mxu0 0
    %6601 = vmatpush1.bf16.msra.mxu0 %v6466
    %6602 = vmatprep.subr.bf16.mxu0 0
    %6603 = vmatpush1.bf16.msra.mxu0 %v6467
    %6604 = vmatprep.mubr.bf16.mxu0 %v6138
    %6605 = vmatmul.mubr.bf16.gmra.mrb[0].mxu0 %v6137
    %v6606 = vpop.f32.mrb[0].mxu0
    %v6607 = vadd.f32 %v6567, %v6606
    %v6608 = vpop.f32.mrb[0].mxu0
    %v6609 = vpop.f32.mrb[0].mxu0
    %v6610 = vpop.f32.mrb[0].mxu0
    %6611 = vdwg.mxu0
    %6612 = vmatprep.subr.bf16.mxu0 0
    %6613 = vmatpush1.bf16.msra.mxu0 %v6468
    %6614 = vmatprep.subr.bf16.mxu0 0
    %6615 = vmatpush1.bf16.msra.mxu0 %v6469
    %6616 = vmatprep.subr.bf16.mxu0 0
    %6617 = vmatpush1.bf16.msra.mxu0 %v6470
    %6618 = vmatprep.subr.bf16.mxu0 0
    %6619 = vmatpush1.bf16.msra.mxu0 %v6471
    %6620 = vmatprep.subr.bf16.mxu0 0
    %6621 = vmatpush1.bf16.msra.mxu0 %v6472
    %6622 = vmatprep.subr.bf16.mxu0 0
    %6623 = vmatpush1.bf16.msra.mxu0 %v6473
    %6624 = vmatprep.subr.bf16.mxu0 0
    %6625 = vmatpush1.bf16.msra.mxu0 %v6474
    %6626 = vmatprep.subr.bf16.mxu0 0
    %6627 = vmatpush1.bf16.msra.mxu0 %v6475
    %6628 = vmatprep.subr.bf16.mxu0 0
    %6629 = vmatpush1.bf16.msra.mxu0 %v6476
    %6630 = vmatprep.subr.bf16.mxu0 0
    %6631 = vmatpush1.bf16.msra.mxu0 %v6477
    %6632 = vmatprep.subr.bf16.mxu0 0
    %6633 = vmatpush1.bf16.msra.mxu0 %v6478
    %6634 = vmatprep.subr.bf16.mxu0 0
    %6635 = vmatpush1.bf16.msra.mxu0 %v6479
    %6636 = vmatprep.subr.bf16.mxu0 0
    %6637 = vmatpush1.bf16.msra.mxu0 %v6480
    %6638 = vmatprep.subr.bf16.mxu0 0
    %6639 = vmatpush1.bf16.msra.mxu0 %v6481
    %6640 = vmatprep.subr.bf16.mxu0 0
    %6641 = vmatpush1.bf16.msra.mxu0 %v6482
    %6642 = vmatprep.subr.bf16.mxu0 0
    %6643 = vmatpush1.bf16.msra.mxu0 %v6483
    %6644 = vmatprep.mubr.bf16.mxu0 %v6140
    %6645 = vmatmul.mubr.bf16.gmra.mrb[0].mxu0 %v6139
    %v6646 = vpop.f32.mrb[0].mxu0
    %v6647 = vadd.f32 %v6607, %v6646
    %v6648 = vpop.f32.mrb[0].mxu0
    %v6649 = vpop.f32.mrb[0].mxu0
    %v6650 = vpop.f32.mrb[0].mxu0
    %6651 = vdwg.mxu0
    %v6652 = vtanh.pop %v6647
    %6654 = vrot.lane.b32.xlu0 %v6652, 16
    %v6655 = vpop.permute.xlu0 %6654
    %6658 = vrot.lane.b32.xlu0 %v3331, 24
    %v6659 = vpop.permute.xlu0 %6658
    %6662 = vrot.lane.b32.xlu0 %v3338, 40
    %v6663 = vpop.permute.xlu0 %6662
    %vm6665 = vcmask 130048
    %v6666 = vsel %vm6665, %v3342, %v6655
    %vm6667 = vcmask 195584
    %v6668 = vsel %vm6667, %v6666, %v6659
    %vm6669 = vcmask 326656
    %v6670 = vsel %vm6669, %v6668, %v6663
    %vm6671 = vcmask 457728
    %v6672 = vsel %vm6671, %v6670, 0.0
    %6673 = vst [vmem:[#allocation26] sm:$0xff] %v6672
    // Predicated region
    $region122: #{tpu_custom_call.1} parent=1 // pred_check
      _
    $region123: #{tpu_custom_call.1} parent=1 // pred_check_branch
      %6675 = sbr.rel (0) target = $region125
    $region124: #{tpu_custom_call.1} parent=1 // pred_region
      %s6677 = ssub.s32 128, 128
      %6678 = vsyncadd [#allocation4], %s6677
      %s6680 = sshll.u32 [#allocation26], 4
      %s6681 = int_to_ptr.vmem [resolvable:$true] %s6680
      %6683 = dma.vmem_to_hbm [thread:$0]  %s6681, 128, %s15, [#allocation4]
    $region125: #{tpu_custom_call.1} parent=1 // pred_fallthru
      _
    // Predicated region
    $region126: #{tpu_custom_call.1} parent=1 // pred_check
      _
    $region127: #{tpu_custom_call.1} parent=1 // pred_check_branch
      %6685 = sbr.rel (0) target = $region129
    $region128: #{tpu_custom_call.1} parent=1 // pred_region
      %6686 = dma.done [#allocation4], 128
    $region129: #{tpu_custom_call.1} parent=1 // pred_fallthru
      _
    %6687 = vsyncpa [#allocation3], 1
    %6688 = vsyncpa [#allocation6], 1
    %6689 = vsyncpa [#allocation9], 1
    %6690 = vsyncpa [#allocation12], 1
    %6691 = vsyncpa [#allocation15], 1
    %6692 = vsyncpa [#allocation18], 1
    %6693 = vsyncpa [#allocation21], 1
    %6694 = vsyncpa [#allocation24], 1
    %6695 = vsyncpa [#allocation4], 1

</llo_original>
